<compile_context>
chip_gen: v7x
topology: tpu7x:2x2x1
jax: 0.10.0
libtpu: 0.0.40
codegen_flags: <defaults>
</compile_context>

<pallas_src>
import functools

import jax
import jax.numpy as jnp
from jax.experimental import pallas as pl
from jax.experimental.pallas import tpu as pltpu

N_NODES = 8                      # utterance nodes per graph
GRAPHS_PER_SLAB = 16             # graphs stacked per 128-row MXU slab
SLAB = N_NODES * GRAPHS_PER_SLAB         # 128 rows -> fills MXU M dim
SLABS_PER_STEP = 8               # slabs per grid step (1024 rows / step)
ROWS_PER_STEP = SLAB * SLABS_PER_STEP
HID_PAD = 128                    # hidden 64 zero-padded to full lane width


# ----------------------------- Pallas kernel --------------------------------
def gcn2_kernel(a_ref, x_ref, w1_ref, w2_ref, b_ref, o_ref,
                *, slab, slabs_per_step, compute_dtype):
    a = a_ref[...]                     # [SLAB, SLAB] resident block-diag A_hat
    w1 = w1_ref[...]                   # [f_in, HID_PAD]
    w2 = w2_ref[...]                   # [HID_PAD, HID_PAD] (cols 1.. are zero)
    b = b_ref[...]                     # [2, HID_PAD] f32 (b1 row, b2 row)
    b1 = b[0:1, :]
    b2 = b[1:2, :]

    # Static unroll over the slabs of this grid step; per-slab live set is tiny.
    for s in range(slabs_per_step):
        x = x_ref[pl.ds(s * slab, slab), :]                      # [128, f_in]

        # Layer 1: GCNConv(input -> hidden): A_hat @ (X @ W1) + b1, then ReLU.
        xw1 = jnp.dot(x, w1, preferred_element_type=jnp.float32)
        h1 = jnp.dot(a, xw1.astype(compute_dtype),
                     preferred_element_type=jnp.float32) + b1
        h1 = jnp.maximum(h1, 0.0).astype(compute_dtype)

        # F.dropout(x, training=False) -> identity at inference.
        # TODO(synk): training-mode dropout (pltpu.prng_random_bits + mask).

        # Layer 2: GCNConv(hidden -> output): A_hat @ (H @ W2) + b2.
        hw2 = jnp.dot(h1, w2, preferred_element_type=jnp.float32)
        out = jnp.dot(a, hw2.astype(compute_dtype),
                      preferred_element_type=jnp.float32) + b2      # [128, 128]

        # Real logits live in column 0; columns 1.. are exactly zero because
        # W2/b2 padding is zero (padding invariant asserted on host).  Store
        # one lane-dense [1, 128] row per slab -> minimal, unmasked writeback.
        o_ref[pl.ds(s, 1), :] = out.T[0:1, :]


def multimodal_gnn_forward(a_block, x_stacked, w1, w2, bvec,
                           *, rows_per_step=ROWS_PER_STEP,
                           compute_dtype=jnp.bfloat16):
    """a_block: [SLAB, SLAB] block-diagonal A_hat (shared by all graphs);
       x_stacked: [total_rows, f_in]; w1: [f_in, HID_PAD];
       w2: [HID_PAD, HID_PAD]; bvec: [2, HID_PAD] f32 (b1, b2).
       Returns [total_rows // SLAB, SLAB] f32: row r = outputs of slab r."""
    total_rows, f_in = x_stacked.shape
    slab = a_block.shape[0]
    hid = w1.shape[1]
    assert rows_per_step % slab == 0 and total_rows % rows_per_step == 0
    slabs_per_step = rows_per_step // slab
    num_steps = total_rows // rows_per_step
    total_slabs = total_rows // slab

    kernel = functools.partial(gcn2_kernel, slab=slab,
                               slabs_per_step=slabs_per_step,
                               compute_dtype=compute_dtype)

    # Advisory cost estimate so XLA schedules host-side packing around this.
    flops = 2 * slab * hid * (f_in + 2 * slab + hid) * total_slabs
    bytes_accessed = (x_stacked.size * x_stacked.dtype.itemsize
                      + total_slabs * slab * 4          # f32 output rows
                      + a_block.size * a_block.dtype.itemsize
                      + w1.size * w1.dtype.itemsize
                      + w2.size * w2.dtype.itemsize
                      + bvec.size * bvec.dtype.itemsize)

    return pl.pallas_call(
        kernel,
        out_shape=jax.ShapeDtypeStruct((total_slabs, slab), jnp.float32),
        grid=(num_steps,),
        in_specs=[
            pl.BlockSpec((slab, slab), lambda t: (0, 0)),            # A_hat (resident)
            pl.BlockSpec((rows_per_step, f_in), lambda t: (t, 0)),   # node feats
            pl.BlockSpec((f_in, hid), lambda t: (0, 0)),             # W1 (resident)
            pl.BlockSpec((hid, hid), lambda t: (0, 0)),              # W2 (resident)
            pl.BlockSpec((2, hid), lambda t: (0, 0)),                # b1/b2 (resident)
        ],
        out_specs=pl.BlockSpec((slabs_per_step, slab), lambda t: (t, 0)),
        compiler_params=pltpu.CompilerParams(
            dimension_semantics=("parallel",)),
        cost_estimate=pl.CostEstimate(flops=flops, transcendentals=0,
                                      bytes_accessed=bytes_accessed),
    )(a_block, x_stacked, w1, w2, bvec)


# ------------------------------ JAX glue -------------------------------------
def build_normalized_adjacency(edge_index, num_nodes):
    """A_hat = D^{-1/2} (A + I) D^{-1/2}, matching PyG GCNConv defaults."""
    src, dst = edge_index[0], edge_index[1]
    a = jnp.zeros((num_nodes, num_nodes), jnp.float32)
    a = a.at[dst, src].add(1.0)                     # message src -> dst
    a = a + jnp.eye(num_nodes, dtype=jnp.float32)   # add self loops
    deg = a.sum(axis=1)
    dinv = jnp.where(deg > 0, 1.0 / jnp.sqrt(deg), 0.0)
    return dinv[:, None] * a * dinv[None, :]


def block_diagonalize(blocks):
    """[G, N, N] per-graph matrices -> [G*N, G*N] block-diagonal matrix."""
    g, n, _ = blocks.shape
    eye = jnp.eye(g, dtype=blocks.dtype)
    return jnp.einsum("gij,gh->gihj", blocks, eye).reshape(g * n, g * n)


if __name__ == "__main__":
    key = jax.random.PRNGKey(0)
    k_text, k_audio, k_vis, k_w1, k_b1, k_w2, k_b2 = jax.random.split(key, 7)

    num_graphs = 1024                   # batched to amortize launch/step cost
    num_nodes = N_NODES                 # 8 utterance nodes per graph
    d_text, d_audio, d_vis = 16, 8, 8
    hidden_dim = 64
    output_dim = 1

    # Per-graph multimodal features: text per node, pooled audio/visual per
    # graph expanded to all nodes, then concatenated (PyTorch preamble).
    text = jax.random.normal(k_text, (num_graphs, num_nodes, d_text), jnp.float32)
    audio = jax.random.normal(k_audio, (num_graphs, 1, d_audio), jnp.float32)
    visual = jax.random.normal(k_vis, (num_graphs, 1, d_vis), jnp.float32)
    pooled_audio = jnp.broadcast_to(audio, (num_graphs, num_nodes, d_audio))
    pooled_visual = jnp.broadcast_to(visual, (num_graphs, num_nodes, d_vis))
    x = jnp.concatenate([text, pooled_audio, pooled_visual], axis=-1)  # [B, 8, 32]
    input_dim = x.shape[-1]  # 32

    # Deterministic edge list; keep only edges whose max endpoint < num_nodes.
    edge_index = jnp.array(
        [[0, 1, 2, 3, 4, 5, 6, 7, 0, 3, 9],
         [1, 2, 3, 4, 5, 6, 7, 0, 4, 7, 2]], dtype=jnp.int32)
    keep = jnp.max(edge_index, axis=0) < num_nodes
    edge_index = edge_index[:, keep]
    a_hat = build_normalized_adjacency(edge_index, num_nodes)          # [8, 8]

    # GCNConv parameters (weight [in, out], bias [out]); Glorot-ish init.
    w1 = jax.random.normal(k_w1, (input_dim, hidden_dim), jnp.float32) / jnp.sqrt(input_dim)
    b1 = jax.random.normal(k_b1, (hidden_dim,), jnp.float32) * 0.01
    w2 = jax.random.normal(k_w2, (hidden_dim, output_dim), jnp.float32) / jnp.sqrt(hidden_dim)
    b2 = jax.random.normal(k_b2, (output_dim,), jnp.float32) * 0.01

    # bf16 matmul inputs + f32 accumulation on all generations (v5e MXU is
    # natively bf16 too); biases and accumulators stay f32.
    compute_dtype = jnp.bfloat16

    # ---- host-side packing ----
    # One resident block-diagonal A_hat (all graphs share the adjacency).
    # TODO(synk): per-graph adjacency would DMA A as [G, 8, 8] and expand in-kernel.
    a_blocks = jnp.broadcast_to(a_hat, (GRAPHS_PER_SLAB, num_nodes, num_nodes))
    a_block = block_diagonalize(a_blocks)                              # [128, 128]

    total_rows = num_graphs * num_nodes
    assert total_rows % ROWS_PER_STEP == 0
    x_stacked = x.reshape(total_rows, input_dim)                       # [8192, 32]

    # Zero-pad hidden (64->128) and output (1->128) so vregs / MXU tiles are
    # full 128 lanes wide.  The padding MUST stay zero: the lane-dense output
    # row (column-0 extraction) and host slicing rely on it.
    w1_pad = jnp.zeros((input_dim, HID_PAD), jnp.float32).at[:, :hidden_dim].set(w1)
    b1_pad = jnp.zeros((HID_PAD,), jnp.float32).at[:hidden_dim].set(b1)
    w2_pad = jnp.zeros((HID_PAD, HID_PAD), jnp.float32).at[:hidden_dim, :output_dim].set(w2)
    b2_pad = jnp.zeros((HID_PAD,), jnp.float32).at[:output_dim].set(b2)
    bvec = jnp.stack([b1_pad, b2_pad], axis=0)                         # [2, 128] f32
    assert not bool(jnp.any(w2_pad[:, output_dim:]))                   # padding invariant
    assert not bool(jnp.any(b2_pad[output_dim:]))

    out_rows = multimodal_gnn_forward(
        a_block.astype(compute_dtype),
        x_stacked.astype(compute_dtype),
        w1_pad.astype(compute_dtype),
        w2_pad.astype(compute_dtype),
        bvec,
        compute_dtype=compute_dtype,
    )
    out_rows = jax.block_until_ready(out_rows)                         # [64, 128]
    out = out_rows.reshape(num_graphs, num_nodes, output_dim)

    # ---- pure-JAX reference with the same quantization points ----
    q = lambda v: v.astype(compute_dtype).astype(jnp.float32)
    a_f = q(a_hat)
    x_f = q(x)
    xw1 = q(jnp.einsum("bnf,fh->bnh", x_f, q(w1)))
    h1 = q(jnp.maximum(jnp.einsum("ij,bjh->bih", a_f, xw1) + b1, 0.0))
    hw2 = q(jnp.einsum("bnh,ho->bno", h1, q(w2)))
    ref = jnp.einsum("ij,bjo->bio", a_f, hw2) + b2                     # [B, 8, 1]

    assert out.shape == (num_graphs, num_nodes, output_dim)
    tol = 5e-2
    max_err = jnp.max(jnp.abs(out - ref))
    assert jnp.allclose(out, ref, atol=tol, rtol=tol), (
        f"mismatch vs reference, max abs err = {max_err}")

    print("KERNEL_OK")
</pallas_src>

<mosaic_0001>
module attributes {stable_mosaic.version = 11 : i64} {
  func.func @gcn2_kernel(%arg0: i32, %arg1: memref<128x128xbf16, #tpu.memory_space<vmem>>, %arg2: memref<1024x32xbf16, #tpu.memory_space<vmem>>, %arg3: memref<32x128xbf16, #tpu.memory_space<vmem>>, %arg4: memref<128x128xbf16, #tpu.memory_space<vmem>>, %arg5: memref<2x128xf32, #tpu.memory_space<vmem>>, %arg6: memref<8x128xf32, #tpu.memory_space<vmem>>) attributes {dimension_semantics = [#tpu.dimension_semantics<parallel>], iteration_bounds = array<i64: 8>, scalar_prefetch = 0 : i64, scratch_operands = 0 : i64, tpu.core_type = #tpu.core_type<tc>, window_params = [{pipeline_mode = #tpu.pipeline_mode<synchronous>, transform_indices = @transform_0, window_bounds = array<i64: 128, 128>}, {transform_indices = @transform_1, window_bounds = array<i64: 1024, 32>}, {pipeline_mode = #tpu.pipeline_mode<synchronous>, transform_indices = @transform_2, window_bounds = array<i64: 32, 128>}, {pipeline_mode = #tpu.pipeline_mode<synchronous>, transform_indices = @transform_3, window_bounds = array<i64: 128, 128>}, {pipeline_mode = #tpu.pipeline_mode<synchronous>, transform_indices = @transform_4, window_bounds = array<i64: 2, 128>}, {transform_indices = @transform_5, window_bounds = array<i64: 8, 128>}]} {
    %c0 = arith.constant 0 : index
    %c0_0 = arith.constant 0 : index
    %0 = vector.load %arg1[%c0, %c0_0] : memref<128x128xbf16, #tpu.memory_space<vmem>>, vector<128x128xbf16>
    %c0_1 = arith.constant 0 : index
    %c0_2 = arith.constant 0 : index
    %1 = vector.load %arg3[%c0_1, %c0_2] : memref<32x128xbf16, #tpu.memory_space<vmem>>, vector<32x128xbf16>
    %c0_3 = arith.constant 0 : index
    %c0_4 = arith.constant 0 : index
    %2 = vector.load %arg4[%c0_3, %c0_4] : memref<128x128xbf16, #tpu.memory_space<vmem>>, vector<128x128xbf16>
    %c0_5 = arith.constant 0 : index
    %c0_6 = arith.constant 0 : index
    %3 = vector.load %arg5[%c0_5, %c0_6] : memref<2x128xf32, #tpu.memory_space<vmem>>, vector<2x128xf32>
    %4 = vector.extract_strided_slice %3 {offsets = [0, 0], sizes = [1, 128], strides = [1, 1]} : vector<2x128xf32> to vector<1x128xf32>
    %5 = vector.extract_strided_slice %3 {offsets = [1, 0], sizes = [1, 128], strides = [1, 1]} : vector<2x128xf32> to vector<1x128xf32>
    %c0_7 = arith.constant 0 : index
    %c0_8 = arith.constant 0 : index
    %6 = vector.load %arg2[%c0_7, %c0_8] : memref<1024x32xbf16, #tpu.memory_space<vmem>>, vector<128x32xbf16>
    %cst = arith.constant dense<0.000000e+00> : vector<128x128xf32>
    %7 = tpu.matmul %6, %1, %cst {dimension_numbers = #tpu.dot_dimension_numbers<[1], [0], [0], [1], [0, 0, 1, 1], [], []>} : vector<128x32xbf16>, vector<32x128xbf16>, vector<128x128xf32> -> vector<128x128xf32>
    %8 = arith.truncf %7 : vector<128x128xf32> to vector<128x128xbf16>
    %cst_9 = arith.constant dense<0.000000e+00> : vector<128x128xf32>
    %9 = tpu.matmul %0, %8, %cst_9 {dimension_numbers = #tpu.dot_dimension_numbers<[1], [0], [0], [1], [0, 0, 1, 1], [], []>} : vector<128x128xbf16>, vector<128x128xbf16>, vector<128x128xf32> -> vector<128x128xf32>
    %10 = vector.broadcast %4 : vector<1x128xf32> to vector<128x128xf32>
    %11 = arith.addf %9, %10 : vector<128x128xf32>
    %cst_10 = arith.constant 0.000000e+00 : f32
    %12 = vector.broadcast %cst_10 : f32 to vector<128x128xf32>
    %13 = arith.maximumf %11, %12 : vector<128x128xf32>
    %14 = arith.truncf %13 : vector<128x128xf32> to vector<128x128xbf16>
    %cst_11 = arith.constant dense<0.000000e+00> : vector<128x128xf32>
    %15 = tpu.matmul %14, %2, %cst_11 {dimension_numbers = #tpu.dot_dimension_numbers<[1], [0], [0], [1], [0, 0, 1, 1], [], []>} : vector<128x128xbf16>, vector<128x128xbf16>, vector<128x128xf32> -> vector<128x128xf32>
    %16 = arith.truncf %15 : vector<128x128xf32> to vector<128x128xbf16>
    %cst_12 = arith.constant dense<0.000000e+00> : vector<128x128xf32>
    %17 = tpu.matmul %0, %16, %cst_12 {dimension_numbers = #tpu.dot_dimension_numbers<[1], [0], [0], [1], [0, 0, 1, 1], [], []>} : vector<128x128xbf16>, vector<128x128xbf16>, vector<128x128xf32> -> vector<128x128xf32>
    %18 = vector.broadcast %5 : vector<1x128xf32> to vector<128x128xf32>
    %19 = arith.addf %17, %18 : vector<128x128xf32>
    %20 = tpu.transpose %19, [1, 0] : vector<128x128xf32> -> vector<128x128xf32>
    %21 = vector.extract_strided_slice %20 {offsets = [0, 0], sizes = [1, 128], strides = [1, 1]} : vector<128x128xf32> to vector<1x128xf32>
    %c0_13 = arith.constant 0 : index
    %c0_14 = arith.constant 0 : index
    %22 = vector.load %arg6[%c0_13, %c0_14] : memref<8x128xf32, #tpu.memory_space<vmem>>, vector<1x128xf32>
    tpu.vector_store %arg6[%c0_13, %c0_14], %21 {strides = array<i32>} : memref<8x128xf32, #tpu.memory_space<vmem>>, vector<1x128xf32>,
    %c128 = arith.constant 128 : index
    %c0_15 = arith.constant 0 : index
    %23 = vector.load %arg2[%c128, %c0_15] : memref<1024x32xbf16, #tpu.memory_space<vmem>>, vector<128x32xbf16>
    %cst_16 = arith.constant dense<0.000000e+00> : vector<128x128xf32>
    %24 = tpu.matmul %23, %1, %cst_16 {dimension_numbers = #tpu.dot_dimension_numbers<[1], [0], [0], [1], [0, 0, 1, 1], [], []>} : vector<128x32xbf16>, vector<32x128xbf16>, vector<128x128xf32> -> vector<128x128xf32>
    %25 = arith.truncf %24 : vector<128x128xf32> to vector<128x128xbf16>
    %cst_17 = arith.constant dense<0.000000e+00> : vector<128x128xf32>
    %26 = tpu.matmul %0, %25, %cst_17 {dimension_numbers = #tpu.dot_dimension_numbers<[1], [0], [0], [1], [0, 0, 1, 1], [], []>} : vector<128x128xbf16>, vector<128x128xbf16>, vector<128x128xf32> -> vector<128x128xf32>
    %27 = vector.broadcast %4 : vector<1x128xf32> to vector<128x128xf32>
    %28 = arith.addf %26, %27 : vector<128x128xf32>
    %cst_18 = arith.constant 0.000000e+00 : f32
    %29 = vector.broadcast %cst_18 : f32 to vector<128x128xf32>
    %30 = arith.maximumf %28, %29 : vector<128x128xf32>
    %31 = arith.truncf %30 : vector<128x128xf32> to vector<128x128xbf16>
    %cst_19 = arith.constant dense<0.000000e+00> : vector<128x128xf32>
    %32 = tpu.matmul %31, %2, %cst_19 {dimension_numbers = #tpu.dot_dimension_numbers<[1], [0], [0], [1], [0, 0, 1, 1], [], []>} : vector<128x128xbf16>, vector<128x128xbf16>, vector<128x128xf32> -> vector<128x128xf32>
    %33 = arith.truncf %32 : vector<128x128xf32> to vector<128x128xbf16>
    %cst_20 = arith.constant dense<0.000000e+00> : vector<128x128xf32>
    %34 = tpu.matmul %0, %33, %cst_20 {dimension_numbers = #tpu.dot_dimension_numbers<[1], [0], [0], [1], [0, 0, 1, 1], [], []>} : vector<128x128xbf16>, vector<128x128xbf16>, vector<128x128xf32> -> vector<128x128xf32>
    %35 = vector.broadcast %5 : vector<1x128xf32> to vector<128x128xf32>
    %36 = arith.addf %34, %35 : vector<128x128xf32>
    %37 = tpu.transpose %36, [1, 0] : vector<128x128xf32> -> vector<128x128xf32>
    %38 = vector.extract_strided_slice %37 {offsets = [0, 0], sizes = [1, 128], strides = [1, 1]} : vector<128x128xf32> to vector<1x128xf32>
    %c1 = arith.constant 1 : index
    %c0_21 = arith.constant 0 : index
    %39 = vector.load %arg6[%c1, %c0_21] : memref<8x128xf32, #tpu.memory_space<vmem>>, vector<1x128xf32>
    tpu.vector_store %arg6[%c1, %c0_21], %38 {strides = array<i32>} : memref<8x128xf32, #tpu.memory_space<vmem>>, vector<1x128xf32>,
    %c256 = arith.constant 256 : index
    %c0_22 = arith.constant 0 : index
    %40 = vector.load %arg2[%c256, %c0_22] : memref<1024x32xbf16, #tpu.memory_space<vmem>>, vector<128x32xbf16>
    %cst_23 = arith.constant dense<0.000000e+00> : vector<128x128xf32>
    %41 = tpu.matmul %40, %1, %cst_23 {dimension_numbers = #tpu.dot_dimension_numbers<[1], [0], [0], [1], [0, 0, 1, 1], [], []>} : vector<128x32xbf16>, vector<32x128xbf16>, vector<128x128xf32> -> vector<128x128xf32>
    %42 = arith.truncf %41 : vector<128x128xf32> to vector<128x128xbf16>
    %cst_24 = arith.constant dense<0.000000e+00> : vector<128x128xf32>
    %43 = tpu.matmul %0, %42, %cst_24 {dimension_numbers = #tpu.dot_dimension_numbers<[1], [0], [0], [1], [0, 0, 1, 1], [], []>} : vector<128x128xbf16>, vector<128x128xbf16>, vector<128x128xf32> -> vector<128x128xf32>
    %44 = vector.broadcast %4 : vector<1x128xf32> to vector<128x128xf32>
    %45 = arith.addf %43, %44 : vector<128x128xf32>
    %cst_25 = arith.constant 0.000000e+00 : f32
    %46 = vector.broadcast %cst_25 : f32 to vector<128x128xf32>
    %47 = arith.maximumf %45, %46 : vector<128x128xf32>
    %48 = arith.truncf %47 : vector<128x128xf32> to vector<128x128xbf16>
    %cst_26 = arith.constant dense<0.000000e+00> : vector<128x128xf32>
    %49 = tpu.matmul %48, %2, %cst_26 {dimension_numbers = #tpu.dot_dimension_numbers<[1], [0], [0], [1], [0, 0, 1, 1], [], []>} : vector<128x128xbf16>, vector<128x128xbf16>, vector<128x128xf32> -> vector<128x128xf32>
    %50 = arith.truncf %49 : vector<128x128xf32> to vector<128x128xbf16>
    %cst_27 = arith.constant dense<0.000000e+00> : vector<128x128xf32>
    %51 = tpu.matmul %0, %50, %cst_27 {dimension_numbers = #tpu.dot_dimension_numbers<[1], [0], [0], [1], [0, 0, 1, 1], [], []>} : vector<128x128xbf16>, vector<128x128xbf16>, vector<128x128xf32> -> vector<128x128xf32>
    %52 = vector.broadcast %5 : vector<1x128xf32> to vector<128x128xf32>
    %53 = arith.addf %51, %52 : vector<128x128xf32>
    %54 = tpu.transpose %53, [1, 0] : vector<128x128xf32> -> vector<128x128xf32>
    %55 = vector.extract_strided_slice %54 {offsets = [0, 0], sizes = [1, 128], strides = [1, 1]} : vector<128x128xf32> to vector<1x128xf32>
    %c2 = arith.constant 2 : index
    %c0_28 = arith.constant 0 : index
    %56 = vector.load %arg6[%c2, %c0_28] : memref<8x128xf32, #tpu.memory_space<vmem>>, vector<1x128xf32>
    tpu.vector_store %arg6[%c2, %c0_28], %55 {strides = array<i32>} : memref<8x128xf32, #tpu.memory_space<vmem>>, vector<1x128xf32>,
    %c384 = arith.constant 384 : index
    %c0_29 = arith.constant 0 : index
    %57 = vector.load %arg2[%c384, %c0_29] : memref<1024x32xbf16, #tpu.memory_space<vmem>>, vector<128x32xbf16>
    %cst_30 = arith.constant dense<0.000000e+00> : vector<128x128xf32>
    %58 = tpu.matmul %57, %1, %cst_30 {dimension_numbers = #tpu.dot_dimension_numbers<[1], [0], [0], [1], [0, 0, 1, 1], [], []>} : vector<128x32xbf16>, vector<32x128xbf16>, vector<128x128xf32> -> vector<128x128xf32>
    %59 = arith.truncf %58 : vector<128x128xf32> to vector<128x128xbf16>
    %cst_31 = arith.constant dense<0.000000e+00> : vector<128x128xf32>
    %60 = tpu.matmul %0, %59, %cst_31 {dimension_numbers = #tpu.dot_dimension_numbers<[1], [0], [0], [1], [0, 0, 1, 1], [], []>} : vector<128x128xbf16>, vector<128x128xbf16>, vector<128x128xf32> -> vector<128x128xf32>
    %61 = vector.broadcast %4 : vector<1x128xf32> to vector<128x128xf32>
    %62 = arith.addf %60, %61 : vector<128x128xf32>
    %cst_32 = arith.constant 0.000000e+00 : f32
    %63 = vector.broadcast %cst_32 : f32 to vector<128x128xf32>
    %64 = arith.maximumf %62, %63 : vector<128x128xf32>
    %65 = arith.truncf %64 : vector<128x128xf32> to vector<128x128xbf16>
    %cst_33 = arith.constant dense<0.000000e+00> : vector<128x128xf32>
    %66 = tpu.matmul %65, %2, %cst_33 {dimension_numbers = #tpu.dot_dimension_numbers<[1], [0], [0], [1], [0, 0, 1, 1], [], []>} : vector<128x128xbf16>, vector<128x128xbf16>, vector<128x128xf32> -> vector<128x128xf32>
    %67 = arith.truncf %66 : vector<128x128xf32> to vector<128x128xbf16>
    %cst_34 = arith.constant dense<0.000000e+00> : vector<128x128xf32>
    %68 = tpu.matmul %0, %67, %cst_34 {dimension_numbers = #tpu.dot_dimension_numbers<[1], [0], [0], [1], [0, 0, 1, 1], [], []>} : vector<128x128xbf16>, vector<128x128xbf16>, vector<128x128xf32> -> vector<128x128xf32>
    %69 = vector.broadcast %5 : vector<1x128xf32> to vector<128x128xf32>
    %70 = arith.addf %68, %69 : vector<128x128xf32>
    %71 = tpu.transpose %70, [1, 0] : vector<128x128xf32> -> vector<128x128xf32>
    %72 = vector.extract_strided_slice %71 {offsets = [0, 0], sizes = [1, 128], strides = [1, 1]} : vector<128x128xf32> to vector<1x128xf32>
    %c3 = arith.constant 3 : index
    %c0_35 = arith.constant 0 : index
    %73 = vector.load %arg6[%c3, %c0_35] : memref<8x128xf32, #tpu.memory_space<vmem>>, vector<1x128xf32>
    tpu.vector_store %arg6[%c3, %c0_35], %72 {strides = array<i32>} : memref<8x128xf32, #tpu.memory_space<vmem>>, vector<1x128xf32>,
    %c512 = arith.constant 512 : index
    %c0_36 = arith.constant 0 : index
    %74 = vector.load %arg2[%c512, %c0_36] : memref<1024x32xbf16, #tpu.memory_space<vmem>>, vector<128x32xbf16>
    %cst_37 = arith.constant dense<0.000000e+00> : vector<128x128xf32>
    %75 = tpu.matmul %74, %1, %cst_37 {dimension_numbers = #tpu.dot_dimension_numbers<[1], [0], [0], [1], [0, 0, 1, 1], [], []>} : vector<128x32xbf16>, vector<32x128xbf16>, vector<128x128xf32> -> vector<128x128xf32>
    %76 = arith.truncf %75 : vector<128x128xf32> to vector<128x128xbf16>
    %cst_38 = arith.constant dense<0.000000e+00> : vector<128x128xf32>
    %77 = tpu.matmul %0, %76, %cst_38 {dimension_numbers = #tpu.dot_dimension_numbers<[1], [0], [0], [1], [0, 0, 1, 1], [], []>} : vector<128x128xbf16>, vector<128x128xbf16>, vector<128x128xf32> -> vector<128x128xf32>
    %78 = vector.broadcast %4 : vector<1x128xf32> to vector<128x128xf32>
    %79 = arith.addf %77, %78 : vector<128x128xf32>
    %cst_39 = arith.constant 0.000000e+00 : f32
    %80 = vector.broadcast %cst_39 : f32 to vector<128x128xf32>
    %81 = arith.maximumf %79, %80 : vector<128x128xf32>
    %82 = arith.truncf %81 : vector<128x128xf32> to vector<128x128xbf16>
    %cst_40 = arith.constant dense<0.000000e+00> : vector<128x128xf32>
    %83 = tpu.matmul %82, %2, %cst_40 {dimension_numbers = #tpu.dot_dimension_numbers<[1], [0], [0], [1], [0, 0, 1, 1], [], []>} : vector<128x128xbf16>, vector<128x128xbf16>, vector<128x128xf32> -> vector<128x128xf32>
    %84 = arith.truncf %83 : vector<128x128xf32> to vector<128x128xbf16>
    %cst_41 = arith.constant dense<0.000000e+00> : vector<128x128xf32>
    %85 = tpu.matmul %0, %84, %cst_41 {dimension_numbers = #tpu.dot_dimension_numbers<[1], [0], [0], [1], [0, 0, 1, 1], [], []>} : vector<128x128xbf16>, vector<128x128xbf16>, vector<128x128xf32> -> vector<128x128xf32>
    %86 = vector.broadcast %5 : vector<1x128xf32> to vector<128x128xf32>
    %87 = arith.addf %85, %86 : vector<128x128xf32>
    %88 = tpu.transpose %87, [1, 0] : vector<128x128xf32> -> vector<128x128xf32>
    %89 = vector.extract_strided_slice %88 {offsets = [0, 0], sizes = [1, 128], strides = [1, 1]} : vector<128x128xf32> to vector<1x128xf32>
    %c4 = arith.constant 4 : index
    %c0_42 = arith.constant 0 : index
    %90 = vector.load %arg6[%c4, %c0_42] : memref<8x128xf32, #tpu.memory_space<vmem>>, vector<1x128xf32>
    tpu.vector_store %arg6[%c4, %c0_42], %89 {strides = array<i32>} : memref<8x128xf32, #tpu.memory_space<vmem>>, vector<1x128xf32>,
    %c640 = arith.constant 640 : index
    %c0_43 = arith.constant 0 : index
    %91 = vector.load %arg2[%c640, %c0_43] : memref<1024x32xbf16, #tpu.memory_space<vmem>>, vector<128x32xbf16>
    %cst_44 = arith.constant dense<0.000000e+00> : vector<128x128xf32>
    %92 = tpu.matmul %91, %1, %cst_44 {dimension_numbers = #tpu.dot_dimension_numbers<[1], [0], [0], [1], [0, 0, 1, 1], [], []>} : vector<128x32xbf16>, vector<32x128xbf16>, vector<128x128xf32> -> vector<128x128xf32>
    %93 = arith.truncf %92 : vector<128x128xf32> to vector<128x128xbf16>
    %cst_45 = arith.constant dense<0.000000e+00> : vector<128x128xf32>
    %94 = tpu.matmul %0, %93, %cst_45 {dimension_numbers = #tpu.dot_dimension_numbers<[1], [0], [0], [1], [0, 0, 1, 1], [], []>} : vector<128x128xbf16>, vector<128x128xbf16>, vector<128x128xf32> -> vector<128x128xf32>
    %95 = vector.broadcast %4 : vector<1x128xf32> to vector<128x128xf32>
    %96 = arith.addf %94, %95 : vector<128x128xf32>
    %cst_46 = arith.constant 0.000000e+00 : f32
    %97 = vector.broadcast %cst_46 : f32 to vector<128x128xf32>
    %98 = arith.maximumf %96, %97 : vector<128x128xf32>
    %99 = arith.truncf %98 : vector<128x128xf32> to vector<128x128xbf16>
    %cst_47 = arith.constant dense<0.000000e+00> : vector<128x128xf32>
    %100 = tpu.matmul %99, %2, %cst_47 {dimension_numbers = #tpu.dot_dimension_numbers<[1], [0], [0], [1], [0, 0, 1, 1], [], []>} : vector<128x128xbf16>, vector<128x128xbf16>, vector<128x128xf32> -> vector<128x128xf32>
    %101 = arith.truncf %100 : vector<128x128xf32> to vector<128x128xbf16>
    %cst_48 = arith.constant dense<0.000000e+00> : vector<128x128xf32>
    %102 = tpu.matmul %0, %101, %cst_48 {dimension_numbers = #tpu.dot_dimension_numbers<[1], [0], [0], [1], [0, 0, 1, 1], [], []>} : vector<128x128xbf16>, vector<128x128xbf16>, vector<128x128xf32> -> vector<128x128xf32>
    %103 = vector.broadcast %5 : vector<1x128xf32> to vector<128x128xf32>
    %104 = arith.addf %102, %103 : vector<128x128xf32>
    %105 = tpu.transpose %104, [1, 0] : vector<128x128xf32> -> vector<128x128xf32>
    %106 = vector.extract_strided_slice %105 {offsets = [0, 0], sizes = [1, 128], strides = [1, 1]} : vector<128x128xf32> to vector<1x128xf32>
    %c5 = arith.constant 5 : index
    %c0_49 = arith.constant 0 : index
    %107 = vector.load %arg6[%c5, %c0_49] : memref<8x128xf32, #tpu.memory_space<vmem>>, vector<1x128xf32>
    tpu.vector_store %arg6[%c5, %c0_49], %106 {strides = array<i32>} : memref<8x128xf32, #tpu.memory_space<vmem>>, vector<1x128xf32>,
    %c768 = arith.constant 768 : index
    %c0_50 = arith.constant 0 : index
    %108 = vector.load %arg2[%c768, %c0_50] : memref<1024x32xbf16, #tpu.memory_space<vmem>>, vector<128x32xbf16>
    %cst_51 = arith.constant dense<0.000000e+00> : vector<128x128xf32>
    %109 = tpu.matmul %108, %1, %cst_51 {dimension_numbers = #tpu.dot_dimension_numbers<[1], [0], [0], [1], [0, 0, 1, 1], [], []>} : vector<128x32xbf16>, vector<32x128xbf16>, vector<128x128xf32> -> vector<128x128xf32>
    %110 = arith.truncf %109 : vector<128x128xf32> to vector<128x128xbf16>
    %cst_52 = arith.constant dense<0.000000e+00> : vector<128x128xf32>
    %111 = tpu.matmul %0, %110, %cst_52 {dimension_numbers = #tpu.dot_dimension_numbers<[1], [0], [0], [1], [0, 0, 1, 1], [], []>} : vector<128x128xbf16>, vector<128x128xbf16>, vector<128x128xf32> -> vector<128x128xf32>
    %112 = vector.broadcast %4 : vector<1x128xf32> to vector<128x128xf32>
    %113 = arith.addf %111, %112 : vector<128x128xf32>
    %cst_53 = arith.constant 0.000000e+00 : f32
    %114 = vector.broadcast %cst_53 : f32 to vector<128x128xf32>
    %115 = arith.maximumf %113, %114 : vector<128x128xf32>
    %116 = arith.truncf %115 : vector<128x128xf32> to vector<128x128xbf16>
    %cst_54 = arith.constant dense<0.000000e+00> : vector<128x128xf32>
    %117 = tpu.matmul %116, %2, %cst_54 {dimension_numbers = #tpu.dot_dimension_numbers<[1], [0], [0], [1], [0, 0, 1, 1], [], []>} : vector<128x128xbf16>, vector<128x128xbf16>, vector<128x128xf32> -> vector<128x128xf32>
    %118 = arith.truncf %117 : vector<128x128xf32> to vector<128x128xbf16>
    %cst_55 = arith.constant dense<0.000000e+00> : vector<128x128xf32>
    %119 = tpu.matmul %0, %118, %cst_55 {dimension_numbers = #tpu.dot_dimension_numbers<[1], [0], [0], [1], [0, 0, 1, 1], [], []>} : vector<128x128xbf16>, vector<128x128xbf16>, vector<128x128xf32> -> vector<128x128xf32>
    %120 = vector.broadcast %5 : vector<1x128xf32> to vector<128x128xf32>
    %121 = arith.addf %119, %120 : vector<128x128xf32>
    %122 = tpu.transpose %121, [1, 0] : vector<128x128xf32> -> vector<128x128xf32>
    %123 = vector.extract_strided_slice %122 {offsets = [0, 0], sizes = [1, 128], strides = [1, 1]} : vector<128x128xf32> to vector<1x128xf32>
    %c6 = arith.constant 6 : index
    %c0_56 = arith.constant 0 : index
    %124 = vector.load %arg6[%c6, %c0_56] : memref<8x128xf32, #tpu.memory_space<vmem>>, vector<1x128xf32>
    tpu.vector_store %arg6[%c6, %c0_56], %123 {strides = array<i32>} : memref<8x128xf32, #tpu.memory_space<vmem>>, vector<1x128xf32>,
    %c896 = arith.constant 896 : index
    %c0_57 = arith.constant 0 : index
    %125 = vector.load %arg2[%c896, %c0_57] : memref<1024x32xbf16, #tpu.memory_space<vmem>>, vector<128x32xbf16>
    %cst_58 = arith.constant dense<0.000000e+00> : vector<128x128xf32>
    %126 = tpu.matmul %125, %1, %cst_58 {dimension_numbers = #tpu.dot_dimension_numbers<[1], [0], [0], [1], [0, 0, 1, 1], [], []>} : vector<128x32xbf16>, vector<32x128xbf16>, vector<128x128xf32> -> vector<128x128xf32>
    %127 = arith.truncf %126 : vector<128x128xf32> to vector<128x128xbf16>
    %cst_59 = arith.constant dense<0.000000e+00> : vector<128x128xf32>
    %128 = tpu.matmul %0, %127, %cst_59 {dimension_numbers = #tpu.dot_dimension_numbers<[1], [0], [0], [1], [0, 0, 1, 1], [], []>} : vector<128x128xbf16>, vector<128x128xbf16>, vector<128x128xf32> -> vector<128x128xf32>
    %129 = vector.broadcast %4 : vector<1x128xf32> to vector<128x128xf32>
    %130 = arith.addf %128, %129 : vector<128x128xf32>
    %cst_60 = arith.constant 0.000000e+00 : f32
    %131 = vector.broadcast %cst_60 : f32 to vector<128x128xf32>
    %132 = arith.maximumf %130, %131 : vector<128x128xf32>
    %133 = arith.truncf %132 : vector<128x128xf32> to vector<128x128xbf16>
    %cst_61 = arith.constant dense<0.000000e+00> : vector<128x128xf32>
    %134 = tpu.matmul %133, %2, %cst_61 {dimension_numbers = #tpu.dot_dimension_numbers<[1], [0], [0], [1], [0, 0, 1, 1], [], []>} : vector<128x128xbf16>, vector<128x128xbf16>, vector<128x128xf32> -> vector<128x128xf32>
    %135 = arith.truncf %134 : vector<128x128xf32> to vector<128x128xbf16>
    %cst_62 = arith.constant dense<0.000000e+00> : vector<128x128xf32>
    %136 = tpu.matmul %0, %135, %cst_62 {dimension_numbers = #tpu.dot_dimension_numbers<[1], [0], [0], [1], [0, 0, 1, 1], [], []>} : vector<128x128xbf16>, vector<128x128xbf16>, vector<128x128xf32> -> vector<128x128xf32>
    %137 = vector.broadcast %5 : vector<1x128xf32> to vector<128x128xf32>
    %138 = arith.addf %136, %137 : vector<128x128xf32>
    %139 = tpu.transpose %138, [1, 0] : vector<128x128xf32> -> vector<128x128xf32>
    %140 = vector.extract_strided_slice %139 {offsets = [0, 0], sizes = [1, 128], strides = [1, 1]} : vector<128x128xf32> to vector<1x128xf32>
    %c7 = arith.constant 7 : index
    %c0_63 = arith.constant 0 : index
    %141 = vector.load %arg6[%c7, %c0_63] : memref<8x128xf32, #tpu.memory_space<vmem>>, vector<1x128xf32>
    tpu.vector_store %arg6[%c7, %c0_63], %140 {strides = array<i32>} : memref<8x128xf32, #tpu.memory_space<vmem>>, vector<1x128xf32>,
    return
  }
  func.func @transform_0(%arg0: i32) -> (i32, i32) {
    %c0_i32 = arith.constant 0 : i32
    %c0_i32_0 = arith.constant 0 : i32
    %c0_i32_1 = arith.constant 0 : i32
    return %c0_i32, %c0_i32_0 : i32, i32
  }
  func.func @transform_1(%arg0: i32) -> (i32, i32) {
    %c0_i32 = arith.constant 0 : i32
    %c0_i32_0 = arith.constant 0 : i32
    return %arg0, %c0_i32 : i32, i32
  }
  func.func @transform_2(%arg0: i32) -> (i32, i32) {
    %c0_i32 = arith.constant 0 : i32
    %c0_i32_0 = arith.constant 0 : i32
    %c0_i32_1 = arith.constant 0 : i32
    return %c0_i32, %c0_i32_0 : i32, i32
  }
  func.func @transform_3(%arg0: i32) -> (i32, i32) {
    %c0_i32 = arith.constant 0 : i32
    %c0_i32_0 = arith.constant 0 : i32
    %c0_i32_1 = arith.constant 0 : i32
    return %c0_i32, %c0_i32_0 : i32, i32
  }
  func.func @transform_4(%arg0: i32) -> (i32, i32) {
    %c0_i32 = arith.constant 0 : i32
    %c0_i32_0 = arith.constant 0 : i32
    %c0_i32_1 = arith.constant 0 : i32
    return %c0_i32, %c0_i32_0 : i32, i32
  }
  func.func @transform_5(%arg0: i32) -> (i32, i32) {
    %c0_i32 = arith.constant 0 : i32
    %c0_i32_0 = arith.constant 0 : i32
    return %arg0, %c0_i32 : i32, i32
  }
}

</mosaic_0001>

<llo_original>
// kernel: tpu_custom_call.1
$region0: #{tpu_custom_call.1}
  #allocation0 [shape = 'u32[]', space=smem, size = 0x4, offset = 0x4, fixed_abs, tag = 'smem constant byte address 0x4 - core index']
  #allocation1 [shape = 'u32[144,128]{1,0:T(1,128)}', space=vmem, size = 0x12000, scoped, tag = 'internal scratch']
  %s0 = inlined_call_operand.vmem [shape: bf16[128,128], index: 0, kind: input, shape index: {}]
  %s1 = inlined_call_operand.vmem [shape: bf16[8192,32], index: 1, kind: input, shape index: {}]
  %s2 = inlined_call_operand.vmem [shape: bf16[32,128], index: 2, kind: input, shape index: {}]
  %s3 = inlined_call_operand.vmem [shape: bf16[128,128], index: 3, kind: input, shape index: {}]
  %s4 = inlined_call_operand.vmem [shape: f32[2,128], index: 4, kind: input, shape index: {}]
  %s5 = inlined_call_operand.hbm [shape: f32[64,128], index: 5, kind: output, shape index: {}]
  %s6 = sld [smem:[#allocation0]]
  $region53: #{tpu_custom_call.1} parent=0
    _
  %s8 = ssub.s32 1, %s6
  %s9 = scalar_select 0, %s8, %s6
  $region1: #{tpu_custom_call.1} parent=0
    #allocation2 [shape = 'u8[8192]{0}', space=vmem, size = 0x2000, scoped, tag = 'output window, operand 0']
    #allocation3 [shape = 's32[2]{0}', space=sflag, size = 0x8, scoped, tag = 'scoped memory for tpu_custom_call.1']
    %10 = vsyncpa [#allocation3], 0
    %s11 = scalar_lea.sflag [#allocation3], 1
    %12 = vsyncpa %s11, 0
    loop: start=0, step=1, limit=10
    $region2: #{tpu_custom_call.1} parent=1 // loop_pre_header
      _
    $region3: #{tpu_custom_call.1} parent=1 // loop_header
      %s14 = sphi 0, %s18
      %p15 = scmp.ge.s32.totalorder %s14, 10
      %s22 = sphi 0, %s22
      %s24 = sphi 0, %s22
      %s25 = sphi 0, %s24
      %s39 = sphi 0, %s25
      %s45 = sphi 0, %s47
      %s48 = sphi 0, %s45
      %s49 = sphi 0, %s48
      %s65 = sphi 0, %s49
      %s69 = sphi 0, %s69
      %s71 = sphi 0, %s69
      %s72 = sphi 0, %s71
      %s86 = sphi 0, %s72
      %s90 = sphi 0, %s90
      %s92 = sphi 0, %s90
      %s93 = sphi 0, %s92
      %s107 = sphi 0, %s93
      %s111 = sphi 0, %s111
      %s113 = sphi 0, %s111
      %s114 = sphi 0, %s113
      %s128 = sphi 0, %s114
      %s134 = sphi 0, %s136
      %s137 = sphi 0, %s134
      %s138 = sphi 0, %s137
      %s154 = sphi 0, %s138
    $region4: #{tpu_custom_call.1} parent=1 // loop_header_branch
      %17 = sbr.rel (%p15) target = $region8
    $region5: #{tpu_custom_call.1} parent=1 // loop_body
      %s19 = ssub.s32 %s14, 1
      %s20 = ssub.s32 %s14, 2
      %s21 = sadd.s32 %s14, 1
      %s23 = sadd.s32 %s22, 1
      %p26 = scmp.eq.s32.totalorder %s14, 7
      %p27 = scmp.ne.s32.totalorder %s22, %s24
      %p28 = scmp.eq.s32.totalorder %s14, 0
      %p29 = por %p27, %p28
      %p30 = scmp.ne.s32.totalorder %s22, %s24
      %p31 = scmp.eq.s32.totalorder %s19, 7
      %p32 = por %p30, %p31
      %p33 = scmp.ne.s32.totalorder %s24, %s25
      %p34 = scmp.eq.s32.totalorder %s19, 0
      %p35 = por %p33, %p34
      %p36 = scmp.ne.s32.totalorder %s24, %s25
      %p37 = scmp.eq.s32.totalorder %s20, 7
      %p38 = por %p36, %p37
      %p40 = scmp.ne.s32.totalorder %s25, %s39
      %p41 = scmp.eq.s32.totalorder %s20, 0
      %p42 = por %p40, %p41
      %s43 = ssub.s32 %s14, %s21
      %p44 = scmp.eq.s32.totalorder %s43, 0
      %s46 = sadd.s32 %s45, 1
      %s47 = scalar_select %p44, %s45, %s46
      %p50 = pneg %p44
      %p51 = scmp.eq.s32.totalorder %s14, 7
      %p52 = por %p50, %p51
      %p53 = scmp.ne.s32.totalorder %s45, %s48
      %p54 = scmp.eq.s32.totalorder %s14, 0
      %p55 = por %p53, %p54
      %p56 = scmp.ne.s32.totalorder %s45, %s48
      %p57 = scmp.eq.s32.totalorder %s19, 7
      %p58 = por %p56, %p57
      %p59 = scmp.ne.s32.totalorder %s48, %s49
      %p60 = scmp.eq.s32.totalorder %s19, 0
      %p61 = por %p59, %p60
      %p62 = scmp.ne.s32.totalorder %s48, %s49
      %p63 = scmp.eq.s32.totalorder %s20, 7
      %p64 = por %p62, %p63
      %p66 = scmp.ne.s32.totalorder %s49, %s65
      %p67 = scmp.eq.s32.totalorder %s20, 0
      %p68 = por %p66, %p67
      %s70 = sadd.s32 %s69, 1
      %p73 = scmp.eq.s32.totalorder %s14, 7
      %p74 = scmp.ne.s32.totalorder %s69, %s71
      %p75 = scmp.eq.s32.totalorder %s14, 0
      %p76 = por %p74, %p75
      %p77 = scmp.ne.s32.totalorder %s69, %s71
      %p78 = scmp.eq.s32.totalorder %s19, 7
      %p79 = por %p77, %p78
      %p80 = scmp.ne.s32.totalorder %s71, %s72
      %p81 = scmp.eq.s32.totalorder %s19, 0
      %p82 = por %p80, %p81
      %p83 = scmp.ne.s32.totalorder %s71, %s72
      %p84 = scmp.eq.s32.totalorder %s20, 7
      %p85 = por %p83, %p84
      %p87 = scmp.ne.s32.totalorder %s72, %s86
      %p88 = scmp.eq.s32.totalorder %s20, 0
      %p89 = por %p87, %p88
      %s91 = sadd.s32 %s90, 1
      %p94 = scmp.eq.s32.totalorder %s14, 7
      %p95 = scmp.ne.s32.totalorder %s90, %s92
      %p96 = scmp.eq.s32.totalorder %s14, 0
      %p97 = por %p95, %p96
      %p98 = scmp.ne.s32.totalorder %s90, %s92
      %p99 = scmp.eq.s32.totalorder %s19, 7
      %p100 = por %p98, %p99
      %p101 = scmp.ne.s32.totalorder %s92, %s93
      %p102 = scmp.eq.s32.totalorder %s19, 0
      %p103 = por %p101, %p102
      %p104 = scmp.ne.s32.totalorder %s92, %s93
      %p105 = scmp.eq.s32.totalorder %s20, 7
      %p106 = por %p104, %p105
      %p108 = scmp.ne.s32.totalorder %s93, %s107
      %p109 = scmp.eq.s32.totalorder %s20, 0
      %p110 = por %p108, %p109
      %s112 = sadd.s32 %s111, 1
      %p115 = scmp.eq.s32.totalorder %s14, 7
      %p116 = scmp.ne.s32.totalorder %s111, %s113
      %p117 = scmp.eq.s32.totalorder %s14, 0
      %p118 = por %p116, %p117
      %p119 = scmp.ne.s32.totalorder %s111, %s113
      %p120 = scmp.eq.s32.totalorder %s19, 7
      %p121 = por %p119, %p120
      %p122 = scmp.ne.s32.totalorder %s113, %s114
      %p123 = scmp.eq.s32.totalorder %s19, 0
      %p124 = por %p122, %p123
      %p125 = scmp.ne.s32.totalorder %s113, %s114
      %p126 = scmp.eq.s32.totalorder %s20, 7
      %p127 = por %p125, %p126
      %p129 = scmp.ne.s32.totalorder %s114, %s128
      %p130 = scmp.eq.s32.totalorder %s20, 0
      %p131 = por %p129, %p130
      %s132 = ssub.s32 %s14, %s21
      %p133 = scmp.eq.s32.totalorder %s132, 0
      %s135 = sadd.s32 %s134, 1
      %s136 = scalar_select %p133, %s134, %s135
      %p139 = pneg %p133
      %p140 = scmp.eq.s32.totalorder %s14, 7
      %p141 = por %p139, %p140
      %p142 = scmp.ne.s32.totalorder %s134, %s137
      %p143 = scmp.eq.s32.totalorder %s14, 0
      %p144 = por %p142, %p143
      %p145 = scmp.ne.s32.totalorder %s134, %s137
      %p146 = scmp.eq.s32.totalorder %s19, 7
      %p147 = por %p145, %p146
      %p148 = scmp.ne.s32.totalorder %s137, %s138
      %p149 = scmp.eq.s32.totalorder %s19, 0
      %p150 = por %p148, %p149
      %p151 = scmp.ne.s32.totalorder %s137, %s138
      %p152 = scmp.eq.s32.totalorder %s20, 7
      %p153 = por %p151, %p152
      %p155 = scmp.ne.s32.totalorder %s138, %s154
      %p156 = scmp.eq.s32.totalorder %s20, 0
      %p157 = por %p155, %p156
      %p158 = scmp.le.s32.totalorder 1, %s14
      %p159 = scmp.lt.s32.totalorder %s14, 9
      %p160 = pnand %p158, %p159
      %p161 = pneg %p160
      // Predicated region
      $region9: #{tpu_custom_call.1} parent=5 // pred_check
        _
      $region10: #{tpu_custom_call.1} parent=5 // pred_check_branch
        %163 = sbr.rel (%p160) target = $region12
      $region11: #{tpu_custom_call.1} parent=5 // pred_region
        %s164 = ssub.s32 %s14, 1
        // Predicated region
        $region13: #{tpu_custom_call.1} parent=11 // pred_check
          %p165 = pneg %p35
        $region14: #{tpu_custom_call.1} parent=11 // pred_check_branch
          %167 = sbr.rel (%p165) target = $region16
        $region15: #{tpu_custom_call.1} parent=11 // pred_region
          _
        $region16: #{tpu_custom_call.1} parent=11 // pred_fallthru
          _
        // Predicated region
        $region17: #{tpu_custom_call.1} parent=11 // pred_check
          %p168 = pneg %p82
        $region18: #{tpu_custom_call.1} parent=11 // pred_check_branch
          %170 = sbr.rel (%p168) target = $region20
        $region19: #{tpu_custom_call.1} parent=11 // pred_region
          _
        $region20: #{tpu_custom_call.1} parent=11 // pred_fallthru
          _
        // Predicated region
        $region21: #{tpu_custom_call.1} parent=11 // pred_check
          %p171 = pneg %p103
        $region22: #{tpu_custom_call.1} parent=11 // pred_check_branch
          %173 = sbr.rel (%p171) target = $region24
        $region23: #{tpu_custom_call.1} parent=11 // pred_region
          _
        $region24: #{tpu_custom_call.1} parent=11 // pred_fallthru
          _
        // Predicated region
        $region25: #{tpu_custom_call.1} parent=11 // pred_check
          %p174 = pneg %p124
        $region26: #{tpu_custom_call.1} parent=11 // pred_check_branch
          %176 = sbr.rel (%p174) target = $region28
        $region27: #{tpu_custom_call.1} parent=11 // pred_region
          _
        $region28: #{tpu_custom_call.1} parent=11 // pred_fallthru
          _
      $region12: #{tpu_custom_call.1} parent=5 // pred_fallthru
        _
      %p177 = scmp.lt.s32.totalorder %s14, 8
      // Predicated region
      $region29: #{tpu_custom_call.1} parent=5 // pred_check
        %p178 = pneg %p177
      $region30: #{tpu_custom_call.1} parent=5 // pred_check_branch
        %180 = sbr.rel (%p178) target = $region32
      $region31: #{tpu_custom_call.1} parent=5 // pred_region
        // Predicated region
        $region33: #{tpu_custom_call.1} parent=31 // pred_check
          %p181 = pneg %p55
        $region34: #{tpu_custom_call.1} parent=31 // pred_check_branch
          %183 = sbr.rel (%p181) target = $region36
        $region35: #{tpu_custom_call.1} parent=31 // pred_region
          %s184 = smul.u32 128, %s14
          %p185 = scmp.lt.s32.totalorder %s184, 1023
          %s186 = scalar_select %p185, %s184, 1023
          %s187 = smul.addr %s186, 4
          %s188 = scalar_lea.vmem %s1, %s187
          %s189 = smul.u32 128, %s14
        $region36: #{tpu_custom_call.1} parent=31 // pred_fallthru
          _
      $region32: #{tpu_custom_call.1} parent=5 // pred_fallthru
        _
      %p190 = scmp.le.s32.totalorder 1, %s14
      %p191 = scmp.lt.s32.totalorder %s14, 9
      %p192 = pnand %p190, %p191
      %p193 = pneg %p192
      // Predicated region
      $region37: #{tpu_custom_call.1} parent=5 // pred_check
        _
      $region38: #{tpu_custom_call.1} parent=5 // pred_check_branch
        %195 = sbr.rel (%p192) target = $region40
      $region39: #{tpu_custom_call.1} parent=5 // pred_region
        %s196 = ssub.s32 %s14, 1
        %p197 = pneg %p35
        %p198 = pneg %p32
        %s199 = smul.u32 128, %s19
        %p200 = scmp.lt.s32.totalorder %s199, 1023
        %s201 = scalar_select %p200, %s199, 1023
        %s202 = smul.addr %s201, 4
        %s203 = scalar_lea.vmem %s1, %s202
        %p204 = pneg %p61
        %p205 = pneg %p58
        %p206 = pneg %p82
        %p207 = pneg %p79
        %p208 = pneg %p103
        %p209 = pneg %p100
        %p210 = pneg %p124
        %p211 = pneg %p121
        %p212 = pneg %p150
        %p213 = pneg %p147
        %s214 = sand.u32 %s137, 1
        %s215 = scalar_lea.sflag [#allocation3], %s214
        %s216 = sand.u32 %s137, 1
        %s217 = smul.addr %s216, 8
        %s218 = scalar_lea.vmem [#allocation2], %s217
        %s219 = smul.u32 128, %s19
        %p220 = scmp.lt.s32.totalorder %s219, 1023
        %s221 = scalar_select %p220, %s219, 1023
        %s222 = smul.addr %s221, 4
        %s223 = scalar_lea.vmem %s1, %s222
        %s224 = smul.u32 128, %s19
        %v226 = vld [vmem:[%s0] sm:$0xf]
        %v227 = vld [vmem:[%s0 + $0x4] sm:$0xf]
        %v228 = vld [vmem:[%s0 + $0x8] sm:$0xf]
        %v229 = vld [vmem:[%s0 + $0xc] sm:$0xf]
        %v230 = vld [vmem:[%s0 + $0x10] sm:$0xf]
        %v231 = vld [vmem:[%s0 + $0x14] sm:$0xf]
        %v232 = vld [vmem:[%s0 + $0x18] sm:$0xf]
        %v233 = vld [vmem:[%s0 + $0x1c] sm:$0xf]
        %v234 = vld [vmem:[%s0 + $0x20] sm:$0xf]
        %v235 = vld [vmem:[%s0 + $0x24] sm:$0xf]
        %v236 = vld [vmem:[%s0 + $0x28] sm:$0xf]
        %v237 = vld [vmem:[%s0 + $0x2c] sm:$0xf]
        %v238 = vld [vmem:[%s0 + $0x30] sm:$0xf]
        %v239 = vld [vmem:[%s0 + $0x34] sm:$0xf]
        %v240 = vld [vmem:[%s0 + $0x38] sm:$0xf]
        %v241 = vld [vmem:[%s0 + $0x3c] sm:$0xf]
        %v242 = vld [vmem:[%s2] sm:$0xf]
        %v243 = vld [vmem:[%s2 + $0x4] sm:$0xf]
        %v244 = vld [vmem:[%s2 + $0x8] sm:$0xf]
        %v245 = vld [vmem:[%s2 + $0xc] sm:$0xf]
        %v246 = vld [vmem:[%s3] sm:$0xf]
        %v247 = vld [vmem:[%s3 + $0x4] sm:$0xf]
        %v248 = vld [vmem:[%s3 + $0x8] sm:$0xf]
        %v249 = vld [vmem:[%s3 + $0xc] sm:$0xf]
        %v250 = vld [vmem:[%s3 + $0x10] sm:$0xf]
        %v251 = vld [vmem:[%s3 + $0x14] sm:$0xf]
        %v252 = vld [vmem:[%s3 + $0x18] sm:$0xf]
        %v253 = vld [vmem:[%s3 + $0x1c] sm:$0xf]
        %v254 = vld [vmem:[%s3 + $0x20] sm:$0xf]
        %v255 = vld [vmem:[%s3 + $0x24] sm:$0xf]
        %v256 = vld [vmem:[%s3 + $0x28] sm:$0xf]
        %v257 = vld [vmem:[%s3 + $0x2c] sm:$0xf]
        %v258 = vld [vmem:[%s3 + $0x30] sm:$0xf]
        %v259 = vld [vmem:[%s3 + $0x34] sm:$0xf]
        %v260 = vld [vmem:[%s3 + $0x38] sm:$0xf]
        %v261 = vld [vmem:[%s3 + $0x3c] sm:$0xf]
        %v262 = vld [vmem:[%s4] sm:$0x3]
        %v263 = vld [vmem:[%s223] sm:$0xf]
        %v264 = vld [vmem:[%s223 + $0x4] sm:$0xf]
        %v265 = vld [vmem:[%s223 + $0x8] sm:$0xf]
        %v266 = vld [vmem:[%s223 + $0xc] sm:$0xf]
        %v267 = vld [vmem:[%s223 + $0x10] sm:$0xf]
        %v268 = vld [vmem:[%s223 + $0x14] sm:$0xf]
        %v269 = vld [vmem:[%s223 + $0x18] sm:$0xf]
        %v270 = vld [vmem:[%s223 + $0x1c] sm:$0xf]
        %v271 = vld [vmem:[%s223 + $0x20] sm:$0xf]
        %v272 = vld [vmem:[%s223 + $0x24] sm:$0xf]
        %v273 = vld [vmem:[%s223 + $0x28] sm:$0xf]
        %v274 = vld [vmem:[%s223 + $0x2c] sm:$0xf]
        %v275 = vld [vmem:[%s223 + $0x30] sm:$0xf]
        %v276 = vld [vmem:[%s223 + $0x34] sm:$0xf]
        %v277 = vld [vmem:[%s223 + $0x38] sm:$0xf]
        %v278 = vld [vmem:[%s223 + $0x3c] sm:$0xf]
        %v295 = vunpack.c.l.b16 %v263
        %v296 = vunpack.c.l.b16 %v264
        %v297 = vunpack.c.l.b16 %v265
        %v298 = vunpack.c.l.b16 %v266
        %v299 = vunpack.c.l.b16 %v267
        %v300 = vunpack.c.l.b16 %v268
        %v301 = vunpack.c.l.b16 %v269
        %v302 = vunpack.c.l.b16 %v270
        %v303 = vunpack.c.l.b16 %v271
        %v304 = vunpack.c.l.b16 %v272
        %v305 = vunpack.c.l.b16 %v273
        %v306 = vunpack.c.l.b16 %v274
        %v307 = vunpack.c.l.b16 %v275
        %v308 = vunpack.c.l.b16 %v276
        %v309 = vunpack.c.l.b16 %v277
        %v310 = vunpack.c.l.b16 %v278
        %v311 = vpack.c.b16 %v296, %v295
        %v312 = vpack.c.b16 %v298, %v297
        %v313 = vpack.c.b16 %v300, %v299
        %v314 = vpack.c.b16 %v302, %v301
        %v315 = vpack.c.b16 %v304, %v303
        %v316 = vpack.c.b16 %v306, %v305
        %v317 = vpack.c.b16 %v308, %v307
        %v318 = vpack.c.b16 %v310, %v309
        %v323 = vunpack.c.l.b16 %v242
        %v324 = vunpack.c.l.b16 %v243
        %v325 = vunpack.c.l.b16 %v244
        %v326 = vunpack.c.l.b16 %v245
        %v327 = vpack.c.b16 %v324, %v323
        %v328 = vpack.c.b16 %v326, %v325
        %vm331 = vcmask 261120
        %v333 = vsel %vm331, %v311, 0
        %v336 = vsel %vm331, %v312, 0
        %v339 = vsel %vm331, %v313, 0
        %v342 = vsel %vm331, %v314, 0
        %v345 = vsel %vm331, %v315, 0
        %v348 = vsel %vm331, %v316, 0
        %v351 = vsel %vm331, %v317, 0
        %v354 = vsel %vm331, %v318, 0
        %356 = vmatprep.subr.bf16.mxu0 0
        %357 = vmatpush1.bf16.msra.mxu0 %v327
        %358 = vmatprep.subr.bf16.mxu0 0
        %359 = vmatpush1.bf16.msra.mxu0 %v328
        %360 = vmatprep.subr.bf16.mxu0 0
        %361 = vmatpush1.bf16.msra.mxu0 0
        %362 = vmatprep.subr.bf16.mxu0 0
        %363 = vmatpush1.bf16.msra.mxu0 0
        %364 = vmatprep.subr.bf16.mxu0 0
        %365 = vmatpush1.bf16.msra.mxu0 0
        %366 = vmatprep.subr.bf16.mxu0 0
        %367 = vmatpush1.bf16.msra.mxu0 0
        %368 = vmatprep.subr.bf16.mxu0 0
        %369 = vmatpush1.bf16.msra.mxu0 0
        %370 = vmatprep.subr.bf16.mxu0 0
        %371 = vmatpush1.bf16.msra.mxu0 0
        %372 = vmatprep.subr.bf16.mxu0 0
        %373 = vmatpush1.bf16.msra.mxu0 0
        %374 = vmatprep.subr.bf16.mxu0 0
        %375 = vmatpush1.bf16.msra.mxu0 0
        %376 = vmatprep.subr.bf16.mxu0 0
        %377 = vmatpush1.bf16.msra.mxu0 0
        %378 = vmatprep.subr.bf16.mxu0 0
        %379 = vmatpush1.bf16.msra.mxu0 0
        %380 = vmatprep.subr.bf16.mxu0 0
        %381 = vmatpush1.bf16.msra.mxu0 0
        %382 = vmatprep.subr.bf16.mxu0 0
        %383 = vmatpush1.bf16.msra.mxu0 0
        %384 = vmatprep.subr.bf16.mxu0 0
        %385 = vmatpush1.bf16.msra.mxu0 0
        %386 = vmatprep.subr.bf16.mxu0 0
        %387 = vmatpush1.bf16.msra.mxu0 0
        %388 = vmatprep.mubr.bf16.mxu0 0
        %389 = vmatmul.mubr.bf16.gmra.mrb[0].mxu0 %v333
        %v390 = vpop.f32.mrb[0].mxu0
        %v391 = vadd.f32 0.0, %v390
        %v392 = vpop.f32.mrb[0].mxu0
        %v393 = vpop.f32.mrb[0].mxu0
        %v394 = vadd.f32 0.0, %v393
        %v395 = vpop.f32.mrb[0].mxu0
        %396 = vmatprep.mubr.bf16.mxu0 0
        %397 = vmatmul.mubr.bf16.gmra.mrb[0].mxu0 %v336
        %v398 = vpop.f32.mrb[0].mxu0
        %v399 = vadd.f32 0.0, %v398
        %v400 = vpop.f32.mrb[0].mxu0
        %v401 = vpop.f32.mrb[0].mxu0
        %v402 = vadd.f32 0.0, %v401
        %v403 = vpop.f32.mrb[0].mxu0
        %404 = vmatprep.mubr.bf16.mxu0 0
        %405 = vmatmul.mubr.bf16.gmra.mrb[0].mxu0 %v339
        %v406 = vpop.f32.mrb[0].mxu0
        %v407 = vadd.f32 0.0, %v406
        %v408 = vpop.f32.mrb[0].mxu0
        %v409 = vpop.f32.mrb[0].mxu0
        %v410 = vadd.f32 0.0, %v409
        %v411 = vpop.f32.mrb[0].mxu0
        %412 = vmatprep.mubr.bf16.mxu0 0
        %413 = vmatmul.mubr.bf16.gmra.mrb[0].mxu0 %v342
        %v414 = vpop.f32.mrb[0].mxu0
        %v415 = vadd.f32 0.0, %v414
        %v416 = vpop.f32.mrb[0].mxu0
        %v417 = vpop.f32.mrb[0].mxu0
        %v418 = vadd.f32 0.0, %v417
        %v419 = vpop.f32.mrb[0].mxu0
        %420 = vmatprep.mubr.bf16.mxu0 0
        %421 = vmatmul.mubr.bf16.gmra.mrb[0].mxu0 %v345
        %v422 = vpop.f32.mrb[0].mxu0
        %v423 = vadd.f32 0.0, %v422
        %v424 = vpop.f32.mrb[0].mxu0
        %v425 = vpop.f32.mrb[0].mxu0
        %v426 = vadd.f32 0.0, %v425
        %v427 = vpop.f32.mrb[0].mxu0
        %428 = vmatprep.mubr.bf16.mxu0 0
        %429 = vmatmul.mubr.bf16.gmra.mrb[0].mxu0 %v348
        %v430 = vpop.f32.mrb[0].mxu0
        %v431 = vadd.f32 0.0, %v430
        %v432 = vpop.f32.mrb[0].mxu0
        %v433 = vpop.f32.mrb[0].mxu0
        %v434 = vadd.f32 0.0, %v433
        %v435 = vpop.f32.mrb[0].mxu0
        %436 = vmatprep.mubr.bf16.mxu0 0
        %437 = vmatmul.mubr.bf16.gmra.mrb[0].mxu0 %v351
        %v438 = vpop.f32.mrb[0].mxu0
        %v439 = vadd.f32 0.0, %v438
        %v440 = vpop.f32.mrb[0].mxu0
        %v441 = vpop.f32.mrb[0].mxu0
        %v442 = vadd.f32 0.0, %v441
        %v443 = vpop.f32.mrb[0].mxu0
        %444 = vmatprep.mubr.bf16.mxu0 0
        %445 = vmatmul.mubr.bf16.gmra.mrb[0].mxu0 %v354
        %v446 = vpop.f32.mrb[0].mxu0
        %v447 = vadd.f32 0.0, %v446
        %v448 = vpop.f32.mrb[0].mxu0
        %v449 = vpop.f32.mrb[0].mxu0
        %v450 = vadd.f32 0.0, %v449
        %v451 = vpop.f32.mrb[0].mxu0
        %452 = vdwg.mxu0
        %v453 = vpack.c.bf16 %v394, %v391
        %v454 = vpack.c.bf16 %v402, %v399
        %v455 = vpack.c.bf16 %v410, %v407
        %v456 = vpack.c.bf16 %v418, %v415
        %v457 = vpack.c.bf16 %v426, %v423
        %v458 = vpack.c.bf16 %v434, %v431
        %v459 = vpack.c.bf16 %v442, %v439
        %v460 = vpack.c.bf16 %v450, %v447
        %v461 = vlaneseq
        %v462 = vshrl.u32 %v461, 7
        %v463 = vsub.s32 0, %v462
        %v464 = vrot.slane %v262, %v463
        %v481 = vunpack.c.l.b16 %v226
        %v482 = vunpack.c.l.b16 %v227
        %v483 = vunpack.c.l.b16 %v228
        %v484 = vunpack.c.l.b16 %v229
        %v485 = vunpack.c.l.b16 %v230
        %v486 = vunpack.c.l.b16 %v231
        %v487 = vunpack.c.l.b16 %v232
        %v488 = vunpack.c.l.b16 %v233
        %v489 = vunpack.c.l.b16 %v234
        %v490 = vunpack.c.l.b16 %v235
        %v491 = vunpack.c.l.b16 %v236
        %v492 = vunpack.c.l.b16 %v237
        %v493 = vunpack.c.l.b16 %v238
        %v494 = vunpack.c.l.b16 %v239
        %v495 = vunpack.c.l.b16 %v240
        %v496 = vunpack.c.l.b16 %v241
        %v497 = vpack.c.b16 %v482, %v481
        %v498 = vpack.c.b16 %v484, %v483
        %v499 = vpack.c.b16 %v486, %v485
        %v500 = vpack.c.b16 %v488, %v487
        %v501 = vpack.c.b16 %v490, %v489
        %v502 = vpack.c.b16 %v492, %v491
        %v503 = vpack.c.b16 %v494, %v493
        %v504 = vpack.c.b16 %v496, %v495
        %513 = vmatprep.subr.bf16.mxu0 0
        %514 = vmatpush1.bf16.msra.mxu0 %v453
        %515 = vmatprep.subr.bf16.mxu0 0
        %516 = vmatpush1.bf16.msra.mxu0 %v454
        %517 = vmatprep.subr.bf16.mxu0 0
        %518 = vmatpush1.bf16.msra.mxu0 %v455
        %519 = vmatprep.subr.bf16.mxu0 0
        %520 = vmatpush1.bf16.msra.mxu0 %v456
        %521 = vmatprep.subr.bf16.mxu0 0
        %522 = vmatpush1.bf16.msra.mxu0 %v457
        %523 = vmatprep.subr.bf16.mxu0 0
        %524 = vmatpush1.bf16.msra.mxu0 %v458
        %525 = vmatprep.subr.bf16.mxu0 0
        %526 = vmatpush1.bf16.msra.mxu0 %v459
        %527 = vmatprep.subr.bf16.mxu0 0
        %528 = vmatpush1.bf16.msra.mxu0 %v460
        %529 = vmatprep.subr.bf16.mxu0 0
        %530 = vmatpush1.bf16.msra.mxu0 0
        %531 = vmatprep.subr.bf16.mxu0 0
        %532 = vmatpush1.bf16.msra.mxu0 0
        %533 = vmatprep.subr.bf16.mxu0 0
        %534 = vmatpush1.bf16.msra.mxu0 0
        %535 = vmatprep.subr.bf16.mxu0 0
        %536 = vmatpush1.bf16.msra.mxu0 0
        %537 = vmatprep.subr.bf16.mxu0 0
        %538 = vmatpush1.bf16.msra.mxu0 0
        %539 = vmatprep.subr.bf16.mxu0 0
        %540 = vmatpush1.bf16.msra.mxu0 0
        %541 = vmatprep.subr.bf16.mxu0 0
        %542 = vmatpush1.bf16.msra.mxu0 0
        %543 = vmatprep.subr.bf16.mxu0 0
        %544 = vmatpush1.bf16.msra.mxu0 0
        %545 = vmatprep.mubr.bf16.mxu0 0
        %546 = vmatmul.mubr.bf16.gmra.mrb[0].mxu0 %v497
        %v547 = vpop.f32.mrb[0].mxu0
        %v548 = vadd.f32 %v464, %v547
        %v549 = vpop.f32.mrb[0].mxu0
        %v550 = vpop.f32.mrb[0].mxu0
        %v551 = vadd.f32 %v464, %v550
        %v552 = vpop.f32.mrb[0].mxu0
        %553 = vmatprep.mubr.bf16.mxu0 0
        %554 = vmatmul.mubr.bf16.gmra.mrb[0].mxu0 %v498
        %v555 = vpop.f32.mrb[0].mxu0
        %v556 = vadd.f32 %v464, %v555
        %v557 = vpop.f32.mrb[0].mxu0
        %v558 = vpop.f32.mrb[0].mxu0
        %v559 = vadd.f32 %v464, %v558
        %v560 = vpop.f32.mrb[0].mxu0
        %561 = vmatprep.mubr.bf16.mxu0 0
        %562 = vmatmul.mubr.bf16.gmra.mrb[0].mxu0 %v499
        %v563 = vpop.f32.mrb[0].mxu0
        %v564 = vadd.f32 %v464, %v563
        %v565 = vpop.f32.mrb[0].mxu0
        %v566 = vpop.f32.mrb[0].mxu0
        %v567 = vadd.f32 %v464, %v566
        %v568 = vpop.f32.mrb[0].mxu0
        %569 = vmatprep.mubr.bf16.mxu0 0
        %570 = vmatmul.mubr.bf16.gmra.mrb[0].mxu0 %v500
        %v571 = vpop.f32.mrb[0].mxu0
        %v572 = vadd.f32 %v464, %v571
        %v573 = vpop.f32.mrb[0].mxu0
        %v574 = vpop.f32.mrb[0].mxu0
        %v575 = vadd.f32 %v464, %v574
        %v576 = vpop.f32.mrb[0].mxu0
        %577 = vmatprep.mubr.bf16.mxu0 0
        %578 = vmatmul.mubr.bf16.gmra.mrb[0].mxu0 %v501
        %v579 = vpop.f32.mrb[0].mxu0
        %v580 = vadd.f32 %v464, %v579
        %v581 = vpop.f32.mrb[0].mxu0
        %v582 = vpop.f32.mrb[0].mxu0
        %v583 = vadd.f32 %v464, %v582
        %v584 = vpop.f32.mrb[0].mxu0
        %585 = vmatprep.mubr.bf16.mxu0 0
        %586 = vmatmul.mubr.bf16.gmra.mrb[0].mxu0 %v502
        %v587 = vpop.f32.mrb[0].mxu0
        %v588 = vadd.f32 %v464, %v587
        %v589 = vpop.f32.mrb[0].mxu0
        %v590 = vpop.f32.mrb[0].mxu0
        %v591 = vadd.f32 %v464, %v590
        %v592 = vpop.f32.mrb[0].mxu0
        %593 = vmatprep.mubr.bf16.mxu0 0
        %594 = vmatmul.mubr.bf16.gmra.mrb[0].mxu0 %v503
        %v595 = vpop.f32.mrb[0].mxu0
        %v596 = vadd.f32 %v464, %v595
        %v597 = vpop.f32.mrb[0].mxu0
        %v598 = vpop.f32.mrb[0].mxu0
        %v599 = vadd.f32 %v464, %v598
        %v600 = vpop.f32.mrb[0].mxu0
        %601 = vmatprep.mubr.bf16.mxu0 0
        %602 = vmatmul.mubr.bf16.gmra.mrb[0].mxu0 %v504
        %v603 = vpop.f32.mrb[0].mxu0
        %v604 = vadd.f32 %v464, %v603
        %v605 = vpop.f32.mrb[0].mxu0
        %v606 = vpop.f32.mrb[0].mxu0
        %v607 = vadd.f32 %v464, %v606
        %v608 = vpop.f32.mrb[0].mxu0
        %609 = vdwg.mxu0
        %v610 = vmax.f32 %v548, 0.0
        %v611 = vmax.f32 %v551, 0.0
        %v612 = vmax.f32 %v556, 0.0
        %v613 = vmax.f32 %v559, 0.0
        %v614 = vmax.f32 %v564, 0.0
        %v615 = vmax.f32 %v567, 0.0
        %v616 = vmax.f32 %v572, 0.0
        %v617 = vmax.f32 %v575, 0.0
        %v618 = vmax.f32 %v580, 0.0
        %v619 = vmax.f32 %v583, 0.0
        %v620 = vmax.f32 %v588, 0.0
        %v621 = vmax.f32 %v591, 0.0
        %v622 = vmax.f32 %v596, 0.0
        %v623 = vmax.f32 %v599, 0.0
        %v624 = vmax.f32 %v604, 0.0
        %v625 = vmax.f32 %v607, 0.0
        %v626 = vpack.c.bf16 %v611, %v610
        %v627 = vpack.c.bf16 %v613, %v612
        %v628 = vpack.c.bf16 %v615, %v614
        %v629 = vpack.c.bf16 %v617, %v616
        %v630 = vpack.c.bf16 %v619, %v618
        %v631 = vpack.c.bf16 %v621, %v620
        %v632 = vpack.c.bf16 %v623, %v622
        %v633 = vpack.c.bf16 %v625, %v624
        %v650 = vunpack.c.l.b16 %v246
        %v651 = vunpack.c.l.b16 %v247
        %v652 = vunpack.c.l.b16 %v248
        %v653 = vunpack.c.l.b16 %v249
        %v654 = vunpack.c.l.b16 %v250
        %v655 = vunpack.c.l.b16 %v251
        %v656 = vunpack.c.l.b16 %v252
        %v657 = vunpack.c.l.b16 %v253
        %v658 = vunpack.c.l.b16 %v254
        %v659 = vunpack.c.l.b16 %v255
        %v660 = vunpack.c.l.b16 %v256
        %v661 = vunpack.c.l.b16 %v257
        %v662 = vunpack.c.l.b16 %v258
        %v663 = vunpack.c.l.b16 %v259
        %v664 = vunpack.c.l.b16 %v260
        %v665 = vunpack.c.l.b16 %v261
        %v666 = vpack.c.b16 %v651, %v650
        %v667 = vpack.c.b16 %v653, %v652
        %v668 = vpack.c.b16 %v655, %v654
        %v669 = vpack.c.b16 %v657, %v656
        %v670 = vpack.c.b16 %v659, %v658
        %v671 = vpack.c.b16 %v661, %v660
        %v672 = vpack.c.b16 %v663, %v662
        %v673 = vpack.c.b16 %v665, %v664
        %682 = vmatprep.subr.bf16.mxu0 0
        %683 = vmatpush1.bf16.msra.mxu0 %v666
        %684 = vmatprep.subr.bf16.mxu0 0
        %685 = vmatpush1.bf16.msra.mxu0 %v667
        %686 = vmatprep.subr.bf16.mxu0 0
        %687 = vmatpush1.bf16.msra.mxu0 %v668
        %688 = vmatprep.subr.bf16.mxu0 0
        %689 = vmatpush1.bf16.msra.mxu0 %v669
        %690 = vmatprep.subr.bf16.mxu0 0
        %691 = vmatpush1.bf16.msra.mxu0 %v670
        %692 = vmatprep.subr.bf16.mxu0 0
        %693 = vmatpush1.bf16.msra.mxu0 %v671
        %694 = vmatprep.subr.bf16.mxu0 0
        %695 = vmatpush1.bf16.msra.mxu0 %v672
        %696 = vmatprep.subr.bf16.mxu0 0
        %697 = vmatpush1.bf16.msra.mxu0 %v673
        %698 = vmatprep.subr.bf16.mxu0 0
        %699 = vmatpush1.bf16.msra.mxu0 0
        %700 = vmatprep.subr.bf16.mxu0 0
        %701 = vmatpush1.bf16.msra.mxu0 0
        %702 = vmatprep.subr.bf16.mxu0 0
        %703 = vmatpush1.bf16.msra.mxu0 0
        %704 = vmatprep.subr.bf16.mxu0 0
        %705 = vmatpush1.bf16.msra.mxu0 0
        %706 = vmatprep.subr.bf16.mxu0 0
        %707 = vmatpush1.bf16.msra.mxu0 0
        %708 = vmatprep.subr.bf16.mxu0 0
        %709 = vmatpush1.bf16.msra.mxu0 0
        %710 = vmatprep.subr.bf16.mxu0 0
        %711 = vmatpush1.bf16.msra.mxu0 0
        %712 = vmatprep.subr.bf16.mxu0 0
        %713 = vmatpush1.bf16.msra.mxu0 0
        %714 = vmatprep.mubr.bf16.mxu0 0
        %715 = vmatmul.mubr.bf16.gmra.mrb[0].mxu0 %v626
        %v716 = vpop.f32.mrb[0].mxu0
        %v717 = vadd.f32 0.0, %v716
        %v718 = vpop.f32.mrb[0].mxu0
        %v719 = vpop.f32.mrb[0].mxu0
        %v720 = vadd.f32 0.0, %v719
        %v721 = vpop.f32.mrb[0].mxu0
        %722 = vmatprep.mubr.bf16.mxu0 0
        %723 = vmatmul.mubr.bf16.gmra.mrb[0].mxu0 %v627
        %v724 = vpop.f32.mrb[0].mxu0
        %v725 = vadd.f32 0.0, %v724
        %v726 = vpop.f32.mrb[0].mxu0
        %v727 = vpop.f32.mrb[0].mxu0
        %v728 = vadd.f32 0.0, %v727
        %v729 = vpop.f32.mrb[0].mxu0
        %730 = vmatprep.mubr.bf16.mxu0 0
        %731 = vmatmul.mubr.bf16.gmra.mrb[0].mxu0 %v628
        %v732 = vpop.f32.mrb[0].mxu0
        %v733 = vadd.f32 0.0, %v732
        %v734 = vpop.f32.mrb[0].mxu0
        %v735 = vpop.f32.mrb[0].mxu0
        %v736 = vadd.f32 0.0, %v735
        %v737 = vpop.f32.mrb[0].mxu0
        %738 = vmatprep.mubr.bf16.mxu0 0
        %739 = vmatmul.mubr.bf16.gmra.mrb[0].mxu0 %v629
        %v740 = vpop.f32.mrb[0].mxu0
        %v741 = vadd.f32 0.0, %v740
        %v742 = vpop.f32.mrb[0].mxu0
        %v743 = vpop.f32.mrb[0].mxu0
        %v744 = vadd.f32 0.0, %v743
        %v745 = vpop.f32.mrb[0].mxu0
        %746 = vmatprep.mubr.bf16.mxu0 0
        %747 = vmatmul.mubr.bf16.gmra.mrb[0].mxu0 %v630
        %v748 = vpop.f32.mrb[0].mxu0
        %v749 = vadd.f32 0.0, %v748
        %v750 = vpop.f32.mrb[0].mxu0
        %v751 = vpop.f32.mrb[0].mxu0
        %v752 = vadd.f32 0.0, %v751
        %v753 = vpop.f32.mrb[0].mxu0
        %754 = vmatprep.mubr.bf16.mxu0 0
        %755 = vmatmul.mubr.bf16.gmra.mrb[0].mxu0 %v631
        %v756 = vpop.f32.mrb[0].mxu0
        %v757 = vadd.f32 0.0, %v756
        %v758 = vpop.f32.mrb[0].mxu0
        %v759 = vpop.f32.mrb[0].mxu0
        %v760 = vadd.f32 0.0, %v759
        %v761 = vpop.f32.mrb[0].mxu0
        %762 = vmatprep.mubr.bf16.mxu0 0
        %763 = vmatmul.mubr.bf16.gmra.mrb[0].mxu0 %v632
        %v764 = vpop.f32.mrb[0].mxu0
        %v765 = vadd.f32 0.0, %v764
        %v766 = vpop.f32.mrb[0].mxu0
        %v767 = vpop.f32.mrb[0].mxu0
        %v768 = vadd.f32 0.0, %v767
        %v769 = vpop.f32.mrb[0].mxu0
        %770 = vmatprep.mubr.bf16.mxu0 0
        %771 = vmatmul.mubr.bf16.gmra.mrb[0].mxu0 %v633
        %v772 = vpop.f32.mrb[0].mxu0
        %v773 = vadd.f32 0.0, %v772
        %v774 = vpop.f32.mrb[0].mxu0
        %v775 = vpop.f32.mrb[0].mxu0
        %v776 = vadd.f32 0.0, %v775
        %v777 = vpop.f32.mrb[0].mxu0
        %778 = vdwg.mxu0
        %v779 = vpack.c.bf16 %v720, %v717
        %v780 = vpack.c.bf16 %v728, %v725
        %v781 = vpack.c.bf16 %v736, %v733
        %v782 = vpack.c.bf16 %v744, %v741
        %v783 = vpack.c.bf16 %v752, %v749
        %v784 = vpack.c.bf16 %v760, %v757
        %v785 = vpack.c.bf16 %v768, %v765
        %v786 = vpack.c.bf16 %v776, %v773
        %v787 = vlaneseq
        %v788 = vshrl.u32 %v787, 7
        %v789 = vsub.s32 1, %v788
        %v790 = vrot.slane %v262, %v789
        %791 = vmatprep.subr.bf16.mxu0 0
        %792 = vmatpush1.bf16.msra.mxu0 %v779
        %793 = vmatprep.subr.bf16.mxu0 0
        %794 = vmatpush1.bf16.msra.mxu0 %v780
        %795 = vmatprep.subr.bf16.mxu0 0
        %796 = vmatpush1.bf16.msra.mxu0 %v781
        %797 = vmatprep.subr.bf16.mxu0 0
        %798 = vmatpush1.bf16.msra.mxu0 %v782
        %799 = vmatprep.subr.bf16.mxu0 0
        %800 = vmatpush1.bf16.msra.mxu0 %v783
        %801 = vmatprep.subr.bf16.mxu0 0
        %802 = vmatpush1.bf16.msra.mxu0 %v784
        %803 = vmatprep.subr.bf16.mxu0 0
        %804 = vmatpush1.bf16.msra.mxu0 %v785
        %805 = vmatprep.subr.bf16.mxu0 0
        %806 = vmatpush1.bf16.msra.mxu0 %v786
        %807 = vmatprep.subr.bf16.mxu0 0
        %808 = vmatpush1.bf16.msra.mxu0 0
        %809 = vmatprep.subr.bf16.mxu0 0
        %810 = vmatpush1.bf16.msra.mxu0 0
        %811 = vmatprep.subr.bf16.mxu0 0
        %812 = vmatpush1.bf16.msra.mxu0 0
        %813 = vmatprep.subr.bf16.mxu0 0
        %814 = vmatpush1.bf16.msra.mxu0 0
        %815 = vmatprep.subr.bf16.mxu0 0
        %816 = vmatpush1.bf16.msra.mxu0 0
        %817 = vmatprep.subr.bf16.mxu0 0
        %818 = vmatpush1.bf16.msra.mxu0 0
        %819 = vmatprep.subr.bf16.mxu0 0
        %820 = vmatpush1.bf16.msra.mxu0 0
        %821 = vmatprep.subr.bf16.mxu0 0
        %822 = vmatpush1.bf16.msra.mxu0 0
        %823 = vmatprep.mubr.bf16.mxu0 0
        %824 = vmatmul.mubr.bf16.gmra.mrb[0].mxu0 %v497
        %v825 = vpop.f32.mrb[0].mxu0
        %v826 = vadd.f32 %v790, %v825
        %v827 = vpop.f32.mrb[0].mxu0
        %v828 = vpop.f32.mrb[0].mxu0
        %v829 = vadd.f32 %v790, %v828
        %v830 = vpop.f32.mrb[0].mxu0
        %831 = vmatprep.mubr.bf16.mxu0 0
        %832 = vmatmul.mubr.bf16.gmra.mrb[0].mxu0 %v498
        %v833 = vpop.f32.mrb[0].mxu0
        %v834 = vadd.f32 %v790, %v833
        %v835 = vpop.f32.mrb[0].mxu0
        %v836 = vpop.f32.mrb[0].mxu0
        %v837 = vadd.f32 %v790, %v836
        %v838 = vpop.f32.mrb[0].mxu0
        %839 = vmatprep.mubr.bf16.mxu0 0
        %840 = vmatmul.mubr.bf16.gmra.mrb[0].mxu0 %v499
        %v841 = vpop.f32.mrb[0].mxu0
        %v842 = vadd.f32 %v790, %v841
        %v843 = vpop.f32.mrb[0].mxu0
        %v844 = vpop.f32.mrb[0].mxu0
        %v845 = vadd.f32 %v790, %v844
        %v846 = vpop.f32.mrb[0].mxu0
        %847 = vmatprep.mubr.bf16.mxu0 0
        %848 = vmatmul.mubr.bf16.gmra.mrb[0].mxu0 %v500
        %v849 = vpop.f32.mrb[0].mxu0
        %v850 = vadd.f32 %v790, %v849
        %v851 = vpop.f32.mrb[0].mxu0
        %v852 = vpop.f32.mrb[0].mxu0
        %v853 = vadd.f32 %v790, %v852
        %v854 = vpop.f32.mrb[0].mxu0
        %855 = vmatprep.mubr.bf16.mxu0 0
        %856 = vmatmul.mubr.bf16.gmra.mrb[0].mxu0 %v501
        %v857 = vpop.f32.mrb[0].mxu0
        %v858 = vadd.f32 %v790, %v857
        %v859 = vpop.f32.mrb[0].mxu0
        %v860 = vpop.f32.mrb[0].mxu0
        %v861 = vadd.f32 %v790, %v860
        %v862 = vpop.f32.mrb[0].mxu0
        %863 = vmatprep.mubr.bf16.mxu0 0
        %864 = vmatmul.mubr.bf16.gmra.mrb[0].mxu0 %v502
        %v865 = vpop.f32.mrb[0].mxu0
        %v866 = vadd.f32 %v790, %v865
        %v867 = vpop.f32.mrb[0].mxu0
        %v868 = vpop.f32.mrb[0].mxu0
        %v869 = vadd.f32 %v790, %v868
        %v870 = vpop.f32.mrb[0].mxu0
        %871 = vmatprep.mubr.bf16.mxu0 0
        %872 = vmatmul.mubr.bf16.gmra.mrb[0].mxu0 %v503
        %v873 = vpop.f32.mrb[0].mxu0
        %v874 = vadd.f32 %v790, %v873
        %v875 = vpop.f32.mrb[0].mxu0
        %v876 = vpop.f32.mrb[0].mxu0
        %v877 = vadd.f32 %v790, %v876
        %v878 = vpop.f32.mrb[0].mxu0
        %879 = vmatprep.mubr.bf16.mxu0 0
        %880 = vmatmul.mubr.bf16.gmra.mrb[0].mxu0 %v504
        %v881 = vpop.f32.mrb[0].mxu0
        %v882 = vadd.f32 %v790, %v881
        %v883 = vpop.f32.mrb[0].mxu0
        %v884 = vpop.f32.mrb[0].mxu0
        %v885 = vadd.f32 %v790, %v884
        %v886 = vpop.f32.mrb[0].mxu0
        %887 = vdwg.mxu0
        %888 = vxpose.xlu0.b32.start [1/16] %v826, 128
        %889 = vxpose.xlu0.b32.cont [2/16] %v829, 128
        %890 = vxpose.xlu0.b32.cont [3/16] %v834, 128
        %891 = vxpose.xlu0.b32.cont [4/16] %v837, 128
        %892 = vxpose.xlu0.b32.cont [5/16] %v842, 128
        %893 = vxpose.xlu0.b32.cont [6/16] %v845, 128
        %894 = vxpose.xlu0.b32.cont [7/16] %v850, 128
        %895 = vxpose.xlu0.b32.cont [8/16] %v853, 128
        %896 = vxpose.xlu0.b32.cont [9/16] %v858, 128
        %897 = vxpose.xlu0.b32.cont [10/16] %v861, 128
        %898 = vxpose.xlu0.b32.cont [11/16] %v866, 128
        %899 = vxpose.xlu0.b32.cont [12/16] %v869, 128
        %900 = vxpose.xlu0.b32.cont [13/16] %v874, 128
        %901 = vxpose.xlu0.b32.cont [14/16] %v877, 128
        %902 = vxpose.xlu0.b32.cont [15/16] %v882, 128
        %903 = vxpose.xlu0.b32.end [16/16] %v885, 128
        %v904 = vpop.trf.xlu0
        %v905 = vpop.trf.xlu0
        %v906 = vpop.trf.xlu0
        %v907 = vpop.trf.xlu0
        %v908 = vpop.trf.xlu0
        %v909 = vpop.trf.xlu0
        %v910 = vpop.trf.xlu0
        %v911 = vpop.trf.xlu0
        %v912 = vpop.trf.xlu0
        %v913 = vpop.trf.xlu0
        %v914 = vpop.trf.xlu0
        %v915 = vpop.trf.xlu0
        %v916 = vpop.trf.xlu0
        %v917 = vpop.trf.xlu0
        %v918 = vpop.trf.xlu0
        %v919 = vpop.trf.xlu0
        %920 = vst [vmem:[%s218] sm:$0x1] %v904
        %v921 = vld [vmem:[%s223 + $0x40] sm:$0xf]
        %v922 = vld [vmem:[%s223 + $0x44] sm:$0xf]
        %v923 = vld [vmem:[%s223 + $0x48] sm:$0xf]
        %v924 = vld [vmem:[%s223 + $0x4c] sm:$0xf]
        %v925 = vld [vmem:[%s223 + $0x50] sm:$0xf]
        %v926 = vld [vmem:[%s223 + $0x54] sm:$0xf]
        %v927 = vld [vmem:[%s223 + $0x58] sm:$0xf]
        %v928 = vld [vmem:[%s223 + $0x5c] sm:$0xf]
        %v929 = vld [vmem:[%s223 + $0x60] sm:$0xf]
        %v930 = vld [vmem:[%s223 + $0x64] sm:$0xf]
        %v931 = vld [vmem:[%s223 + $0x68] sm:$0xf]
        %v932 = vld [vmem:[%s223 + $0x6c] sm:$0xf]
        %v933 = vld [vmem:[%s223 + $0x70] sm:$0xf]
        %v934 = vld [vmem:[%s223 + $0x74] sm:$0xf]
        %v935 = vld [vmem:[%s223 + $0x78] sm:$0xf]
        %v936 = vld [vmem:[%s223 + $0x7c] sm:$0xf]
        %v953 = vunpack.c.l.b16 %v921
        %v954 = vunpack.c.l.b16 %v922
        %v955 = vunpack.c.l.b16 %v923
        %v956 = vunpack.c.l.b16 %v924
        %v957 = vunpack.c.l.b16 %v925
        %v958 = vunpack.c.l.b16 %v926
        %v959 = vunpack.c.l.b16 %v927
        %v960 = vunpack.c.l.b16 %v928
        %v961 = vunpack.c.l.b16 %v929
        %v962 = vunpack.c.l.b16 %v930
        %v963 = vunpack.c.l.b16 %v931
        %v964 = vunpack.c.l.b16 %v932
        %v965 = vunpack.c.l.b16 %v933
        %v966 = vunpack.c.l.b16 %v934
        %v967 = vunpack.c.l.b16 %v935
        %v968 = vunpack.c.l.b16 %v936
        %v969 = vpack.c.b16 %v954, %v953
        %v970 = vpack.c.b16 %v956, %v955
        %v971 = vpack.c.b16 %v958, %v957
        %v972 = vpack.c.b16 %v960, %v959
        %v973 = vpack.c.b16 %v962, %v961
        %v974 = vpack.c.b16 %v964, %v963
        %v975 = vpack.c.b16 %v966, %v965
        %v976 = vpack.c.b16 %v968, %v967
        %v978 = vsel %vm331, %v969, 0
        %v981 = vsel %vm331, %v970, 0
        %v984 = vsel %vm331, %v971, 0
        %v987 = vsel %vm331, %v972, 0
        %v990 = vsel %vm331, %v973, 0
        %v993 = vsel %vm331, %v974, 0
        %v996 = vsel %vm331, %v975, 0
        %v999 = vsel %vm331, %v976, 0
        %1001 = vmatprep.subr.bf16.mxu0 0
        %1002 = vmatpush1.bf16.msra.mxu0 %v327
        %1003 = vmatprep.subr.bf16.mxu0 0
        %1004 = vmatpush1.bf16.msra.mxu0 %v328
        %1005 = vmatprep.subr.bf16.mxu0 0
        %1006 = vmatpush1.bf16.msra.mxu0 0
        %1007 = vmatprep.subr.bf16.mxu0 0
        %1008 = vmatpush1.bf16.msra.mxu0 0
        %1009 = vmatprep.subr.bf16.mxu0 0
        %1010 = vmatpush1.bf16.msra.mxu0 0
        %1011 = vmatprep.subr.bf16.mxu0 0
        %1012 = vmatpush1.bf16.msra.mxu0 0
        %1013 = vmatprep.subr.bf16.mxu0 0
        %1014 = vmatpush1.bf16.msra.mxu0 0
        %1015 = vmatprep.subr.bf16.mxu0 0
        %1016 = vmatpush1.bf16.msra.mxu0 0
        %1017 = vmatprep.subr.bf16.mxu0 0
        %1018 = vmatpush1.bf16.msra.mxu0 0
        %1019 = vmatprep.subr.bf16.mxu0 0
        %1020 = vmatpush1.bf16.msra.mxu0 0
        %1021 = vmatprep.subr.bf16.mxu0 0
        %1022 = vmatpush1.bf16.msra.mxu0 0
        %1023 = vmatprep.subr.bf16.mxu0 0
        %1024 = vmatpush1.bf16.msra.mxu0 0
        %1025 = vmatprep.subr.bf16.mxu0 0
        %1026 = vmatpush1.bf16.msra.mxu0 0
        %1027 = vmatprep.subr.bf16.mxu0 0
        %1028 = vmatpush1.bf16.msra.mxu0 0
        %1029 = vmatprep.subr.bf16.mxu0 0
        %1030 = vmatpush1.bf16.msra.mxu0 0
        %1031 = vmatprep.subr.bf16.mxu0 0
        %1032 = vmatpush1.bf16.msra.mxu0 0
        %1033 = vmatprep.mubr.bf16.mxu0 0
        %1034 = vmatmul.mubr.bf16.gmra.mrb[0].mxu0 %v978
        %v1035 = vpop.f32.mrb[0].mxu0
        %v1036 = vadd.f32 0.0, %v1035
        %v1037 = vpop.f32.mrb[0].mxu0
        %v1038 = vpop.f32.mrb[0].mxu0
        %v1039 = vadd.f32 0.0, %v1038
        %v1040 = vpop.f32.mrb[0].mxu0
        %1041 = vmatprep.mubr.bf16.mxu0 0
        %1042 = vmatmul.mubr.bf16.gmra.mrb[0].mxu0 %v981
        %v1043 = vpop.f32.mrb[0].mxu0
        %v1044 = vadd.f32 0.0, %v1043
        %v1045 = vpop.f32.mrb[0].mxu0
        %v1046 = vpop.f32.mrb[0].mxu0
        %v1047 = vadd.f32 0.0, %v1046
        %v1048 = vpop.f32.mrb[0].mxu0
        %1049 = vmatprep.mubr.bf16.mxu0 0
        %1050 = vmatmul.mubr.bf16.gmra.mrb[0].mxu0 %v984
        %v1051 = vpop.f32.mrb[0].mxu0
        %v1052 = vadd.f32 0.0, %v1051
        %v1053 = vpop.f32.mrb[0].mxu0
        %v1054 = vpop.f32.mrb[0].mxu0
        %v1055 = vadd.f32 0.0, %v1054
        %v1056 = vpop.f32.mrb[0].mxu0
        %1057 = vmatprep.mubr.bf16.mxu0 0
        %1058 = vmatmul.mubr.bf16.gmra.mrb[0].mxu0 %v987
        %v1059 = vpop.f32.mrb[0].mxu0
        %v1060 = vadd.f32 0.0, %v1059
        %v1061 = vpop.f32.mrb[0].mxu0
        %v1062 = vpop.f32.mrb[0].mxu0
        %v1063 = vadd.f32 0.0, %v1062
        %v1064 = vpop.f32.mrb[0].mxu0
        %1065 = vmatprep.mubr.bf16.mxu0 0
        %1066 = vmatmul.mubr.bf16.gmra.mrb[0].mxu0 %v990
        %v1067 = vpop.f32.mrb[0].mxu0
        %v1068 = vadd.f32 0.0, %v1067
        %v1069 = vpop.f32.mrb[0].mxu0
        %v1070 = vpop.f32.mrb[0].mxu0
        %v1071 = vadd.f32 0.0, %v1070
        %v1072 = vpop.f32.mrb[0].mxu0
        %1073 = vmatprep.mubr.bf16.mxu0 0
        %1074 = vmatmul.mubr.bf16.gmra.mrb[0].mxu0 %v993
        %v1075 = vpop.f32.mrb[0].mxu0
        %v1076 = vadd.f32 0.0, %v1075
        %v1077 = vpop.f32.mrb[0].mxu0
        %v1078 = vpop.f32.mrb[0].mxu0
        %v1079 = vadd.f32 0.0, %v1078
        %v1080 = vpop.f32.mrb[0].mxu0
        %1081 = vmatprep.mubr.bf16.mxu0 0
        %1082 = vmatmul.mubr.bf16.gmra.mrb[0].mxu0 %v996
        %v1083 = vpop.f32.mrb[0].mxu0
        %v1084 = vadd.f32 0.0, %v1083
        %v1085 = vpop.f32.mrb[0].mxu0
        %v1086 = vpop.f32.mrb[0].mxu0
        %v1087 = vadd.f32 0.0, %v1086
        %v1088 = vpop.f32.mrb[0].mxu0
        %1089 = vmatprep.mubr.bf16.mxu0 0
        %1090 = vmatmul.mubr.bf16.gmra.mrb[0].mxu0 %v999
        %v1091 = vpop.f32.mrb[0].mxu0
        %v1092 = vadd.f32 0.0, %v1091
        %v1093 = vpop.f32.mrb[0].mxu0
        %v1094 = vpop.f32.mrb[0].mxu0
        %v1095 = vadd.f32 0.0, %v1094
        %v1096 = vpop.f32.mrb[0].mxu0
        %1097 = vdwg.mxu0
        %v1098 = vpack.c.bf16 %v1039, %v1036
        %v1099 = vpack.c.bf16 %v1047, %v1044
        %v1100 = vpack.c.bf16 %v1055, %v1052
        %v1101 = vpack.c.bf16 %v1063, %v1060
        %v1102 = vpack.c.bf16 %v1071, %v1068
        %v1103 = vpack.c.bf16 %v1079, %v1076
        %v1104 = vpack.c.bf16 %v1087, %v1084
        %v1105 = vpack.c.bf16 %v1095, %v1092
        %1106 = vmatprep.subr.bf16.mxu0 0
        %1107 = vmatpush1.bf16.msra.mxu0 %v1098
        %1108 = vmatprep.subr.bf16.mxu0 0
        %1109 = vmatpush1.bf16.msra.mxu0 %v1099
        %1110 = vmatprep.subr.bf16.mxu0 0
        %1111 = vmatpush1.bf16.msra.mxu0 %v1100
        %1112 = vmatprep.subr.bf16.mxu0 0
        %1113 = vmatpush1.bf16.msra.mxu0 %v1101
        %1114 = vmatprep.subr.bf16.mxu0 0
        %1115 = vmatpush1.bf16.msra.mxu0 %v1102
        %1116 = vmatprep.subr.bf16.mxu0 0
        %1117 = vmatpush1.bf16.msra.mxu0 %v1103
        %1118 = vmatprep.subr.bf16.mxu0 0
        %1119 = vmatpush1.bf16.msra.mxu0 %v1104
        %1120 = vmatprep.subr.bf16.mxu0 0
        %1121 = vmatpush1.bf16.msra.mxu0 %v1105
        %1122 = vmatprep.subr.bf16.mxu0 0
        %1123 = vmatpush1.bf16.msra.mxu0 0
        %1124 = vmatprep.subr.bf16.mxu0 0
        %1125 = vmatpush1.bf16.msra.mxu0 0
        %1126 = vmatprep.subr.bf16.mxu0 0
        %1127 = vmatpush1.bf16.msra.mxu0 0
        %1128 = vmatprep.subr.bf16.mxu0 0
        %1129 = vmatpush1.bf16.msra.mxu0 0
        %1130 = vmatprep.subr.bf16.mxu0 0
        %1131 = vmatpush1.bf16.msra.mxu0 0
        %1132 = vmatprep.subr.bf16.mxu0 0
        %1133 = vmatpush1.bf16.msra.mxu0 0
        %1134 = vmatprep.subr.bf16.mxu0 0
        %1135 = vmatpush1.bf16.msra.mxu0 0
        %1136 = vmatprep.subr.bf16.mxu0 0
        %1137 = vmatpush1.bf16.msra.mxu0 0
        %1138 = vmatprep.mubr.bf16.mxu0 0
        %1139 = vmatmul.mubr.bf16.gmra.mrb[0].mxu0 %v497
        %v1140 = vpop.f32.mrb[0].mxu0
        %v1141 = vadd.f32 %v464, %v1140
        %v1142 = vpop.f32.mrb[0].mxu0
        %v1143 = vpop.f32.mrb[0].mxu0
        %v1144 = vadd.f32 %v464, %v1143
        %v1145 = vpop.f32.mrb[0].mxu0
        %1146 = vmatprep.mubr.bf16.mxu0 0
        %1147 = vmatmul.mubr.bf16.gmra.mrb[0].mxu0 %v498
        %v1148 = vpop.f32.mrb[0].mxu0
        %v1149 = vadd.f32 %v464, %v1148
        %v1150 = vpop.f32.mrb[0].mxu0
        %v1151 = vpop.f32.mrb[0].mxu0
        %v1152 = vadd.f32 %v464, %v1151
        %v1153 = vpop.f32.mrb[0].mxu0
        %1154 = vmatprep.mubr.bf16.mxu0 0
        %1155 = vmatmul.mubr.bf16.gmra.mrb[0].mxu0 %v499
        %v1156 = vpop.f32.mrb[0].mxu0
        %v1157 = vadd.f32 %v464, %v1156
        %v1158 = vpop.f32.mrb[0].mxu0
        %v1159 = vpop.f32.mrb[0].mxu0
        %v1160 = vadd.f32 %v464, %v1159
        %v1161 = vpop.f32.mrb[0].mxu0
        %1162 = vmatprep.mubr.bf16.mxu0 0
        %1163 = vmatmul.mubr.bf16.gmra.mrb[0].mxu0 %v500
        %v1164 = vpop.f32.mrb[0].mxu0
        %v1165 = vadd.f32 %v464, %v1164
        %v1166 = vpop.f32.mrb[0].mxu0
        %v1167 = vpop.f32.mrb[0].mxu0
        %v1168 = vadd.f32 %v464, %v1167
        %v1169 = vpop.f32.mrb[0].mxu0
        %1170 = vmatprep.mubr.bf16.mxu0 0
        %1171 = vmatmul.mubr.bf16.gmra.mrb[0].mxu0 %v501
        %v1172 = vpop.f32.mrb[0].mxu0
        %v1173 = vadd.f32 %v464, %v1172
        %v1174 = vpop.f32.mrb[0].mxu0
        %v1175 = vpop.f32.mrb[0].mxu0
        %v1176 = vadd.f32 %v464, %v1175
        %v1177 = vpop.f32.mrb[0].mxu0
        %1178 = vmatprep.mubr.bf16.mxu0 0
        %1179 = vmatmul.mubr.bf16.gmra.mrb[0].mxu0 %v502
        %v1180 = vpop.f32.mrb[0].mxu0
        %v1181 = vadd.f32 %v464, %v1180
        %v1182 = vpop.f32.mrb[0].mxu0
        %v1183 = vpop.f32.mrb[0].mxu0
        %v1184 = vadd.f32 %v464, %v1183
        %v1185 = vpop.f32.mrb[0].mxu0
        %1186 = vmatprep.mubr.bf16.mxu0 0
        %1187 = vmatmul.mubr.bf16.gmra.mrb[0].mxu0 %v503
        %v1188 = vpop.f32.mrb[0].mxu0
        %v1189 = vadd.f32 %v464, %v1188
        %v1190 = vpop.f32.mrb[0].mxu0
        %v1191 = vpop.f32.mrb[0].mxu0
        %v1192 = vadd.f32 %v464, %v1191
        %v1193 = vpop.f32.mrb[0].mxu0
        %1194 = vmatprep.mubr.bf16.mxu0 0
        %1195 = vmatmul.mubr.bf16.gmra.mrb[0].mxu0 %v504
        %v1196 = vpop.f32.mrb[0].mxu0
        %v1197 = vadd.f32 %v464, %v1196
        %v1198 = vpop.f32.mrb[0].mxu0
        %v1199 = vpop.f32.mrb[0].mxu0
        %v1200 = vadd.f32 %v464, %v1199
        %v1201 = vpop.f32.mrb[0].mxu0
        %1202 = vdwg.mxu0
        %v1203 = vmax.f32 %v1141, 0.0
        %v1204 = vmax.f32 %v1144, 0.0
        %v1205 = vmax.f32 %v1149, 0.0
        %v1206 = vmax.f32 %v1152, 0.0
        %v1207 = vmax.f32 %v1157, 0.0
        %v1208 = vmax.f32 %v1160, 0.0
        %v1209 = vmax.f32 %v1165, 0.0
        %v1210 = vmax.f32 %v1168, 0.0
        %v1211 = vmax.f32 %v1173, 0.0
        %v1212 = vmax.f32 %v1176, 0.0
        %v1213 = vmax.f32 %v1181, 0.0
        %v1214 = vmax.f32 %v1184, 0.0
        %v1215 = vmax.f32 %v1189, 0.0
        %v1216 = vmax.f32 %v1192, 0.0
        %v1217 = vmax.f32 %v1197, 0.0
        %v1218 = vmax.f32 %v1200, 0.0
        %v1219 = vpack.c.bf16 %v1204, %v1203
        %v1220 = vpack.c.bf16 %v1206, %v1205
        %v1221 = vpack.c.bf16 %v1208, %v1207
        %v1222 = vpack.c.bf16 %v1210, %v1209
        %v1223 = vpack.c.bf16 %v1212, %v1211
        %v1224 = vpack.c.bf16 %v1214, %v1213
        %v1225 = vpack.c.bf16 %v1216, %v1215
        %v1226 = vpack.c.bf16 %v1218, %v1217
        %1227 = vmatprep.subr.bf16.mxu0 0
        %1228 = vmatpush1.bf16.msra.mxu0 %v666
        %1229 = vmatprep.subr.bf16.mxu0 0
        %1230 = vmatpush1.bf16.msra.mxu0 %v667
        %1231 = vmatprep.subr.bf16.mxu0 0
        %1232 = vmatpush1.bf16.msra.mxu0 %v668
        %1233 = vmatprep.subr.bf16.mxu0 0
        %1234 = vmatpush1.bf16.msra.mxu0 %v669
        %1235 = vmatprep.subr.bf16.mxu0 0
        %1236 = vmatpush1.bf16.msra.mxu0 %v670
        %1237 = vmatprep.subr.bf16.mxu0 0
        %1238 = vmatpush1.bf16.msra.mxu0 %v671
        %1239 = vmatprep.subr.bf16.mxu0 0
        %1240 = vmatpush1.bf16.msra.mxu0 %v672
        %1241 = vmatprep.subr.bf16.mxu0 0
        %1242 = vmatpush1.bf16.msra.mxu0 %v673
        %1243 = vmatprep.subr.bf16.mxu0 0
        %1244 = vmatpush1.bf16.msra.mxu0 0
        %1245 = vmatprep.subr.bf16.mxu0 0
        %1246 = vmatpush1.bf16.msra.mxu0 0
        %1247 = vmatprep.subr.bf16.mxu0 0
        %1248 = vmatpush1.bf16.msra.mxu0 0
        %1249 = vmatprep.subr.bf16.mxu0 0
        %1250 = vmatpush1.bf16.msra.mxu0 0
        %1251 = vmatprep.subr.bf16.mxu0 0
        %1252 = vmatpush1.bf16.msra.mxu0 0
        %1253 = vmatprep.subr.bf16.mxu0 0
        %1254 = vmatpush1.bf16.msra.mxu0 0
        %1255 = vmatprep.subr.bf16.mxu0 0
        %1256 = vmatpush1.bf16.msra.mxu0 0
        %1257 = vmatprep.subr.bf16.mxu0 0
        %1258 = vmatpush1.bf16.msra.mxu0 0
        %1259 = vmatprep.mubr.bf16.mxu0 0
        %1260 = vmatmul.mubr.bf16.gmra.mrb[0].mxu0 %v1219
        %v1261 = vpop.f32.mrb[0].mxu0
        %v1262 = vadd.f32 0.0, %v1261
        %v1263 = vpop.f32.mrb[0].mxu0
        %v1264 = vpop.f32.mrb[0].mxu0
        %v1265 = vadd.f32 0.0, %v1264
        %v1266 = vpop.f32.mrb[0].mxu0
        %1267 = vmatprep.mubr.bf16.mxu0 0
        %1268 = vmatmul.mubr.bf16.gmra.mrb[0].mxu0 %v1220
        %v1269 = vpop.f32.mrb[0].mxu0
        %v1270 = vadd.f32 0.0, %v1269
        %v1271 = vpop.f32.mrb[0].mxu0
        %v1272 = vpop.f32.mrb[0].mxu0
        %v1273 = vadd.f32 0.0, %v1272
        %v1274 = vpop.f32.mrb[0].mxu0
        %1275 = vmatprep.mubr.bf16.mxu0 0
        %1276 = vmatmul.mubr.bf16.gmra.mrb[0].mxu0 %v1221
        %v1277 = vpop.f32.mrb[0].mxu0
        %v1278 = vadd.f32 0.0, %v1277
        %v1279 = vpop.f32.mrb[0].mxu0
        %v1280 = vpop.f32.mrb[0].mxu0
        %v1281 = vadd.f32 0.0, %v1280
        %v1282 = vpop.f32.mrb[0].mxu0
        %1283 = vmatprep.mubr.bf16.mxu0 0
        %1284 = vmatmul.mubr.bf16.gmra.mrb[0].mxu0 %v1222
        %v1285 = vpop.f32.mrb[0].mxu0
        %v1286 = vadd.f32 0.0, %v1285
        %v1287 = vpop.f32.mrb[0].mxu0
        %v1288 = vpop.f32.mrb[0].mxu0
        %v1289 = vadd.f32 0.0, %v1288
        %v1290 = vpop.f32.mrb[0].mxu0
        %1291 = vmatprep.mubr.bf16.mxu0 0
        %1292 = vmatmul.mubr.bf16.gmra.mrb[0].mxu0 %v1223
        %v1293 = vpop.f32.mrb[0].mxu0
        %v1294 = vadd.f32 0.0, %v1293
        %v1295 = vpop.f32.mrb[0].mxu0
        %v1296 = vpop.f32.mrb[0].mxu0
        %v1297 = vadd.f32 0.0, %v1296
        %v1298 = vpop.f32.mrb[0].mxu0
        %1299 = vmatprep.mubr.bf16.mxu0 0
        %1300 = vmatmul.mubr.bf16.gmra.mrb[0].mxu0 %v1224
        %v1301 = vpop.f32.mrb[0].mxu0
        %v1302 = vadd.f32 0.0, %v1301
        %v1303 = vpop.f32.mrb[0].mxu0
        %v1304 = vpop.f32.mrb[0].mxu0
        %v1305 = vadd.f32 0.0, %v1304
        %v1306 = vpop.f32.mrb[0].mxu0
        %1307 = vmatprep.mubr.bf16.mxu0 0
        %1308 = vmatmul.mubr.bf16.gmra.mrb[0].mxu0 %v1225
        %v1309 = vpop.f32.mrb[0].mxu0
        %v1310 = vadd.f32 0.0, %v1309
        %v1311 = vpop.f32.mrb[0].mxu0
        %v1312 = vpop.f32.mrb[0].mxu0
        %v1313 = vadd.f32 0.0, %v1312
        %v1314 = vpop.f32.mrb[0].mxu0
        %1315 = vmatprep.mubr.bf16.mxu0 0
        %1316 = vmatmul.mubr.bf16.gmra.mrb[0].mxu0 %v1226
        %v1317 = vpop.f32.mrb[0].mxu0
        %v1318 = vadd.f32 0.0, %v1317
        %v1319 = vpop.f32.mrb[0].mxu0
        %v1320 = vpop.f32.mrb[0].mxu0
        %v1321 = vadd.f32 0.0, %v1320
        %v1322 = vpop.f32.mrb[0].mxu0
        %1323 = vdwg.mxu0
        %v1324 = vpack.c.bf16 %v1265, %v1262
        %v1325 = vpack.c.bf16 %v1273, %v1270
        %v1326 = vpack.c.bf16 %v1281, %v1278
        %v1327 = vpack.c.bf16 %v1289, %v1286
        %v1328 = vpack.c.bf16 %v1297, %v1294
        %v1329 = vpack.c.bf16 %v1305, %v1302
        %v1330 = vpack.c.bf16 %v1313, %v1310
        %v1331 = vpack.c.bf16 %v1321, %v1318
        %1332 = vmatprep.subr.bf16.mxu0 0
        %1333 = vmatpush1.bf16.msra.mxu0 %v1324
        %1334 = vmatprep.subr.bf16.mxu0 0
        %1335 = vmatpush1.bf16.msra.mxu0 %v1325
        %1336 = vmatprep.subr.bf16.mxu0 0
        %1337 = vmatpush1.bf16.msra.mxu0 %v1326
        %1338 = vmatprep.subr.bf16.mxu0 0
        %1339 = vmatpush1.bf16.msra.mxu0 %v1327
        %1340 = vmatprep.subr.bf16.mxu0 0
        %1341 = vmatpush1.bf16.msra.mxu0 %v1328
        %1342 = vmatprep.subr.bf16.mxu0 0
        %1343 = vmatpush1.bf16.msra.mxu0 %v1329
        %1344 = vmatprep.subr.bf16.mxu0 0
        %1345 = vmatpush1.bf16.msra.mxu0 %v1330
        %1346 = vmatprep.subr.bf16.mxu0 0
        %1347 = vmatpush1.bf16.msra.mxu0 %v1331
        %1348 = vmatprep.subr.bf16.mxu0 0
        %1349 = vmatpush1.bf16.msra.mxu0 0
        %1350 = vmatprep.subr.bf16.mxu0 0
        %1351 = vmatpush1.bf16.msra.mxu0 0
        %1352 = vmatprep.subr.bf16.mxu0 0
        %1353 = vmatpush1.bf16.msra.mxu0 0
        %1354 = vmatprep.subr.bf16.mxu0 0
        %1355 = vmatpush1.bf16.msra.mxu0 0
        %1356 = vmatprep.subr.bf16.mxu0 0
        %1357 = vmatpush1.bf16.msra.mxu0 0
        %1358 = vmatprep.subr.bf16.mxu0 0
        %1359 = vmatpush1.bf16.msra.mxu0 0
        %1360 = vmatprep.subr.bf16.mxu0 0
        %1361 = vmatpush1.bf16.msra.mxu0 0
        %1362 = vmatprep.subr.bf16.mxu0 0
        %1363 = vmatpush1.bf16.msra.mxu0 0
        %1364 = vmatprep.mubr.bf16.mxu0 0
        %1365 = vmatmul.mubr.bf16.gmra.mrb[0].mxu0 %v497
        %v1366 = vpop.f32.mrb[0].mxu0
        %v1367 = vadd.f32 %v790, %v1366
        %v1368 = vpop.f32.mrb[0].mxu0
        %v1369 = vpop.f32.mrb[0].mxu0
        %v1370 = vadd.f32 %v790, %v1369
        %v1371 = vpop.f32.mrb[0].mxu0
        %1372 = vmatprep.mubr.bf16.mxu0 0
        %1373 = vmatmul.mubr.bf16.gmra.mrb[0].mxu0 %v498
        %v1374 = vpop.f32.mrb[0].mxu0
        %v1375 = vadd.f32 %v790, %v1374
        %v1376 = vpop.f32.mrb[0].mxu0
        %v1377 = vpop.f32.mrb[0].mxu0
        %v1378 = vadd.f32 %v790, %v1377
        %v1379 = vpop.f32.mrb[0].mxu0
        %1380 = vmatprep.mubr.bf16.mxu0 0
        %1381 = vmatmul.mubr.bf16.gmra.mrb[0].mxu0 %v499
        %v1382 = vpop.f32.mrb[0].mxu0
        %v1383 = vadd.f32 %v790, %v1382
        %v1384 = vpop.f32.mrb[0].mxu0
        %v1385 = vpop.f32.mrb[0].mxu0
        %v1386 = vadd.f32 %v790, %v1385
        %v1387 = vpop.f32.mrb[0].mxu0
        %1388 = vmatprep.mubr.bf16.mxu0 0
        %1389 = vmatmul.mubr.bf16.gmra.mrb[0].mxu0 %v500
        %v1390 = vpop.f32.mrb[0].mxu0
        %v1391 = vadd.f32 %v790, %v1390
        %v1392 = vpop.f32.mrb[0].mxu0
        %v1393 = vpop.f32.mrb[0].mxu0
        %v1394 = vadd.f32 %v790, %v1393
        %v1395 = vpop.f32.mrb[0].mxu0
        %1396 = vmatprep.mubr.bf16.mxu0 0
        %1397 = vmatmul.mubr.bf16.gmra.mrb[0].mxu0 %v501
        %v1398 = vpop.f32.mrb[0].mxu0
        %v1399 = vadd.f32 %v790, %v1398
        %v1400 = vpop.f32.mrb[0].mxu0
        %v1401 = vpop.f32.mrb[0].mxu0
        %v1402 = vadd.f32 %v790, %v1401
        %v1403 = vpop.f32.mrb[0].mxu0
        %1404 = vmatprep.mubr.bf16.mxu0 0
        %1405 = vmatmul.mubr.bf16.gmra.mrb[0].mxu0 %v502
        %v1406 = vpop.f32.mrb[0].mxu0
        %v1407 = vadd.f32 %v790, %v1406
        %v1408 = vpop.f32.mrb[0].mxu0
        %v1409 = vpop.f32.mrb[0].mxu0
        %v1410 = vadd.f32 %v790, %v1409
        %v1411 = vpop.f32.mrb[0].mxu0
        %1412 = vmatprep.mubr.bf16.mxu0 0
        %1413 = vmatmul.mubr.bf16.gmra.mrb[0].mxu0 %v503
        %v1414 = vpop.f32.mrb[0].mxu0
        %v1415 = vadd.f32 %v790, %v1414
        %v1416 = vpop.f32.mrb[0].mxu0
        %v1417 = vpop.f32.mrb[0].mxu0
        %v1418 = vadd.f32 %v790, %v1417
        %v1419 = vpop.f32.mrb[0].mxu0
        %1420 = vmatprep.mubr.bf16.mxu0 0
        %1421 = vmatmul.mubr.bf16.gmra.mrb[0].mxu0 %v504
        %v1422 = vpop.f32.mrb[0].mxu0
        %v1423 = vadd.f32 %v790, %v1422
        %v1424 = vpop.f32.mrb[0].mxu0
        %v1425 = vpop.f32.mrb[0].mxu0
        %v1426 = vadd.f32 %v790, %v1425
        %v1427 = vpop.f32.mrb[0].mxu0
        %1428 = vdwg.mxu0
        %1429 = vxpose.xlu0.b32.start [1/16] %v1367, 128
        %1430 = vxpose.xlu0.b32.cont [2/16] %v1370, 128
        %1431 = vxpose.xlu0.b32.cont [3/16] %v1375, 128
        %1432 = vxpose.xlu0.b32.cont [4/16] %v1378, 128
        %1433 = vxpose.xlu0.b32.cont [5/16] %v1383, 128
        %1434 = vxpose.xlu0.b32.cont [6/16] %v1386, 128
        %1435 = vxpose.xlu0.b32.cont [7/16] %v1391, 128
        %1436 = vxpose.xlu0.b32.cont [8/16] %v1394, 128
        %1437 = vxpose.xlu0.b32.cont [9/16] %v1399, 128
        %1438 = vxpose.xlu0.b32.cont [10/16] %v1402, 128
        %1439 = vxpose.xlu0.b32.cont [11/16] %v1407, 128
        %1440 = vxpose.xlu0.b32.cont [12/16] %v1410, 128
        %1441 = vxpose.xlu0.b32.cont [13/16] %v1415, 128
        %1442 = vxpose.xlu0.b32.cont [14/16] %v1418, 128
        %1443 = vxpose.xlu0.b32.cont [15/16] %v1423, 128
        %1444 = vxpose.xlu0.b32.end [16/16] %v1426, 128
        %v1445 = vpop.trf.xlu0
        %v1446 = vpop.trf.xlu0
        %v1447 = vpop.trf.xlu0
        %v1448 = vpop.trf.xlu0
        %v1449 = vpop.trf.xlu0
        %v1450 = vpop.trf.xlu0
        %v1451 = vpop.trf.xlu0
        %v1452 = vpop.trf.xlu0
        %v1453 = vpop.trf.xlu0
        %v1454 = vpop.trf.xlu0
        %v1455 = vpop.trf.xlu0
        %v1456 = vpop.trf.xlu0
        %v1457 = vpop.trf.xlu0
        %v1458 = vpop.trf.xlu0
        %v1459 = vpop.trf.xlu0
        %v1460 = vpop.trf.xlu0
        %1461 = vst [vmem:[%s218 + $0x1] sm:$0x1] %v1445
        %v1462 = vld [vmem:[%s223 + $0x80] sm:$0xf]
        %v1463 = vld [vmem:[%s223 + $0x84] sm:$0xf]
        %v1464 = vld [vmem:[%s223 + $0x88] sm:$0xf]
        %v1465 = vld [vmem:[%s223 + $0x8c] sm:$0xf]
        %v1466 = vld [vmem:[%s223 + $0x90] sm:$0xf]
        %v1467 = vld [vmem:[%s223 + $0x94] sm:$0xf]
        %v1468 = vld [vmem:[%s223 + $0x98] sm:$0xf]
        %v1469 = vld [vmem:[%s223 + $0x9c] sm:$0xf]
        %v1470 = vld [vmem:[%s223 + $0xa0] sm:$0xf]
        %v1471 = vld [vmem:[%s223 + $0xa4] sm:$0xf]
        %v1472 = vld [vmem:[%s223 + $0xa8] sm:$0xf]
        %v1473 = vld [vmem:[%s223 + $0xac] sm:$0xf]
        %v1474 = vld [vmem:[%s223 + $0xb0] sm:$0xf]
        %v1475 = vld [vmem:[%s223 + $0xb4] sm:$0xf]
        %v1476 = vld [vmem:[%s223 + $0xb8] sm:$0xf]
        %v1477 = vld [vmem:[%s223 + $0xbc] sm:$0xf]
        %v1494 = vunpack.c.l.b16 %v1462
        %v1495 = vunpack.c.l.b16 %v1463
        %v1496 = vunpack.c.l.b16 %v1464
        %v1497 = vunpack.c.l.b16 %v1465
        %v1498 = vunpack.c.l.b16 %v1466
        %v1499 = vunpack.c.l.b16 %v1467
        %v1500 = vunpack.c.l.b16 %v1468
        %v1501 = vunpack.c.l.b16 %v1469
        %v1502 = vunpack.c.l.b16 %v1470
        %v1503 = vunpack.c.l.b16 %v1471
        %v1504 = vunpack.c.l.b16 %v1472
        %v1505 = vunpack.c.l.b16 %v1473
        %v1506 = vunpack.c.l.b16 %v1474
        %v1507 = vunpack.c.l.b16 %v1475
        %v1508 = vunpack.c.l.b16 %v1476
        %v1509 = vunpack.c.l.b16 %v1477
        %v1510 = vpack.c.b16 %v1495, %v1494
        %v1511 = vpack.c.b16 %v1497, %v1496
        %v1512 = vpack.c.b16 %v1499, %v1498
        %v1513 = vpack.c.b16 %v1501, %v1500
        %v1514 = vpack.c.b16 %v1503, %v1502
        %v1515 = vpack.c.b16 %v1505, %v1504
        %v1516 = vpack.c.b16 %v1507, %v1506
        %v1517 = vpack.c.b16 %v1509, %v1508
        %v1519 = vsel %vm331, %v1510, 0
        %v1522 = vsel %vm331, %v1511, 0
        %v1525 = vsel %vm331, %v1512, 0
        %v1528 = vsel %vm331, %v1513, 0
        %v1531 = vsel %vm331, %v1514, 0
        %v1534 = vsel %vm331, %v1515, 0
        %v1537 = vsel %vm331, %v1516, 0
        %v1540 = vsel %vm331, %v1517, 0
        %1542 = vmatprep.subr.bf16.mxu0 0
        %1543 = vmatpush1.bf16.msra.mxu0 %v327
        %1544 = vmatprep.subr.bf16.mxu0 0
        %1545 = vmatpush1.bf16.msra.mxu0 %v328
        %1546 = vmatprep.subr.bf16.mxu0 0
        %1547 = vmatpush1.bf16.msra.mxu0 0
        %1548 = vmatprep.subr.bf16.mxu0 0
        %1549 = vmatpush1.bf16.msra.mxu0 0
        %1550 = vmatprep.subr.bf16.mxu0 0
        %1551 = vmatpush1.bf16.msra.mxu0 0
        %1552 = vmatprep.subr.bf16.mxu0 0
        %1553 = vmatpush1.bf16.msra.mxu0 0
        %1554 = vmatprep.subr.bf16.mxu0 0
        %1555 = vmatpush1.bf16.msra.mxu0 0
        %1556 = vmatprep.subr.bf16.mxu0 0
        %1557 = vmatpush1.bf16.msra.mxu0 0
        %1558 = vmatprep.subr.bf16.mxu0 0
        %1559 = vmatpush1.bf16.msra.mxu0 0
        %1560 = vmatprep.subr.bf16.mxu0 0
        %1561 = vmatpush1.bf16.msra.mxu0 0
        %1562 = vmatprep.subr.bf16.mxu0 0
        %1563 = vmatpush1.bf16.msra.mxu0 0
        %1564 = vmatprep.subr.bf16.mxu0 0
        %1565 = vmatpush1.bf16.msra.mxu0 0
        %1566 = vmatprep.subr.bf16.mxu0 0
        %1567 = vmatpush1.bf16.msra.mxu0 0
        %1568 = vmatprep.subr.bf16.mxu0 0
        %1569 = vmatpush1.bf16.msra.mxu0 0
        %1570 = vmatprep.subr.bf16.mxu0 0
        %1571 = vmatpush1.bf16.msra.mxu0 0
        %1572 = vmatprep.subr.bf16.mxu0 0
        %1573 = vmatpush1.bf16.msra.mxu0 0
        %1574 = vmatprep.mubr.bf16.mxu0 0
        %1575 = vmatmul.mubr.bf16.gmra.mrb[0].mxu0 %v1519
        %v1576 = vpop.f32.mrb[0].mxu0
        %v1577 = vadd.f32 0.0, %v1576
        %v1578 = vpop.f32.mrb[0].mxu0
        %v1579 = vpop.f32.mrb[0].mxu0
        %v1580 = vadd.f32 0.0, %v1579
        %v1581 = vpop.f32.mrb[0].mxu0
        %1582 = vmatprep.mubr.bf16.mxu0 0
        %1583 = vmatmul.mubr.bf16.gmra.mrb[0].mxu0 %v1522
        %v1584 = vpop.f32.mrb[0].mxu0
        %v1585 = vadd.f32 0.0, %v1584
        %v1586 = vpop.f32.mrb[0].mxu0
        %v1587 = vpop.f32.mrb[0].mxu0
        %v1588 = vadd.f32 0.0, %v1587
        %v1589 = vpop.f32.mrb[0].mxu0
        %1590 = vmatprep.mubr.bf16.mxu0 0
        %1591 = vmatmul.mubr.bf16.gmra.mrb[0].mxu0 %v1525
        %v1592 = vpop.f32.mrb[0].mxu0
        %v1593 = vadd.f32 0.0, %v1592
        %v1594 = vpop.f32.mrb[0].mxu0
        %v1595 = vpop.f32.mrb[0].mxu0
        %v1596 = vadd.f32 0.0, %v1595
        %v1597 = vpop.f32.mrb[0].mxu0
        %1598 = vmatprep.mubr.bf16.mxu0 0
        %1599 = vmatmul.mubr.bf16.gmra.mrb[0].mxu0 %v1528
        %v1600 = vpop.f32.mrb[0].mxu0
        %v1601 = vadd.f32 0.0, %v1600
        %v1602 = vpop.f32.mrb[0].mxu0
        %v1603 = vpop.f32.mrb[0].mxu0
        %v1604 = vadd.f32 0.0, %v1603
        %v1605 = vpop.f32.mrb[0].mxu0
        %1606 = vmatprep.mubr.bf16.mxu0 0
        %1607 = vmatmul.mubr.bf16.gmra.mrb[0].mxu0 %v1531
        %v1608 = vpop.f32.mrb[0].mxu0
        %v1609 = vadd.f32 0.0, %v1608
        %v1610 = vpop.f32.mrb[0].mxu0
        %v1611 = vpop.f32.mrb[0].mxu0
        %v1612 = vadd.f32 0.0, %v1611
        %v1613 = vpop.f32.mrb[0].mxu0
        %1614 = vmatprep.mubr.bf16.mxu0 0
        %1615 = vmatmul.mubr.bf16.gmra.mrb[0].mxu0 %v1534
        %v1616 = vpop.f32.mrb[0].mxu0
        %v1617 = vadd.f32 0.0, %v1616
        %v1618 = vpop.f32.mrb[0].mxu0
        %v1619 = vpop.f32.mrb[0].mxu0
        %v1620 = vadd.f32 0.0, %v1619
        %v1621 = vpop.f32.mrb[0].mxu0
        %1622 = vmatprep.mubr.bf16.mxu0 0
        %1623 = vmatmul.mubr.bf16.gmra.mrb[0].mxu0 %v1537
        %v1624 = vpop.f32.mrb[0].mxu0
        %v1625 = vadd.f32 0.0, %v1624
        %v1626 = vpop.f32.mrb[0].mxu0
        %v1627 = vpop.f32.mrb[0].mxu0
        %v1628 = vadd.f32 0.0, %v1627
        %v1629 = vpop.f32.mrb[0].mxu0
        %1630 = vmatprep.mubr.bf16.mxu0 0
        %1631 = vmatmul.mubr.bf16.gmra.mrb[0].mxu0 %v1540
        %v1632 = vpop.f32.mrb[0].mxu0
        %v1633 = vadd.f32 0.0, %v1632
        %v1634 = vpop.f32.mrb[0].mxu0
        %v1635 = vpop.f32.mrb[0].mxu0
        %v1636 = vadd.f32 0.0, %v1635
        %v1637 = vpop.f32.mrb[0].mxu0
        %1638 = vdwg.mxu0
        %v1639 = vpack.c.bf16 %v1580, %v1577
        %v1640 = vpack.c.bf16 %v1588, %v1585
        %v1641 = vpack.c.bf16 %v1596, %v1593
        %v1642 = vpack.c.bf16 %v1604, %v1601
        %v1643 = vpack.c.bf16 %v1612, %v1609
        %v1644 = vpack.c.bf16 %v1620, %v1617
        %v1645 = vpack.c.bf16 %v1628, %v1625
        %v1646 = vpack.c.bf16 %v1636, %v1633
        %1647 = vmatprep.subr.bf16.mxu0 0
        %1648 = vmatpush1.bf16.msra.mxu0 %v1639
        %1649 = vmatprep.subr.bf16.mxu0 0
        %1650 = vmatpush1.bf16.msra.mxu0 %v1640
        %1651 = vmatprep.subr.bf16.mxu0 0
        %1652 = vmatpush1.bf16.msra.mxu0 %v1641
        %1653 = vmatprep.subr.bf16.mxu0 0
        %1654 = vmatpush1.bf16.msra.mxu0 %v1642
        %1655 = vmatprep.subr.bf16.mxu0 0
        %1656 = vmatpush1.bf16.msra.mxu0 %v1643
        %1657 = vmatprep.subr.bf16.mxu0 0
        %1658 = vmatpush1.bf16.msra.mxu0 %v1644
        %1659 = vmatprep.subr.bf16.mxu0 0
        %1660 = vmatpush1.bf16.msra.mxu0 %v1645
        %1661 = vmatprep.subr.bf16.mxu0 0
        %1662 = vmatpush1.bf16.msra.mxu0 %v1646
        %1663 = vmatprep.subr.bf16.mxu0 0
        %1664 = vmatpush1.bf16.msra.mxu0 0
        %1665 = vmatprep.subr.bf16.mxu0 0
        %1666 = vmatpush1.bf16.msra.mxu0 0
        %1667 = vmatprep.subr.bf16.mxu0 0
        %1668 = vmatpush1.bf16.msra.mxu0 0
        %1669 = vmatprep.subr.bf16.mxu0 0
        %1670 = vmatpush1.bf16.msra.mxu0 0
        %1671 = vmatprep.subr.bf16.mxu0 0
        %1672 = vmatpush1.bf16.msra.mxu0 0
        %1673 = vmatprep.subr.bf16.mxu0 0
        %1674 = vmatpush1.bf16.msra.mxu0 0
        %1675 = vmatprep.subr.bf16.mxu0 0
        %1676 = vmatpush1.bf16.msra.mxu0 0
        %1677 = vmatprep.subr.bf16.mxu0 0
        %1678 = vmatpush1.bf16.msra.mxu0 0
        %1679 = vmatprep.mubr.bf16.mxu0 0
        %1680 = vmatmul.mubr.bf16.gmra.mrb[0].mxu0 %v497
        %v1681 = vpop.f32.mrb[0].mxu0
        %v1682 = vadd.f32 %v464, %v1681
        %v1683 = vpop.f32.mrb[0].mxu0
        %v1684 = vpop.f32.mrb[0].mxu0
        %v1685 = vadd.f32 %v464, %v1684
        %v1686 = vpop.f32.mrb[0].mxu0
        %1687 = vmatprep.mubr.bf16.mxu0 0
        %1688 = vmatmul.mubr.bf16.gmra.mrb[0].mxu0 %v498
        %v1689 = vpop.f32.mrb[0].mxu0
        %v1690 = vadd.f32 %v464, %v1689
        %v1691 = vpop.f32.mrb[0].mxu0
        %v1692 = vpop.f32.mrb[0].mxu0
        %v1693 = vadd.f32 %v464, %v1692
        %v1694 = vpop.f32.mrb[0].mxu0
        %1695 = vmatprep.mubr.bf16.mxu0 0
        %1696 = vmatmul.mubr.bf16.gmra.mrb[0].mxu0 %v499
        %v1697 = vpop.f32.mrb[0].mxu0
        %v1698 = vadd.f32 %v464, %v1697
        %v1699 = vpop.f32.mrb[0].mxu0
        %v1700 = vpop.f32.mrb[0].mxu0
        %v1701 = vadd.f32 %v464, %v1700
        %v1702 = vpop.f32.mrb[0].mxu0
        %1703 = vmatprep.mubr.bf16.mxu0 0
        %1704 = vmatmul.mubr.bf16.gmra.mrb[0].mxu0 %v500
        %v1705 = vpop.f32.mrb[0].mxu0
        %v1706 = vadd.f32 %v464, %v1705
        %v1707 = vpop.f32.mrb[0].mxu0
        %v1708 = vpop.f32.mrb[0].mxu0
        %v1709 = vadd.f32 %v464, %v1708
        %v1710 = vpop.f32.mrb[0].mxu0
        %1711 = vmatprep.mubr.bf16.mxu0 0
        %1712 = vmatmul.mubr.bf16.gmra.mrb[0].mxu0 %v501
        %v1713 = vpop.f32.mrb[0].mxu0
        %v1714 = vadd.f32 %v464, %v1713
        %v1715 = vpop.f32.mrb[0].mxu0
        %v1716 = vpop.f32.mrb[0].mxu0
        %v1717 = vadd.f32 %v464, %v1716
        %v1718 = vpop.f32.mrb[0].mxu0
        %1719 = vmatprep.mubr.bf16.mxu0 0
        %1720 = vmatmul.mubr.bf16.gmra.mrb[0].mxu0 %v502
        %v1721 = vpop.f32.mrb[0].mxu0
        %v1722 = vadd.f32 %v464, %v1721
        %v1723 = vpop.f32.mrb[0].mxu0
        %v1724 = vpop.f32.mrb[0].mxu0
        %v1725 = vadd.f32 %v464, %v1724
        %v1726 = vpop.f32.mrb[0].mxu0
        %1727 = vmatprep.mubr.bf16.mxu0 0
        %1728 = vmatmul.mubr.bf16.gmra.mrb[0].mxu0 %v503
        %v1729 = vpop.f32.mrb[0].mxu0
        %v1730 = vadd.f32 %v464, %v1729
        %v1731 = vpop.f32.mrb[0].mxu0
        %v1732 = vpop.f32.mrb[0].mxu0
        %v1733 = vadd.f32 %v464, %v1732
        %v1734 = vpop.f32.mrb[0].mxu0
        %1735 = vmatprep.mubr.bf16.mxu0 0
        %1736 = vmatmul.mubr.bf16.gmra.mrb[0].mxu0 %v504
        %v1737 = vpop.f32.mrb[0].mxu0
        %v1738 = vadd.f32 %v464, %v1737
        %v1739 = vpop.f32.mrb[0].mxu0
        %v1740 = vpop.f32.mrb[0].mxu0
        %v1741 = vadd.f32 %v464, %v1740
        %v1742 = vpop.f32.mrb[0].mxu0
        %1743 = vdwg.mxu0
        %v1744 = vmax.f32 %v1682, 0.0
        %v1745 = vmax.f32 %v1685, 0.0
        %v1746 = vmax.f32 %v1690, 0.0
        %v1747 = vmax.f32 %v1693, 0.0
        %v1748 = vmax.f32 %v1698, 0.0
        %v1749 = vmax.f32 %v1701, 0.0
        %v1750 = vmax.f32 %v1706, 0.0
        %v1751 = vmax.f32 %v1709, 0.0
        %v1752 = vmax.f32 %v1714, 0.0
        %v1753 = vmax.f32 %v1717, 0.0
        %v1754 = vmax.f32 %v1722, 0.0
        %v1755 = vmax.f32 %v1725, 0.0
        %v1756 = vmax.f32 %v1730, 0.0
        %v1757 = vmax.f32 %v1733, 0.0
        %v1758 = vmax.f32 %v1738, 0.0
        %v1759 = vmax.f32 %v1741, 0.0
        %v1760 = vpack.c.bf16 %v1745, %v1744
        %v1761 = vpack.c.bf16 %v1747, %v1746
        %v1762 = vpack.c.bf16 %v1749, %v1748
        %v1763 = vpack.c.bf16 %v1751, %v1750
        %v1764 = vpack.c.bf16 %v1753, %v1752
        %v1765 = vpack.c.bf16 %v1755, %v1754
        %v1766 = vpack.c.bf16 %v1757, %v1756
        %v1767 = vpack.c.bf16 %v1759, %v1758
        %1768 = vmatprep.subr.bf16.mxu0 0
        %1769 = vmatpush1.bf16.msra.mxu0 %v666
        %1770 = vmatprep.subr.bf16.mxu0 0
        %1771 = vmatpush1.bf16.msra.mxu0 %v667
        %1772 = vmatprep.subr.bf16.mxu0 0
        %1773 = vmatpush1.bf16.msra.mxu0 %v668
        %1774 = vmatprep.subr.bf16.mxu0 0
        %1775 = vmatpush1.bf16.msra.mxu0 %v669
        %1776 = vmatprep.subr.bf16.mxu0 0
        %1777 = vmatpush1.bf16.msra.mxu0 %v670
        %1778 = vmatprep.subr.bf16.mxu0 0
        %1779 = vmatpush1.bf16.msra.mxu0 %v671
        %1780 = vmatprep.subr.bf16.mxu0 0
        %1781 = vmatpush1.bf16.msra.mxu0 %v672
        %1782 = vmatprep.subr.bf16.mxu0 0
        %1783 = vmatpush1.bf16.msra.mxu0 %v673
        %1784 = vmatprep.subr.bf16.mxu0 0
        %1785 = vmatpush1.bf16.msra.mxu0 0
        %1786 = vmatprep.subr.bf16.mxu0 0
        %1787 = vmatpush1.bf16.msra.mxu0 0
        %1788 = vmatprep.subr.bf16.mxu0 0
        %1789 = vmatpush1.bf16.msra.mxu0 0
        %1790 = vmatprep.subr.bf16.mxu0 0
        %1791 = vmatpush1.bf16.msra.mxu0 0
        %1792 = vmatprep.subr.bf16.mxu0 0
        %1793 = vmatpush1.bf16.msra.mxu0 0
        %1794 = vmatprep.subr.bf16.mxu0 0
        %1795 = vmatpush1.bf16.msra.mxu0 0
        %1796 = vmatprep.subr.bf16.mxu0 0
        %1797 = vmatpush1.bf16.msra.mxu0 0
        %1798 = vmatprep.subr.bf16.mxu0 0
        %1799 = vmatpush1.bf16.msra.mxu0 0
        %1800 = vmatprep.mubr.bf16.mxu0 0
        %1801 = vmatmul.mubr.bf16.gmra.mrb[0].mxu0 %v1760
        %v1802 = vpop.f32.mrb[0].mxu0
        %v1803 = vadd.f32 0.0, %v1802
        %v1804 = vpop.f32.mrb[0].mxu0
        %v1805 = vpop.f32.mrb[0].mxu0
        %v1806 = vadd.f32 0.0, %v1805
        %v1807 = vpop.f32.mrb[0].mxu0
        %1808 = vmatprep.mubr.bf16.mxu0 0
        %1809 = vmatmul.mubr.bf16.gmra.mrb[0].mxu0 %v1761
        %v1810 = vpop.f32.mrb[0].mxu0
        %v1811 = vadd.f32 0.0, %v1810
        %v1812 = vpop.f32.mrb[0].mxu0
        %v1813 = vpop.f32.mrb[0].mxu0
        %v1814 = vadd.f32 0.0, %v1813
        %v1815 = vpop.f32.mrb[0].mxu0
        %1816 = vmatprep.mubr.bf16.mxu0 0
        %1817 = vmatmul.mubr.bf16.gmra.mrb[0].mxu0 %v1762
        %v1818 = vpop.f32.mrb[0].mxu0
        %v1819 = vadd.f32 0.0, %v1818
        %v1820 = vpop.f32.mrb[0].mxu0
        %v1821 = vpop.f32.mrb[0].mxu0
        %v1822 = vadd.f32 0.0, %v1821
        %v1823 = vpop.f32.mrb[0].mxu0
        %1824 = vmatprep.mubr.bf16.mxu0 0
        %1825 = vmatmul.mubr.bf16.gmra.mrb[0].mxu0 %v1763
        %v1826 = vpop.f32.mrb[0].mxu0
        %v1827 = vadd.f32 0.0, %v1826
        %v1828 = vpop.f32.mrb[0].mxu0
        %v1829 = vpop.f32.mrb[0].mxu0
        %v1830 = vadd.f32 0.0, %v1829
        %v1831 = vpop.f32.mrb[0].mxu0
        %1832 = vmatprep.mubr.bf16.mxu0 0
        %1833 = vmatmul.mubr.bf16.gmra.mrb[0].mxu0 %v1764
        %v1834 = vpop.f32.mrb[0].mxu0
        %v1835 = vadd.f32 0.0, %v1834
        %v1836 = vpop.f32.mrb[0].mxu0
        %v1837 = vpop.f32.mrb[0].mxu0
        %v1838 = vadd.f32 0.0, %v1837
        %v1839 = vpop.f32.mrb[0].mxu0
        %1840 = vmatprep.mubr.bf16.mxu0 0
        %1841 = vmatmul.mubr.bf16.gmra.mrb[0].mxu0 %v1765
        %v1842 = vpop.f32.mrb[0].mxu0
        %v1843 = vadd.f32 0.0, %v1842
        %v1844 = vpop.f32.mrb[0].mxu0
        %v1845 = vpop.f32.mrb[0].mxu0
        %v1846 = vadd.f32 0.0, %v1845
        %v1847 = vpop.f32.mrb[0].mxu0
        %1848 = vmatprep.mubr.bf16.mxu0 0
        %1849 = vmatmul.mubr.bf16.gmra.mrb[0].mxu0 %v1766
        %v1850 = vpop.f32.mrb[0].mxu0
        %v1851 = vadd.f32 0.0, %v1850
        %v1852 = vpop.f32.mrb[0].mxu0
        %v1853 = vpop.f32.mrb[0].mxu0
        %v1854 = vadd.f32 0.0, %v1853
        %v1855 = vpop.f32.mrb[0].mxu0
        %1856 = vmatprep.mubr.bf16.mxu0 0
        %1857 = vmatmul.mubr.bf16.gmra.mrb[0].mxu0 %v1767
        %v1858 = vpop.f32.mrb[0].mxu0
        %v1859 = vadd.f32 0.0, %v1858
        %v1860 = vpop.f32.mrb[0].mxu0
        %v1861 = vpop.f32.mrb[0].mxu0
        %v1862 = vadd.f32 0.0, %v1861
        %v1863 = vpop.f32.mrb[0].mxu0
        %1864 = vdwg.mxu0
        %v1865 = vpack.c.bf16 %v1806, %v1803
        %v1866 = vpack.c.bf16 %v1814, %v1811
        %v1867 = vpack.c.bf16 %v1822, %v1819
        %v1868 = vpack.c.bf16 %v1830, %v1827
        %v1869 = vpack.c.bf16 %v1838, %v1835
        %v1870 = vpack.c.bf16 %v1846, %v1843
        %v1871 = vpack.c.bf16 %v1854, %v1851
        %v1872 = vpack.c.bf16 %v1862, %v1859
        %1873 = vmatprep.subr.bf16.mxu0 0
        %1874 = vmatpush1.bf16.msra.mxu0 %v1865
        %1875 = vmatprep.subr.bf16.mxu0 0
        %1876 = vmatpush1.bf16.msra.mxu0 %v1866
        %1877 = vmatprep.subr.bf16.mxu0 0
        %1878 = vmatpush1.bf16.msra.mxu0 %v1867
        %1879 = vmatprep.subr.bf16.mxu0 0
        %1880 = vmatpush1.bf16.msra.mxu0 %v1868
        %1881 = vmatprep.subr.bf16.mxu0 0
        %1882 = vmatpush1.bf16.msra.mxu0 %v1869
        %1883 = vmatprep.subr.bf16.mxu0 0
        %1884 = vmatpush1.bf16.msra.mxu0 %v1870
        %1885 = vmatprep.subr.bf16.mxu0 0
        %1886 = vmatpush1.bf16.msra.mxu0 %v1871
        %1887 = vmatprep.subr.bf16.mxu0 0
        %1888 = vmatpush1.bf16.msra.mxu0 %v1872
        %1889 = vmatprep.subr.bf16.mxu0 0
        %1890 = vmatpush1.bf16.msra.mxu0 0
        %1891 = vmatprep.subr.bf16.mxu0 0
        %1892 = vmatpush1.bf16.msra.mxu0 0
        %1893 = vmatprep.subr.bf16.mxu0 0
        %1894 = vmatpush1.bf16.msra.mxu0 0
        %1895 = vmatprep.subr.bf16.mxu0 0
        %1896 = vmatpush1.bf16.msra.mxu0 0
        %1897 = vmatprep.subr.bf16.mxu0 0
        %1898 = vmatpush1.bf16.msra.mxu0 0
        %1899 = vmatprep.subr.bf16.mxu0 0
        %1900 = vmatpush1.bf16.msra.mxu0 0
        %1901 = vmatprep.subr.bf16.mxu0 0
        %1902 = vmatpush1.bf16.msra.mxu0 0
        %1903 = vmatprep.subr.bf16.mxu0 0
        %1904 = vmatpush1.bf16.msra.mxu0 0
        %1905 = vmatprep.mubr.bf16.mxu0 0
        %1906 = vmatmul.mubr.bf16.gmra.mrb[0].mxu0 %v497
        %v1907 = vpop.f32.mrb[0].mxu0
        %v1908 = vadd.f32 %v790, %v1907
        %v1909 = vpop.f32.mrb[0].mxu0
        %v1910 = vpop.f32.mrb[0].mxu0
        %v1911 = vadd.f32 %v790, %v1910
        %v1912 = vpop.f32.mrb[0].mxu0
        %1913 = vmatprep.mubr.bf16.mxu0 0
        %1914 = vmatmul.mubr.bf16.gmra.mrb[0].mxu0 %v498
        %v1915 = vpop.f32.mrb[0].mxu0
        %v1916 = vadd.f32 %v790, %v1915
        %v1917 = vpop.f32.mrb[0].mxu0
        %v1918 = vpop.f32.mrb[0].mxu0
        %v1919 = vadd.f32 %v790, %v1918
        %v1920 = vpop.f32.mrb[0].mxu0
        %1921 = vmatprep.mubr.bf16.mxu0 0
        %1922 = vmatmul.mubr.bf16.gmra.mrb[0].mxu0 %v499
        %v1923 = vpop.f32.mrb[0].mxu0
        %v1924 = vadd.f32 %v790, %v1923
        %v1925 = vpop.f32.mrb[0].mxu0
        %v1926 = vpop.f32.mrb[0].mxu0
        %v1927 = vadd.f32 %v790, %v1926
        %v1928 = vpop.f32.mrb[0].mxu0
        %1929 = vmatprep.mubr.bf16.mxu0 0
        %1930 = vmatmul.mubr.bf16.gmra.mrb[0].mxu0 %v500
        %v1931 = vpop.f32.mrb[0].mxu0
        %v1932 = vadd.f32 %v790, %v1931
        %v1933 = vpop.f32.mrb[0].mxu0
        %v1934 = vpop.f32.mrb[0].mxu0
        %v1935 = vadd.f32 %v790, %v1934
        %v1936 = vpop.f32.mrb[0].mxu0
        %1937 = vmatprep.mubr.bf16.mxu0 0
        %1938 = vmatmul.mubr.bf16.gmra.mrb[0].mxu0 %v501
        %v1939 = vpop.f32.mrb[0].mxu0
        %v1940 = vadd.f32 %v790, %v1939
        %v1941 = vpop.f32.mrb[0].mxu0
        %v1942 = vpop.f32.mrb[0].mxu0
        %v1943 = vadd.f32 %v790, %v1942
        %v1944 = vpop.f32.mrb[0].mxu0
        %1945 = vmatprep.mubr.bf16.mxu0 0
        %1946 = vmatmul.mubr.bf16.gmra.mrb[0].mxu0 %v502
        %v1947 = vpop.f32.mrb[0].mxu0
        %v1948 = vadd.f32 %v790, %v1947
        %v1949 = vpop.f32.mrb[0].mxu0
        %v1950 = vpop.f32.mrb[0].mxu0
        %v1951 = vadd.f32 %v790, %v1950
        %v1952 = vpop.f32.mrb[0].mxu0
        %1953 = vmatprep.mubr.bf16.mxu0 0
        %1954 = vmatmul.mubr.bf16.gmra.mrb[0].mxu0 %v503
        %v1955 = vpop.f32.mrb[0].mxu0
        %v1956 = vadd.f32 %v790, %v1955
        %v1957 = vpop.f32.mrb[0].mxu0
        %v1958 = vpop.f32.mrb[0].mxu0
        %v1959 = vadd.f32 %v790, %v1958
        %v1960 = vpop.f32.mrb[0].mxu0
        %1961 = vmatprep.mubr.bf16.mxu0 0
        %1962 = vmatmul.mubr.bf16.gmra.mrb[0].mxu0 %v504
        %v1963 = vpop.f32.mrb[0].mxu0
        %v1964 = vadd.f32 %v790, %v1963
        %v1965 = vpop.f32.mrb[0].mxu0
        %v1966 = vpop.f32.mrb[0].mxu0
        %v1967 = vadd.f32 %v790, %v1966
        %v1968 = vpop.f32.mrb[0].mxu0
        %1969 = vdwg.mxu0
        %1970 = vxpose.xlu0.b32.start [1/16] %v1908, 128
        %1971 = vxpose.xlu0.b32.cont [2/16] %v1911, 128
        %1972 = vxpose.xlu0.b32.cont [3/16] %v1916, 128
        %1973 = vxpose.xlu0.b32.cont [4/16] %v1919, 128
        %1974 = vxpose.xlu0.b32.cont [5/16] %v1924, 128
        %1975 = vxpose.xlu0.b32.cont [6/16] %v1927, 128
        %1976 = vxpose.xlu0.b32.cont [7/16] %v1932, 128
        %1977 = vxpose.xlu0.b32.cont [8/16] %v1935, 128
        %1978 = vxpose.xlu0.b32.cont [9/16] %v1940, 128
        %1979 = vxpose.xlu0.b32.cont [10/16] %v1943, 128
        %1980 = vxpose.xlu0.b32.cont [11/16] %v1948, 128
        %1981 = vxpose.xlu0.b32.cont [12/16] %v1951, 128
        %1982 = vxpose.xlu0.b32.cont [13/16] %v1956, 128
        %1983 = vxpose.xlu0.b32.cont [14/16] %v1959, 128
        %1984 = vxpose.xlu0.b32.cont [15/16] %v1964, 128
        %1985 = vxpose.xlu0.b32.end [16/16] %v1967, 128
        %v1986 = vpop.trf.xlu0
        %v1987 = vpop.trf.xlu0
        %v1988 = vpop.trf.xlu0
        %v1989 = vpop.trf.xlu0
        %v1990 = vpop.trf.xlu0
        %v1991 = vpop.trf.xlu0
        %v1992 = vpop.trf.xlu0
        %v1993 = vpop.trf.xlu0
        %v1994 = vpop.trf.xlu0
        %v1995 = vpop.trf.xlu0
        %v1996 = vpop.trf.xlu0
        %v1997 = vpop.trf.xlu0
        %v1998 = vpop.trf.xlu0
        %v1999 = vpop.trf.xlu0
        %v2000 = vpop.trf.xlu0
        %v2001 = vpop.trf.xlu0
        %2002 = vst [vmem:[%s218 + $0x2] sm:$0x1] %v1986
        %v2003 = vld [vmem:[%s223 + $0xc0] sm:$0xf]
        %v2004 = vld [vmem:[%s223 + $0xc4] sm:$0xf]
        %v2005 = vld [vmem:[%s223 + $0xc8] sm:$0xf]
        %v2006 = vld [vmem:[%s223 + $0xcc] sm:$0xf]
        %v2007 = vld [vmem:[%s223 + $0xd0] sm:$0xf]
        %v2008 = vld [vmem:[%s223 + $0xd4] sm:$0xf]
        %v2009 = vld [vmem:[%s223 + $0xd8] sm:$0xf]
        %v2010 = vld [vmem:[%s223 + $0xdc] sm:$0xf]
        %v2011 = vld [vmem:[%s223 + $0xe0] sm:$0xf]
        %v2012 = vld [vmem:[%s223 + $0xe4] sm:$0xf]
        %v2013 = vld [vmem:[%s223 + $0xe8] sm:$0xf]
        %v2014 = vld [vmem:[%s223 + $0xec] sm:$0xf]
        %v2015 = vld [vmem:[%s223 + $0xf0] sm:$0xf]
        %v2016 = vld [vmem:[%s223 + $0xf4] sm:$0xf]
        %v2017 = vld [vmem:[%s223 + $0xf8] sm:$0xf]
        %v2018 = vld [vmem:[%s223 + $0xfc] sm:$0xf]
        %v2035 = vunpack.c.l.b16 %v2003
        %v2036 = vunpack.c.l.b16 %v2004
        %v2037 = vunpack.c.l.b16 %v2005
        %v2038 = vunpack.c.l.b16 %v2006
        %v2039 = vunpack.c.l.b16 %v2007
        %v2040 = vunpack.c.l.b16 %v2008
        %v2041 = vunpack.c.l.b16 %v2009
        %v2042 = vunpack.c.l.b16 %v2010
        %v2043 = vunpack.c.l.b16 %v2011
        %v2044 = vunpack.c.l.b16 %v2012
        %v2045 = vunpack.c.l.b16 %v2013
        %v2046 = vunpack.c.l.b16 %v2014
        %v2047 = vunpack.c.l.b16 %v2015
        %v2048 = vunpack.c.l.b16 %v2016
        %v2049 = vunpack.c.l.b16 %v2017
        %v2050 = vunpack.c.l.b16 %v2018
        %v2051 = vpack.c.b16 %v2036, %v2035
        %v2052 = vpack.c.b16 %v2038, %v2037
        %v2053 = vpack.c.b16 %v2040, %v2039
        %v2054 = vpack.c.b16 %v2042, %v2041
        %v2055 = vpack.c.b16 %v2044, %v2043
        %v2056 = vpack.c.b16 %v2046, %v2045
        %v2057 = vpack.c.b16 %v2048, %v2047
        %v2058 = vpack.c.b16 %v2050, %v2049
        %v2060 = vsel %vm331, %v2051, 0
        %v2063 = vsel %vm331, %v2052, 0
        %v2066 = vsel %vm331, %v2053, 0
        %v2069 = vsel %vm331, %v2054, 0
        %v2072 = vsel %vm331, %v2055, 0
        %v2075 = vsel %vm331, %v2056, 0
        %v2078 = vsel %vm331, %v2057, 0
        %v2081 = vsel %vm331, %v2058, 0
        %2083 = vmatprep.subr.bf16.mxu0 0
        %2084 = vmatpush1.bf16.msra.mxu0 %v327
        %2085 = vmatprep.subr.bf16.mxu0 0
        %2086 = vmatpush1.bf16.msra.mxu0 %v328
        %2087 = vmatprep.subr.bf16.mxu0 0
        %2088 = vmatpush1.bf16.msra.mxu0 0
        %2089 = vmatprep.subr.bf16.mxu0 0
        %2090 = vmatpush1.bf16.msra.mxu0 0
        %2091 = vmatprep.subr.bf16.mxu0 0
        %2092 = vmatpush1.bf16.msra.mxu0 0
        %2093 = vmatprep.subr.bf16.mxu0 0
        %2094 = vmatpush1.bf16.msra.mxu0 0
        %2095 = vmatprep.subr.bf16.mxu0 0
        %2096 = vmatpush1.bf16.msra.mxu0 0
        %2097 = vmatprep.subr.bf16.mxu0 0
        %2098 = vmatpush1.bf16.msra.mxu0 0
        %2099 = vmatprep.subr.bf16.mxu0 0
        %2100 = vmatpush1.bf16.msra.mxu0 0
        %2101 = vmatprep.subr.bf16.mxu0 0
        %2102 = vmatpush1.bf16.msra.mxu0 0
        %2103 = vmatprep.subr.bf16.mxu0 0
        %2104 = vmatpush1.bf16.msra.mxu0 0
        %2105 = vmatprep.subr.bf16.mxu0 0
        %2106 = vmatpush1.bf16.msra.mxu0 0
        %2107 = vmatprep.subr.bf16.mxu0 0
        %2108 = vmatpush1.bf16.msra.mxu0 0
        %2109 = vmatprep.subr.bf16.mxu0 0
        %2110 = vmatpush1.bf16.msra.mxu0 0
        %2111 = vmatprep.subr.bf16.mxu0 0
        %2112 = vmatpush1.bf16.msra.mxu0 0
        %2113 = vmatprep.subr.bf16.mxu0 0
        %2114 = vmatpush1.bf16.msra.mxu0 0
        %2115 = vmatprep.mubr.bf16.mxu0 0
        %2116 = vmatmul.mubr.bf16.gmra.mrb[0].mxu0 %v2060
        %v2117 = vpop.f32.mrb[0].mxu0
        %v2118 = vadd.f32 0.0, %v2117
        %v2119 = vpop.f32.mrb[0].mxu0
        %v2120 = vpop.f32.mrb[0].mxu0
        %v2121 = vadd.f32 0.0, %v2120
        %v2122 = vpop.f32.mrb[0].mxu0
        %2123 = vmatprep.mubr.bf16.mxu0 0
        %2124 = vmatmul.mubr.bf16.gmra.mrb[0].mxu0 %v2063
        %v2125 = vpop.f32.mrb[0].mxu0
        %v2126 = vadd.f32 0.0, %v2125
        %v2127 = vpop.f32.mrb[0].mxu0
        %v2128 = vpop.f32.mrb[0].mxu0
        %v2129 = vadd.f32 0.0, %v2128
        %v2130 = vpop.f32.mrb[0].mxu0
        %2131 = vmatprep.mubr.bf16.mxu0 0
        %2132 = vmatmul.mubr.bf16.gmra.mrb[0].mxu0 %v2066
        %v2133 = vpop.f32.mrb[0].mxu0
        %v2134 = vadd.f32 0.0, %v2133
        %v2135 = vpop.f32.mrb[0].mxu0
        %v2136 = vpop.f32.mrb[0].mxu0
        %v2137 = vadd.f32 0.0, %v2136
        %v2138 = vpop.f32.mrb[0].mxu0
        %2139 = vmatprep.mubr.bf16.mxu0 0
        %2140 = vmatmul.mubr.bf16.gmra.mrb[0].mxu0 %v2069
        %v2141 = vpop.f32.mrb[0].mxu0
        %v2142 = vadd.f32 0.0, %v2141
        %v2143 = vpop.f32.mrb[0].mxu0
        %v2144 = vpop.f32.mrb[0].mxu0
        %v2145 = vadd.f32 0.0, %v2144
        %v2146 = vpop.f32.mrb[0].mxu0
        %2147 = vmatprep.mubr.bf16.mxu0 0
        %2148 = vmatmul.mubr.bf16.gmra.mrb[0].mxu0 %v2072
        %v2149 = vpop.f32.mrb[0].mxu0
        %v2150 = vadd.f32 0.0, %v2149
        %v2151 = vpop.f32.mrb[0].mxu0
        %v2152 = vpop.f32.mrb[0].mxu0
        %v2153 = vadd.f32 0.0, %v2152
        %v2154 = vpop.f32.mrb[0].mxu0
        %2155 = vmatprep.mubr.bf16.mxu0 0
        %2156 = vmatmul.mubr.bf16.gmra.mrb[0].mxu0 %v2075
        %v2157 = vpop.f32.mrb[0].mxu0
        %v2158 = vadd.f32 0.0, %v2157
        %v2159 = vpop.f32.mrb[0].mxu0
        %v2160 = vpop.f32.mrb[0].mxu0
        %v2161 = vadd.f32 0.0, %v2160
        %v2162 = vpop.f32.mrb[0].mxu0
        %2163 = vmatprep.mubr.bf16.mxu0 0
        %2164 = vmatmul.mubr.bf16.gmra.mrb[0].mxu0 %v2078
        %v2165 = vpop.f32.mrb[0].mxu0
        %v2166 = vadd.f32 0.0, %v2165
        %v2167 = vpop.f32.mrb[0].mxu0
        %v2168 = vpop.f32.mrb[0].mxu0
        %v2169 = vadd.f32 0.0, %v2168
        %v2170 = vpop.f32.mrb[0].mxu0
        %2171 = vmatprep.mubr.bf16.mxu0 0
        %2172 = vmatmul.mubr.bf16.gmra.mrb[0].mxu0 %v2081
        %v2173 = vpop.f32.mrb[0].mxu0
        %v2174 = vadd.f32 0.0, %v2173
        %v2175 = vpop.f32.mrb[0].mxu0
        %v2176 = vpop.f32.mrb[0].mxu0
        %v2177 = vadd.f32 0.0, %v2176
        %v2178 = vpop.f32.mrb[0].mxu0
        %2179 = vdwg.mxu0
        %v2180 = vpack.c.bf16 %v2121, %v2118
        %v2181 = vpack.c.bf16 %v2129, %v2126
        %v2182 = vpack.c.bf16 %v2137, %v2134
        %v2183 = vpack.c.bf16 %v2145, %v2142
        %v2184 = vpack.c.bf16 %v2153, %v2150
        %v2185 = vpack.c.bf16 %v2161, %v2158
        %v2186 = vpack.c.bf16 %v2169, %v2166
        %v2187 = vpack.c.bf16 %v2177, %v2174
        %2188 = vmatprep.subr.bf16.mxu0 0
        %2189 = vmatpush1.bf16.msra.mxu0 %v2180
        %2190 = vmatprep.subr.bf16.mxu0 0
        %2191 = vmatpush1.bf16.msra.mxu0 %v2181
        %2192 = vmatprep.subr.bf16.mxu0 0
        %2193 = vmatpush1.bf16.msra.mxu0 %v2182
        %2194 = vmatprep.subr.bf16.mxu0 0
        %2195 = vmatpush1.bf16.msra.mxu0 %v2183
        %2196 = vmatprep.subr.bf16.mxu0 0
        %2197 = vmatpush1.bf16.msra.mxu0 %v2184
        %2198 = vmatprep.subr.bf16.mxu0 0
        %2199 = vmatpush1.bf16.msra.mxu0 %v2185
        %2200 = vmatprep.subr.bf16.mxu0 0
        %2201 = vmatpush1.bf16.msra.mxu0 %v2186
        %2202 = vmatprep.subr.bf16.mxu0 0
        %2203 = vmatpush1.bf16.msra.mxu0 %v2187
        %2204 = vmatprep.subr.bf16.mxu0 0
        %2205 = vmatpush1.bf16.msra.mxu0 0
        %2206 = vmatprep.subr.bf16.mxu0 0
        %2207 = vmatpush1.bf16.msra.mxu0 0
        %2208 = vmatprep.subr.bf16.mxu0 0
        %2209 = vmatpush1.bf16.msra.mxu0 0
        %2210 = vmatprep.subr.bf16.mxu0 0
        %2211 = vmatpush1.bf16.msra.mxu0 0
        %2212 = vmatprep.subr.bf16.mxu0 0
        %2213 = vmatpush1.bf16.msra.mxu0 0
        %2214 = vmatprep.subr.bf16.mxu0 0
        %2215 = vmatpush1.bf16.msra.mxu0 0
        %2216 = vmatprep.subr.bf16.mxu0 0
        %2217 = vmatpush1.bf16.msra.mxu0 0
        %2218 = vmatprep.subr.bf16.mxu0 0
        %2219 = vmatpush1.bf16.msra.mxu0 0
        %2220 = vmatprep.mubr.bf16.mxu0 0
        %2221 = vmatmul.mubr.bf16.gmra.mrb[0].mxu0 %v497
        %v2222 = vpop.f32.mrb[0].mxu0
        %v2223 = vadd.f32 %v464, %v2222
        %v2224 = vpop.f32.mrb[0].mxu0
        %v2225 = vpop.f32.mrb[0].mxu0
        %v2226 = vadd.f32 %v464, %v2225
        %v2227 = vpop.f32.mrb[0].mxu0
        %2228 = vmatprep.mubr.bf16.mxu0 0
        %2229 = vmatmul.mubr.bf16.gmra.mrb[0].mxu0 %v498
        %v2230 = vpop.f32.mrb[0].mxu0
        %v2231 = vadd.f32 %v464, %v2230
        %v2232 = vpop.f32.mrb[0].mxu0
        %v2233 = vpop.f32.mrb[0].mxu0
        %v2234 = vadd.f32 %v464, %v2233
        %v2235 = vpop.f32.mrb[0].mxu0
        %2236 = vmatprep.mubr.bf16.mxu0 0
        %2237 = vmatmul.mubr.bf16.gmra.mrb[0].mxu0 %v499
        %v2238 = vpop.f32.mrb[0].mxu0
        %v2239 = vadd.f32 %v464, %v2238
        %v2240 = vpop.f32.mrb[0].mxu0
        %v2241 = vpop.f32.mrb[0].mxu0
        %v2242 = vadd.f32 %v464, %v2241
        %v2243 = vpop.f32.mrb[0].mxu0
        %2244 = vmatprep.mubr.bf16.mxu0 0
        %2245 = vmatmul.mubr.bf16.gmra.mrb[0].mxu0 %v500
        %v2246 = vpop.f32.mrb[0].mxu0
        %v2247 = vadd.f32 %v464, %v2246
        %v2248 = vpop.f32.mrb[0].mxu0
        %v2249 = vpop.f32.mrb[0].mxu0
        %v2250 = vadd.f32 %v464, %v2249
        %v2251 = vpop.f32.mrb[0].mxu0
        %2252 = vmatprep.mubr.bf16.mxu0 0
        %2253 = vmatmul.mubr.bf16.gmra.mrb[0].mxu0 %v501
        %v2254 = vpop.f32.mrb[0].mxu0
        %v2255 = vadd.f32 %v464, %v2254
        %v2256 = vpop.f32.mrb[0].mxu0
        %v2257 = vpop.f32.mrb[0].mxu0
        %v2258 = vadd.f32 %v464, %v2257
        %v2259 = vpop.f32.mrb[0].mxu0
        %2260 = vmatprep.mubr.bf16.mxu0 0
        %2261 = vmatmul.mubr.bf16.gmra.mrb[0].mxu0 %v502
        %v2262 = vpop.f32.mrb[0].mxu0
        %v2263 = vadd.f32 %v464, %v2262
        %v2264 = vpop.f32.mrb[0].mxu0
        %v2265 = vpop.f32.mrb[0].mxu0
        %v2266 = vadd.f32 %v464, %v2265
        %v2267 = vpop.f32.mrb[0].mxu0
        %2268 = vmatprep.mubr.bf16.mxu0 0
        %2269 = vmatmul.mubr.bf16.gmra.mrb[0].mxu0 %v503
        %v2270 = vpop.f32.mrb[0].mxu0
        %v2271 = vadd.f32 %v464, %v2270
        %v2272 = vpop.f32.mrb[0].mxu0
        %v2273 = vpop.f32.mrb[0].mxu0
        %v2274 = vadd.f32 %v464, %v2273
        %v2275 = vpop.f32.mrb[0].mxu0
        %2276 = vmatprep.mubr.bf16.mxu0 0
        %2277 = vmatmul.mubr.bf16.gmra.mrb[0].mxu0 %v504
        %v2278 = vpop.f32.mrb[0].mxu0
        %v2279 = vadd.f32 %v464, %v2278
        %v2280 = vpop.f32.mrb[0].mxu0
        %v2281 = vpop.f32.mrb[0].mxu0
        %v2282 = vadd.f32 %v464, %v2281
        %v2283 = vpop.f32.mrb[0].mxu0
        %2284 = vdwg.mxu0
        %v2285 = vmax.f32 %v2223, 0.0
        %v2286 = vmax.f32 %v2226, 0.0
        %v2287 = vmax.f32 %v2231, 0.0
        %v2288 = vmax.f32 %v2234, 0.0
        %v2289 = vmax.f32 %v2239, 0.0
        %v2290 = vmax.f32 %v2242, 0.0
        %v2291 = vmax.f32 %v2247, 0.0
        %v2292 = vmax.f32 %v2250, 0.0
        %v2293 = vmax.f32 %v2255, 0.0
        %v2294 = vmax.f32 %v2258, 0.0
        %v2295 = vmax.f32 %v2263, 0.0
        %v2296 = vmax.f32 %v2266, 0.0
        %v2297 = vmax.f32 %v2271, 0.0
        %v2298 = vmax.f32 %v2274, 0.0
        %v2299 = vmax.f32 %v2279, 0.0
        %v2300 = vmax.f32 %v2282, 0.0
        %v2301 = vpack.c.bf16 %v2286, %v2285
        %v2302 = vpack.c.bf16 %v2288, %v2287
        %v2303 = vpack.c.bf16 %v2290, %v2289
        %v2304 = vpack.c.bf16 %v2292, %v2291
        %v2305 = vpack.c.bf16 %v2294, %v2293
        %v2306 = vpack.c.bf16 %v2296, %v2295
        %v2307 = vpack.c.bf16 %v2298, %v2297
        %v2308 = vpack.c.bf16 %v2300, %v2299
        %2309 = vmatprep.subr.bf16.mxu0 0
        %2310 = vmatpush1.bf16.msra.mxu0 %v666
        %2311 = vmatprep.subr.bf16.mxu0 0
        %2312 = vmatpush1.bf16.msra.mxu0 %v667
        %2313 = vmatprep.subr.bf16.mxu0 0
        %2314 = vmatpush1.bf16.msra.mxu0 %v668
        %2315 = vmatprep.subr.bf16.mxu0 0
        %2316 = vmatpush1.bf16.msra.mxu0 %v669
        %2317 = vmatprep.subr.bf16.mxu0 0
        %2318 = vmatpush1.bf16.msra.mxu0 %v670
        %2319 = vmatprep.subr.bf16.mxu0 0
        %2320 = vmatpush1.bf16.msra.mxu0 %v671
        %2321 = vmatprep.subr.bf16.mxu0 0
        %2322 = vmatpush1.bf16.msra.mxu0 %v672
        %2323 = vmatprep.subr.bf16.mxu0 0
        %2324 = vmatpush1.bf16.msra.mxu0 %v673
        %2325 = vmatprep.subr.bf16.mxu0 0
        %2326 = vmatpush1.bf16.msra.mxu0 0
        %2327 = vmatprep.subr.bf16.mxu0 0
        %2328 = vmatpush1.bf16.msra.mxu0 0
        %2329 = vmatprep.subr.bf16.mxu0 0
        %2330 = vmatpush1.bf16.msra.mxu0 0
        %2331 = vmatprep.subr.bf16.mxu0 0
        %2332 = vmatpush1.bf16.msra.mxu0 0
        %2333 = vmatprep.subr.bf16.mxu0 0
        %2334 = vmatpush1.bf16.msra.mxu0 0
        %2335 = vmatprep.subr.bf16.mxu0 0
        %2336 = vmatpush1.bf16.msra.mxu0 0
        %2337 = vmatprep.subr.bf16.mxu0 0
        %2338 = vmatpush1.bf16.msra.mxu0 0
        %2339 = vmatprep.subr.bf16.mxu0 0
        %2340 = vmatpush1.bf16.msra.mxu0 0
        %2341 = vmatprep.mubr.bf16.mxu0 0
        %2342 = vmatmul.mubr.bf16.gmra.mrb[0].mxu0 %v2301
        %v2343 = vpop.f32.mrb[0].mxu0
        %v2344 = vadd.f32 0.0, %v2343
        %v2345 = vpop.f32.mrb[0].mxu0
        %v2346 = vpop.f32.mrb[0].mxu0
        %v2347 = vadd.f32 0.0, %v2346
        %v2348 = vpop.f32.mrb[0].mxu0
        %2349 = vmatprep.mubr.bf16.mxu0 0
        %2350 = vmatmul.mubr.bf16.gmra.mrb[0].mxu0 %v2302
        %v2351 = vpop.f32.mrb[0].mxu0
        %v2352 = vadd.f32 0.0, %v2351
        %v2353 = vpop.f32.mrb[0].mxu0
        %v2354 = vpop.f32.mrb[0].mxu0
        %v2355 = vadd.f32 0.0, %v2354
        %v2356 = vpop.f32.mrb[0].mxu0
        %2357 = vmatprep.mubr.bf16.mxu0 0
        %2358 = vmatmul.mubr.bf16.gmra.mrb[0].mxu0 %v2303
        %v2359 = vpop.f32.mrb[0].mxu0
        %v2360 = vadd.f32 0.0, %v2359
        %v2361 = vpop.f32.mrb[0].mxu0
        %v2362 = vpop.f32.mrb[0].mxu0
        %v2363 = vadd.f32 0.0, %v2362
        %v2364 = vpop.f32.mrb[0].mxu0
        %2365 = vmatprep.mubr.bf16.mxu0 0
        %2366 = vmatmul.mubr.bf16.gmra.mrb[0].mxu0 %v2304
        %v2367 = vpop.f32.mrb[0].mxu0
        %v2368 = vadd.f32 0.0, %v2367
        %v2369 = vpop.f32.mrb[0].mxu0
        %v2370 = vpop.f32.mrb[0].mxu0
        %v2371 = vadd.f32 0.0, %v2370
        %v2372 = vpop.f32.mrb[0].mxu0
        %2373 = vmatprep.mubr.bf16.mxu0 0
        %2374 = vmatmul.mubr.bf16.gmra.mrb[0].mxu0 %v2305
        %v2375 = vpop.f32.mrb[0].mxu0
        %v2376 = vadd.f32 0.0, %v2375
        %v2377 = vpop.f32.mrb[0].mxu0
        %v2378 = vpop.f32.mrb[0].mxu0
        %v2379 = vadd.f32 0.0, %v2378
        %v2380 = vpop.f32.mrb[0].mxu0
        %2381 = vmatprep.mubr.bf16.mxu0 0
        %2382 = vmatmul.mubr.bf16.gmra.mrb[0].mxu0 %v2306
        %v2383 = vpop.f32.mrb[0].mxu0
        %v2384 = vadd.f32 0.0, %v2383
        %v2385 = vpop.f32.mrb[0].mxu0
        %v2386 = vpop.f32.mrb[0].mxu0
        %v2387 = vadd.f32 0.0, %v2386
        %v2388 = vpop.f32.mrb[0].mxu0
        %2389 = vmatprep.mubr.bf16.mxu0 0
        %2390 = vmatmul.mubr.bf16.gmra.mrb[0].mxu0 %v2307
        %v2391 = vpop.f32.mrb[0].mxu0
        %v2392 = vadd.f32 0.0, %v2391
        %v2393 = vpop.f32.mrb[0].mxu0
        %v2394 = vpop.f32.mrb[0].mxu0
        %v2395 = vadd.f32 0.0, %v2394
        %v2396 = vpop.f32.mrb[0].mxu0
        %2397 = vmatprep.mubr.bf16.mxu0 0
        %2398 = vmatmul.mubr.bf16.gmra.mrb[0].mxu0 %v2308
        %v2399 = vpop.f32.mrb[0].mxu0
        %v2400 = vadd.f32 0.0, %v2399
        %v2401 = vpop.f32.mrb[0].mxu0
        %v2402 = vpop.f32.mrb[0].mxu0
        %v2403 = vadd.f32 0.0, %v2402
        %v2404 = vpop.f32.mrb[0].mxu0
        %2405 = vdwg.mxu0
        %v2406 = vpack.c.bf16 %v2347, %v2344
        %v2407 = vpack.c.bf16 %v2355, %v2352
        %v2408 = vpack.c.bf16 %v2363, %v2360
        %v2409 = vpack.c.bf16 %v2371, %v2368
        %v2410 = vpack.c.bf16 %v2379, %v2376
        %v2411 = vpack.c.bf16 %v2387, %v2384
        %v2412 = vpack.c.bf16 %v2395, %v2392
        %v2413 = vpack.c.bf16 %v2403, %v2400
        %2414 = vmatprep.subr.bf16.mxu0 0
        %2415 = vmatpush1.bf16.msra.mxu0 %v2406
        %2416 = vmatprep.subr.bf16.mxu0 0
        %2417 = vmatpush1.bf16.msra.mxu0 %v2407
        %2418 = vmatprep.subr.bf16.mxu0 0
        %2419 = vmatpush1.bf16.msra.mxu0 %v2408
        %2420 = vmatprep.subr.bf16.mxu0 0
        %2421 = vmatpush1.bf16.msra.mxu0 %v2409
        %2422 = vmatprep.subr.bf16.mxu0 0
        %2423 = vmatpush1.bf16.msra.mxu0 %v2410
        %2424 = vmatprep.subr.bf16.mxu0 0
        %2425 = vmatpush1.bf16.msra.mxu0 %v2411
        %2426 = vmatprep.subr.bf16.mxu0 0
        %2427 = vmatpush1.bf16.msra.mxu0 %v2412
        %2428 = vmatprep.subr.bf16.mxu0 0
        %2429 = vmatpush1.bf16.msra.mxu0 %v2413
        %2430 = vmatprep.subr.bf16.mxu0 0
        %2431 = vmatpush1.bf16.msra.mxu0 0
        %2432 = vmatprep.subr.bf16.mxu0 0
        %2433 = vmatpush1.bf16.msra.mxu0 0
        %2434 = vmatprep.subr.bf16.mxu0 0
        %2435 = vmatpush1.bf16.msra.mxu0 0
        %2436 = vmatprep.subr.bf16.mxu0 0
        %2437 = vmatpush1.bf16.msra.mxu0 0
        %2438 = vmatprep.subr.bf16.mxu0 0
        %2439 = vmatpush1.bf16.msra.mxu0 0
        %2440 = vmatprep.subr.bf16.mxu0 0
        %2441 = vmatpush1.bf16.msra.mxu0 0
        %2442 = vmatprep.subr.bf16.mxu0 0
        %2443 = vmatpush1.bf16.msra.mxu0 0
        %2444 = vmatprep.subr.bf16.mxu0 0
        %2445 = vmatpush1.bf16.msra.mxu0 0
        %2446 = vmatprep.mubr.bf16.mxu0 0
        %2447 = vmatmul.mubr.bf16.gmra.mrb[0].mxu0 %v497
        %v2448 = vpop.f32.mrb[0].mxu0
        %v2449 = vadd.f32 %v790, %v2448
        %v2450 = vpop.f32.mrb[0].mxu0
        %v2451 = vpop.f32.mrb[0].mxu0
        %v2452 = vadd.f32 %v790, %v2451
        %v2453 = vpop.f32.mrb[0].mxu0
        %2454 = vmatprep.mubr.bf16.mxu0 0
        %2455 = vmatmul.mubr.bf16.gmra.mrb[0].mxu0 %v498
        %v2456 = vpop.f32.mrb[0].mxu0
        %v2457 = vadd.f32 %v790, %v2456
        %v2458 = vpop.f32.mrb[0].mxu0
        %v2459 = vpop.f32.mrb[0].mxu0
        %v2460 = vadd.f32 %v790, %v2459
        %v2461 = vpop.f32.mrb[0].mxu0
        %2462 = vmatprep.mubr.bf16.mxu0 0
        %2463 = vmatmul.mubr.bf16.gmra.mrb[0].mxu0 %v499
        %v2464 = vpop.f32.mrb[0].mxu0
        %v2465 = vadd.f32 %v790, %v2464
        %v2466 = vpop.f32.mrb[0].mxu0
        %v2467 = vpop.f32.mrb[0].mxu0
        %v2468 = vadd.f32 %v790, %v2467
        %v2469 = vpop.f32.mrb[0].mxu0
        %2470 = vmatprep.mubr.bf16.mxu0 0
        %2471 = vmatmul.mubr.bf16.gmra.mrb[0].mxu0 %v500
        %v2472 = vpop.f32.mrb[0].mxu0
        %v2473 = vadd.f32 %v790, %v2472
        %v2474 = vpop.f32.mrb[0].mxu0
        %v2475 = vpop.f32.mrb[0].mxu0
        %v2476 = vadd.f32 %v790, %v2475
        %v2477 = vpop.f32.mrb[0].mxu0
        %2478 = vmatprep.mubr.bf16.mxu0 0
        %2479 = vmatmul.mubr.bf16.gmra.mrb[0].mxu0 %v501
        %v2480 = vpop.f32.mrb[0].mxu0
        %v2481 = vadd.f32 %v790, %v2480
        %v2482 = vpop.f32.mrb[0].mxu0
        %v2483 = vpop.f32.mrb[0].mxu0
        %v2484 = vadd.f32 %v790, %v2483
        %v2485 = vpop.f32.mrb[0].mxu0
        %2486 = vmatprep.mubr.bf16.mxu0 0
        %2487 = vmatmul.mubr.bf16.gmra.mrb[0].mxu0 %v502
        %v2488 = vpop.f32.mrb[0].mxu0
        %v2489 = vadd.f32 %v790, %v2488
        %v2490 = vpop.f32.mrb[0].mxu0
        %v2491 = vpop.f32.mrb[0].mxu0
        %v2492 = vadd.f32 %v790, %v2491
        %v2493 = vpop.f32.mrb[0].mxu0
        %2494 = vmatprep.mubr.bf16.mxu0 0
        %2495 = vmatmul.mubr.bf16.gmra.mrb[0].mxu0 %v503
        %v2496 = vpop.f32.mrb[0].mxu0
        %v2497 = vadd.f32 %v790, %v2496
        %v2498 = vpop.f32.mrb[0].mxu0
        %v2499 = vpop.f32.mrb[0].mxu0
        %v2500 = vadd.f32 %v790, %v2499
        %v2501 = vpop.f32.mrb[0].mxu0
        %2502 = vmatprep.mubr.bf16.mxu0 0
        %2503 = vmatmul.mubr.bf16.gmra.mrb[0].mxu0 %v504
        %v2504 = vpop.f32.mrb[0].mxu0
        %v2505 = vadd.f32 %v790, %v2504
        %v2506 = vpop.f32.mrb[0].mxu0
        %v2507 = vpop.f32.mrb[0].mxu0
        %v2508 = vadd.f32 %v790, %v2507
        %v2509 = vpop.f32.mrb[0].mxu0
        %2510 = vdwg.mxu0
        %2511 = vxpose.xlu0.b32.start [1/16] %v2449, 128
        %2512 = vxpose.xlu0.b32.cont [2/16] %v2452, 128
        %2513 = vxpose.xlu0.b32.cont [3/16] %v2457, 128
        %2514 = vxpose.xlu0.b32.cont [4/16] %v2460, 128
        %2515 = vxpose.xlu0.b32.cont [5/16] %v2465, 128
        %2516 = vxpose.xlu0.b32.cont [6/16] %v2468, 128
        %2517 = vxpose.xlu0.b32.cont [7/16] %v2473, 128
        %2518 = vxpose.xlu0.b32.cont [8/16] %v2476, 128
        %2519 = vxpose.xlu0.b32.cont [9/16] %v2481, 128
        %2520 = vxpose.xlu0.b32.cont [10/16] %v2484, 128
        %2521 = vxpose.xlu0.b32.cont [11/16] %v2489, 128
        %2522 = vxpose.xlu0.b32.cont [12/16] %v2492, 128
        %2523 = vxpose.xlu0.b32.cont [13/16] %v2497, 128
        %2524 = vxpose.xlu0.b32.cont [14/16] %v2500, 128
        %2525 = vxpose.xlu0.b32.cont [15/16] %v2505, 128
        %2526 = vxpose.xlu0.b32.end [16/16] %v2508, 128
        %v2527 = vpop.trf.xlu0
        %v2528 = vpop.trf.xlu0
        %v2529 = vpop.trf.xlu0
        %v2530 = vpop.trf.xlu0
        %v2531 = vpop.trf.xlu0
        %v2532 = vpop.trf.xlu0
        %v2533 = vpop.trf.xlu0
        %v2534 = vpop.trf.xlu0
        %v2535 = vpop.trf.xlu0
        %v2536 = vpop.trf.xlu0
        %v2537 = vpop.trf.xlu0
        %v2538 = vpop.trf.xlu0
        %v2539 = vpop.trf.xlu0
        %v2540 = vpop.trf.xlu0
        %v2541 = vpop.trf.xlu0
        %v2542 = vpop.trf.xlu0
        %2543 = vst [vmem:[%s218 + $0x3] sm:$0x1] %v2527
        %v2544 = vld [vmem:[%s223 + $0x100] sm:$0xf]
        %v2545 = vld [vmem:[%s223 + $0x104] sm:$0xf]
        %v2546 = vld [vmem:[%s223 + $0x108] sm:$0xf]
        %v2547 = vld [vmem:[%s223 + $0x10c] sm:$0xf]
        %v2548 = vld [vmem:[%s223 + $0x110] sm:$0xf]
        %v2549 = vld [vmem:[%s223 + $0x114] sm:$0xf]
        %v2550 = vld [vmem:[%s223 + $0x118] sm:$0xf]
        %v2551 = vld [vmem:[%s223 + $0x11c] sm:$0xf]
        %v2552 = vld [vmem:[%s223 + $0x120] sm:$0xf]
        %v2553 = vld [vmem:[%s223 + $0x124] sm:$0xf]
        %v2554 = vld [vmem:[%s223 + $0x128] sm:$0xf]
        %v2555 = vld [vmem:[%s223 + $0x12c] sm:$0xf]
        %v2556 = vld [vmem:[%s223 + $0x130] sm:$0xf]
        %v2557 = vld [vmem:[%s223 + $0x134] sm:$0xf]
        %v2558 = vld [vmem:[%s223 + $0x138] sm:$0xf]
        %v2559 = vld [vmem:[%s223 + $0x13c] sm:$0xf]
        %v2576 = vunpack.c.l.b16 %v2544
        %v2577 = vunpack.c.l.b16 %v2545
        %v2578 = vunpack.c.l.b16 %v2546
        %v2579 = vunpack.c.l.b16 %v2547
        %v2580 = vunpack.c.l.b16 %v2548
        %v2581 = vunpack.c.l.b16 %v2549
        %v2582 = vunpack.c.l.b16 %v2550
        %v2583 = vunpack.c.l.b16 %v2551
        %v2584 = vunpack.c.l.b16 %v2552
        %v2585 = vunpack.c.l.b16 %v2553
        %v2586 = vunpack.c.l.b16 %v2554
        %v2587 = vunpack.c.l.b16 %v2555
        %v2588 = vunpack.c.l.b16 %v2556
        %v2589 = vunpack.c.l.b16 %v2557
        %v2590 = vunpack.c.l.b16 %v2558
        %v2591 = vunpack.c.l.b16 %v2559
        %v2592 = vpack.c.b16 %v2577, %v2576
        %v2593 = vpack.c.b16 %v2579, %v2578
        %v2594 = vpack.c.b16 %v2581, %v2580
        %v2595 = vpack.c.b16 %v2583, %v2582
        %v2596 = vpack.c.b16 %v2585, %v2584
        %v2597 = vpack.c.b16 %v2587, %v2586
        %v2598 = vpack.c.b16 %v2589, %v2588
        %v2599 = vpack.c.b16 %v2591, %v2590
        %v2601 = vsel %vm331, %v2592, 0
        %v2604 = vsel %vm331, %v2593, 0
        %v2607 = vsel %vm331, %v2594, 0
        %v2610 = vsel %vm331, %v2595, 0
        %v2613 = vsel %vm331, %v2596, 0
        %v2616 = vsel %vm331, %v2597, 0
        %v2619 = vsel %vm331, %v2598, 0
        %v2622 = vsel %vm331, %v2599, 0
        %2624 = vmatprep.subr.bf16.mxu0 0
        %2625 = vmatpush1.bf16.msra.mxu0 %v327
        %2626 = vmatprep.subr.bf16.mxu0 0
        %2627 = vmatpush1.bf16.msra.mxu0 %v328
        %2628 = vmatprep.subr.bf16.mxu0 0
        %2629 = vmatpush1.bf16.msra.mxu0 0
        %2630 = vmatprep.subr.bf16.mxu0 0
        %2631 = vmatpush1.bf16.msra.mxu0 0
        %2632 = vmatprep.subr.bf16.mxu0 0
        %2633 = vmatpush1.bf16.msra.mxu0 0
        %2634 = vmatprep.subr.bf16.mxu0 0
        %2635 = vmatpush1.bf16.msra.mxu0 0
        %2636 = vmatprep.subr.bf16.mxu0 0
        %2637 = vmatpush1.bf16.msra.mxu0 0
        %2638 = vmatprep.subr.bf16.mxu0 0
        %2639 = vmatpush1.bf16.msra.mxu0 0
        %2640 = vmatprep.subr.bf16.mxu0 0
        %2641 = vmatpush1.bf16.msra.mxu0 0
        %2642 = vmatprep.subr.bf16.mxu0 0
        %2643 = vmatpush1.bf16.msra.mxu0 0
        %2644 = vmatprep.subr.bf16.mxu0 0
        %2645 = vmatpush1.bf16.msra.mxu0 0
        %2646 = vmatprep.subr.bf16.mxu0 0
        %2647 = vmatpush1.bf16.msra.mxu0 0
        %2648 = vmatprep.subr.bf16.mxu0 0
        %2649 = vmatpush1.bf16.msra.mxu0 0
        %2650 = vmatprep.subr.bf16.mxu0 0
        %2651 = vmatpush1.bf16.msra.mxu0 0
        %2652 = vmatprep.subr.bf16.mxu0 0
        %2653 = vmatpush1.bf16.msra.mxu0 0
        %2654 = vmatprep.subr.bf16.mxu0 0
        %2655 = vmatpush1.bf16.msra.mxu0 0
        %2656 = vmatprep.mubr.bf16.mxu0 0
        %2657 = vmatmul.mubr.bf16.gmra.mrb[0].mxu0 %v2601
        %v2658 = vpop.f32.mrb[0].mxu0
        %v2659 = vadd.f32 0.0, %v2658
        %v2660 = vpop.f32.mrb[0].mxu0
        %v2661 = vpop.f32.mrb[0].mxu0
        %v2662 = vadd.f32 0.0, %v2661
        %v2663 = vpop.f32.mrb[0].mxu0
        %2664 = vmatprep.mubr.bf16.mxu0 0
        %2665 = vmatmul.mubr.bf16.gmra.mrb[0].mxu0 %v2604
        %v2666 = vpop.f32.mrb[0].mxu0
        %v2667 = vadd.f32 0.0, %v2666
        %v2668 = vpop.f32.mrb[0].mxu0
        %v2669 = vpop.f32.mrb[0].mxu0
        %v2670 = vadd.f32 0.0, %v2669
        %v2671 = vpop.f32.mrb[0].mxu0
        %2672 = vmatprep.mubr.bf16.mxu0 0
        %2673 = vmatmul.mubr.bf16.gmra.mrb[0].mxu0 %v2607
        %v2674 = vpop.f32.mrb[0].mxu0
        %v2675 = vadd.f32 0.0, %v2674
        %v2676 = vpop.f32.mrb[0].mxu0
        %v2677 = vpop.f32.mrb[0].mxu0
        %v2678 = vadd.f32 0.0, %v2677
        %v2679 = vpop.f32.mrb[0].mxu0
        %2680 = vmatprep.mubr.bf16.mxu0 0
        %2681 = vmatmul.mubr.bf16.gmra.mrb[0].mxu0 %v2610
        %v2682 = vpop.f32.mrb[0].mxu0
        %v2683 = vadd.f32 0.0, %v2682
        %v2684 = vpop.f32.mrb[0].mxu0
        %v2685 = vpop.f32.mrb[0].mxu0
        %v2686 = vadd.f32 0.0, %v2685
        %v2687 = vpop.f32.mrb[0].mxu0
        %2688 = vmatprep.mubr.bf16.mxu0 0
        %2689 = vmatmul.mubr.bf16.gmra.mrb[0].mxu0 %v2613
        %v2690 = vpop.f32.mrb[0].mxu0
        %v2691 = vadd.f32 0.0, %v2690
        %v2692 = vpop.f32.mrb[0].mxu0
        %v2693 = vpop.f32.mrb[0].mxu0
        %v2694 = vadd.f32 0.0, %v2693
        %v2695 = vpop.f32.mrb[0].mxu0
        %2696 = vmatprep.mubr.bf16.mxu0 0
        %2697 = vmatmul.mubr.bf16.gmra.mrb[0].mxu0 %v2616
        %v2698 = vpop.f32.mrb[0].mxu0
        %v2699 = vadd.f32 0.0, %v2698
        %v2700 = vpop.f32.mrb[0].mxu0
        %v2701 = vpop.f32.mrb[0].mxu0
        %v2702 = vadd.f32 0.0, %v2701
        %v2703 = vpop.f32.mrb[0].mxu0
        %2704 = vmatprep.mubr.bf16.mxu0 0
        %2705 = vmatmul.mubr.bf16.gmra.mrb[0].mxu0 %v2619
        %v2706 = vpop.f32.mrb[0].mxu0
        %v2707 = vadd.f32 0.0, %v2706
        %v2708 = vpop.f32.mrb[0].mxu0
        %v2709 = vpop.f32.mrb[0].mxu0
        %v2710 = vadd.f32 0.0, %v2709
        %v2711 = vpop.f32.mrb[0].mxu0
        %2712 = vmatprep.mubr.bf16.mxu0 0
        %2713 = vmatmul.mubr.bf16.gmra.mrb[0].mxu0 %v2622
        %v2714 = vpop.f32.mrb[0].mxu0
        %v2715 = vadd.f32 0.0, %v2714
        %v2716 = vpop.f32.mrb[0].mxu0
        %v2717 = vpop.f32.mrb[0].mxu0
        %v2718 = vadd.f32 0.0, %v2717
        %v2719 = vpop.f32.mrb[0].mxu0
        %2720 = vdwg.mxu0
        %v2721 = vpack.c.bf16 %v2662, %v2659
        %v2722 = vpack.c.bf16 %v2670, %v2667
        %v2723 = vpack.c.bf16 %v2678, %v2675
        %v2724 = vpack.c.bf16 %v2686, %v2683
        %v2725 = vpack.c.bf16 %v2694, %v2691
        %v2726 = vpack.c.bf16 %v2702, %v2699
        %v2727 = vpack.c.bf16 %v2710, %v2707
        %v2728 = vpack.c.bf16 %v2718, %v2715
        %2729 = vmatprep.subr.bf16.mxu0 0
        %2730 = vmatpush1.bf16.msra.mxu0 %v2721
        %2731 = vmatprep.subr.bf16.mxu0 0
        %2732 = vmatpush1.bf16.msra.mxu0 %v2722
        %2733 = vmatprep.subr.bf16.mxu0 0
        %2734 = vmatpush1.bf16.msra.mxu0 %v2723
        %2735 = vmatprep.subr.bf16.mxu0 0
        %2736 = vmatpush1.bf16.msra.mxu0 %v2724
        %2737 = vmatprep.subr.bf16.mxu0 0
        %2738 = vmatpush1.bf16.msra.mxu0 %v2725
        %2739 = vmatprep.subr.bf16.mxu0 0
        %2740 = vmatpush1.bf16.msra.mxu0 %v2726
        %2741 = vmatprep.subr.bf16.mxu0 0
        %2742 = vmatpush1.bf16.msra.mxu0 %v2727
        %2743 = vmatprep.subr.bf16.mxu0 0
        %2744 = vmatpush1.bf16.msra.mxu0 %v2728
        %2745 = vmatprep.subr.bf16.mxu0 0
        %2746 = vmatpush1.bf16.msra.mxu0 0
        %2747 = vmatprep.subr.bf16.mxu0 0
        %2748 = vmatpush1.bf16.msra.mxu0 0
        %2749 = vmatprep.subr.bf16.mxu0 0
        %2750 = vmatpush1.bf16.msra.mxu0 0
        %2751 = vmatprep.subr.bf16.mxu0 0
        %2752 = vmatpush1.bf16.msra.mxu0 0
        %2753 = vmatprep.subr.bf16.mxu0 0
        %2754 = vmatpush1.bf16.msra.mxu0 0
        %2755 = vmatprep.subr.bf16.mxu0 0
        %2756 = vmatpush1.bf16.msra.mxu0 0
        %2757 = vmatprep.subr.bf16.mxu0 0
        %2758 = vmatpush1.bf16.msra.mxu0 0
        %2759 = vmatprep.subr.bf16.mxu0 0
        %2760 = vmatpush1.bf16.msra.mxu0 0
        %2761 = vmatprep.mubr.bf16.mxu0 0
        %2762 = vmatmul.mubr.bf16.gmra.mrb[0].mxu0 %v497
        %v2763 = vpop.f32.mrb[0].mxu0
        %v2764 = vadd.f32 %v464, %v2763
        %v2765 = vpop.f32.mrb[0].mxu0
        %v2766 = vpop.f32.mrb[0].mxu0
        %v2767 = vadd.f32 %v464, %v2766
        %v2768 = vpop.f32.mrb[0].mxu0
        %2769 = vmatprep.mubr.bf16.mxu0 0
        %2770 = vmatmul.mubr.bf16.gmra.mrb[0].mxu0 %v498
        %v2771 = vpop.f32.mrb[0].mxu0
        %v2772 = vadd.f32 %v464, %v2771
        %v2773 = vpop.f32.mrb[0].mxu0
        %v2774 = vpop.f32.mrb[0].mxu0
        %v2775 = vadd.f32 %v464, %v2774
        %v2776 = vpop.f32.mrb[0].mxu0
        %2777 = vmatprep.mubr.bf16.mxu0 0
        %2778 = vmatmul.mubr.bf16.gmra.mrb[0].mxu0 %v499
        %v2779 = vpop.f32.mrb[0].mxu0
        %v2780 = vadd.f32 %v464, %v2779
        %v2781 = vpop.f32.mrb[0].mxu0
        %v2782 = vpop.f32.mrb[0].mxu0
        %v2783 = vadd.f32 %v464, %v2782
        %v2784 = vpop.f32.mrb[0].mxu0
        %2785 = vmatprep.mubr.bf16.mxu0 0
        %2786 = vmatmul.mubr.bf16.gmra.mrb[0].mxu0 %v500
        %v2787 = vpop.f32.mrb[0].mxu0
        %v2788 = vadd.f32 %v464, %v2787
        %v2789 = vpop.f32.mrb[0].mxu0
        %v2790 = vpop.f32.mrb[0].mxu0
        %v2791 = vadd.f32 %v464, %v2790
        %v2792 = vpop.f32.mrb[0].mxu0
        %2793 = vmatprep.mubr.bf16.mxu0 0
        %2794 = vmatmul.mubr.bf16.gmra.mrb[0].mxu0 %v501
        %v2795 = vpop.f32.mrb[0].mxu0
        %v2796 = vadd.f32 %v464, %v2795
        %v2797 = vpop.f32.mrb[0].mxu0
        %v2798 = vpop.f32.mrb[0].mxu0
        %v2799 = vadd.f32 %v464, %v2798
        %v2800 = vpop.f32.mrb[0].mxu0
        %2801 = vmatprep.mubr.bf16.mxu0 0
        %2802 = vmatmul.mubr.bf16.gmra.mrb[0].mxu0 %v502
        %v2803 = vpop.f32.mrb[0].mxu0
        %v2804 = vadd.f32 %v464, %v2803
        %v2805 = vpop.f32.mrb[0].mxu0
        %v2806 = vpop.f32.mrb[0].mxu0
        %v2807 = vadd.f32 %v464, %v2806
        %v2808 = vpop.f32.mrb[0].mxu0
        %2809 = vmatprep.mubr.bf16.mxu0 0
        %2810 = vmatmul.mubr.bf16.gmra.mrb[0].mxu0 %v503
        %v2811 = vpop.f32.mrb[0].mxu0
        %v2812 = vadd.f32 %v464, %v2811
        %v2813 = vpop.f32.mrb[0].mxu0
        %v2814 = vpop.f32.mrb[0].mxu0
        %v2815 = vadd.f32 %v464, %v2814
        %v2816 = vpop.f32.mrb[0].mxu0
        %2817 = vmatprep.mubr.bf16.mxu0 0
        %2818 = vmatmul.mubr.bf16.gmra.mrb[0].mxu0 %v504
        %v2819 = vpop.f32.mrb[0].mxu0
        %v2820 = vadd.f32 %v464, %v2819
        %v2821 = vpop.f32.mrb[0].mxu0
        %v2822 = vpop.f32.mrb[0].mxu0
        %v2823 = vadd.f32 %v464, %v2822
        %v2824 = vpop.f32.mrb[0].mxu0
        %2825 = vdwg.mxu0
        %v2826 = vmax.f32 %v2764, 0.0
        %v2827 = vmax.f32 %v2767, 0.0
        %v2828 = vmax.f32 %v2772, 0.0
        %v2829 = vmax.f32 %v2775, 0.0
        %v2830 = vmax.f32 %v2780, 0.0
        %v2831 = vmax.f32 %v2783, 0.0
        %v2832 = vmax.f32 %v2788, 0.0
        %v2833 = vmax.f32 %v2791, 0.0
        %v2834 = vmax.f32 %v2796, 0.0
        %v2835 = vmax.f32 %v2799, 0.0
        %v2836 = vmax.f32 %v2804, 0.0
        %v2837 = vmax.f32 %v2807, 0.0
        %v2838 = vmax.f32 %v2812, 0.0
        %v2839 = vmax.f32 %v2815, 0.0
        %v2840 = vmax.f32 %v2820, 0.0
        %v2841 = vmax.f32 %v2823, 0.0
        %v2842 = vpack.c.bf16 %v2827, %v2826
        %v2843 = vpack.c.bf16 %v2829, %v2828
        %v2844 = vpack.c.bf16 %v2831, %v2830
        %v2845 = vpack.c.bf16 %v2833, %v2832
        %v2846 = vpack.c.bf16 %v2835, %v2834
        %v2847 = vpack.c.bf16 %v2837, %v2836
        %v2848 = vpack.c.bf16 %v2839, %v2838
        %v2849 = vpack.c.bf16 %v2841, %v2840
        %2850 = vmatprep.subr.bf16.mxu0 0
        %2851 = vmatpush1.bf16.msra.mxu0 %v666
        %2852 = vmatprep.subr.bf16.mxu0 0
        %2853 = vmatpush1.bf16.msra.mxu0 %v667
        %2854 = vmatprep.subr.bf16.mxu0 0
        %2855 = vmatpush1.bf16.msra.mxu0 %v668
        %2856 = vmatprep.subr.bf16.mxu0 0
        %2857 = vmatpush1.bf16.msra.mxu0 %v669
        %2858 = vmatprep.subr.bf16.mxu0 0
        %2859 = vmatpush1.bf16.msra.mxu0 %v670
        %2860 = vmatprep.subr.bf16.mxu0 0
        %2861 = vmatpush1.bf16.msra.mxu0 %v671
        %2862 = vmatprep.subr.bf16.mxu0 0
        %2863 = vmatpush1.bf16.msra.mxu0 %v672
        %2864 = vmatprep.subr.bf16.mxu0 0
        %2865 = vmatpush1.bf16.msra.mxu0 %v673
        %2866 = vmatprep.subr.bf16.mxu0 0
        %2867 = vmatpush1.bf16.msra.mxu0 0
        %2868 = vmatprep.subr.bf16.mxu0 0
        %2869 = vmatpush1.bf16.msra.mxu0 0
        %2870 = vmatprep.subr.bf16.mxu0 0
        %2871 = vmatpush1.bf16.msra.mxu0 0
        %2872 = vmatprep.subr.bf16.mxu0 0
        %2873 = vmatpush1.bf16.msra.mxu0 0
        %2874 = vmatprep.subr.bf16.mxu0 0
        %2875 = vmatpush1.bf16.msra.mxu0 0
        %2876 = vmatprep.subr.bf16.mxu0 0
        %2877 = vmatpush1.bf16.msra.mxu0 0
        %2878 = vmatprep.subr.bf16.mxu0 0
        %2879 = vmatpush1.bf16.msra.mxu0 0
        %2880 = vmatprep.subr.bf16.mxu0 0
        %2881 = vmatpush1.bf16.msra.mxu0 0
        %2882 = vmatprep.mubr.bf16.mxu0 0
        %2883 = vmatmul.mubr.bf16.gmra.mrb[0].mxu0 %v2842
        %v2884 = vpop.f32.mrb[0].mxu0
        %v2885 = vadd.f32 0.0, %v2884
        %v2886 = vpop.f32.mrb[0].mxu0
        %v2887 = vpop.f32.mrb[0].mxu0
        %v2888 = vadd.f32 0.0, %v2887
        %v2889 = vpop.f32.mrb[0].mxu0
        %2890 = vmatprep.mubr.bf16.mxu0 0
        %2891 = vmatmul.mubr.bf16.gmra.mrb[0].mxu0 %v2843
        %v2892 = vpop.f32.mrb[0].mxu0
        %v2893 = vadd.f32 0.0, %v2892
        %v2894 = vpop.f32.mrb[0].mxu0
        %v2895 = vpop.f32.mrb[0].mxu0
        %v2896 = vadd.f32 0.0, %v2895
        %v2897 = vpop.f32.mrb[0].mxu0
        %2898 = vmatprep.mubr.bf16.mxu0 0
        %2899 = vmatmul.mubr.bf16.gmra.mrb[0].mxu0 %v2844
        %v2900 = vpop.f32.mrb[0].mxu0
        %v2901 = vadd.f32 0.0, %v2900
        %v2902 = vpop.f32.mrb[0].mxu0
        %v2903 = vpop.f32.mrb[0].mxu0
        %v2904 = vadd.f32 0.0, %v2903
        %v2905 = vpop.f32.mrb[0].mxu0
        %2906 = vmatprep.mubr.bf16.mxu0 0
        %2907 = vmatmul.mubr.bf16.gmra.mrb[0].mxu0 %v2845
        %v2908 = vpop.f32.mrb[0].mxu0
        %v2909 = vadd.f32 0.0, %v2908
        %v2910 = vpop.f32.mrb[0].mxu0
        %v2911 = vpop.f32.mrb[0].mxu0
        %v2912 = vadd.f32 0.0, %v2911
        %v2913 = vpop.f32.mrb[0].mxu0
        %2914 = vmatprep.mubr.bf16.mxu0 0
        %2915 = vmatmul.mubr.bf16.gmra.mrb[0].mxu0 %v2846
        %v2916 = vpop.f32.mrb[0].mxu0
        %v2917 = vadd.f32 0.0, %v2916
        %v2918 = vpop.f32.mrb[0].mxu0
        %v2919 = vpop.f32.mrb[0].mxu0
        %v2920 = vadd.f32 0.0, %v2919
        %v2921 = vpop.f32.mrb[0].mxu0
        %2922 = vmatprep.mubr.bf16.mxu0 0
        %2923 = vmatmul.mubr.bf16.gmra.mrb[0].mxu0 %v2847
        %v2924 = vpop.f32.mrb[0].mxu0
        %v2925 = vadd.f32 0.0, %v2924
        %v2926 = vpop.f32.mrb[0].mxu0
        %v2927 = vpop.f32.mrb[0].mxu0
        %v2928 = vadd.f32 0.0, %v2927
        %v2929 = vpop.f32.mrb[0].mxu0
        %2930 = vmatprep.mubr.bf16.mxu0 0
        %2931 = vmatmul.mubr.bf16.gmra.mrb[0].mxu0 %v2848
        %v2932 = vpop.f32.mrb[0].mxu0
        %v2933 = vadd.f32 0.0, %v2932
        %v2934 = vpop.f32.mrb[0].mxu0
        %v2935 = vpop.f32.mrb[0].mxu0
        %v2936 = vadd.f32 0.0, %v2935
        %v2937 = vpop.f32.mrb[0].mxu0
        %2938 = vmatprep.mubr.bf16.mxu0 0
        %2939 = vmatmul.mubr.bf16.gmra.mrb[0].mxu0 %v2849
        %v2940 = vpop.f32.mrb[0].mxu0
        %v2941 = vadd.f32 0.0, %v2940
        %v2942 = vpop.f32.mrb[0].mxu0
        %v2943 = vpop.f32.mrb[0].mxu0
        %v2944 = vadd.f32 0.0, %v2943
        %v2945 = vpop.f32.mrb[0].mxu0
        %2946 = vdwg.mxu0
        %v2947 = vpack.c.bf16 %v2888, %v2885
        %v2948 = vpack.c.bf16 %v2896, %v2893
        %v2949 = vpack.c.bf16 %v2904, %v2901
        %v2950 = vpack.c.bf16 %v2912, %v2909
        %v2951 = vpack.c.bf16 %v2920, %v2917
        %v2952 = vpack.c.bf16 %v2928, %v2925
        %v2953 = vpack.c.bf16 %v2936, %v2933
        %v2954 = vpack.c.bf16 %v2944, %v2941
        %2955 = vmatprep.subr.bf16.mxu0 0
        %2956 = vmatpush1.bf16.msra.mxu0 %v2947
        %2957 = vmatprep.subr.bf16.mxu0 0
        %2958 = vmatpush1.bf16.msra.mxu0 %v2948
        %2959 = vmatprep.subr.bf16.mxu0 0
        %2960 = vmatpush1.bf16.msra.mxu0 %v2949
        %2961 = vmatprep.subr.bf16.mxu0 0
        %2962 = vmatpush1.bf16.msra.mxu0 %v2950
        %2963 = vmatprep.subr.bf16.mxu0 0
        %2964 = vmatpush1.bf16.msra.mxu0 %v2951
        %2965 = vmatprep.subr.bf16.mxu0 0
        %2966 = vmatpush1.bf16.msra.mxu0 %v2952
        %2967 = vmatprep.subr.bf16.mxu0 0
        %2968 = vmatpush1.bf16.msra.mxu0 %v2953
        %2969 = vmatprep.subr.bf16.mxu0 0
        %2970 = vmatpush1.bf16.msra.mxu0 %v2954
        %2971 = vmatprep.subr.bf16.mxu0 0
        %2972 = vmatpush1.bf16.msra.mxu0 0
        %2973 = vmatprep.subr.bf16.mxu0 0
        %2974 = vmatpush1.bf16.msra.mxu0 0
        %2975 = vmatprep.subr.bf16.mxu0 0
        %2976 = vmatpush1.bf16.msra.mxu0 0
        %2977 = vmatprep.subr.bf16.mxu0 0
        %2978 = vmatpush1.bf16.msra.mxu0 0
        %2979 = vmatprep.subr.bf16.mxu0 0
        %2980 = vmatpush1.bf16.msra.mxu0 0
        %2981 = vmatprep.subr.bf16.mxu0 0
        %2982 = vmatpush1.bf16.msra.mxu0 0
        %2983 = vmatprep.subr.bf16.mxu0 0
        %2984 = vmatpush1.bf16.msra.mxu0 0
        %2985 = vmatprep.subr.bf16.mxu0 0
        %2986 = vmatpush1.bf16.msra.mxu0 0
        %2987 = vmatprep.mubr.bf16.mxu0 0
        %2988 = vmatmul.mubr.bf16.gmra.mrb[0].mxu0 %v497
        %v2989 = vpop.f32.mrb[0].mxu0
        %v2990 = vadd.f32 %v790, %v2989
        %v2991 = vpop.f32.mrb[0].mxu0
        %v2992 = vpop.f32.mrb[0].mxu0
        %v2993 = vadd.f32 %v790, %v2992
        %v2994 = vpop.f32.mrb[0].mxu0
        %2995 = vmatprep.mubr.bf16.mxu0 0
        %2996 = vmatmul.mubr.bf16.gmra.mrb[0].mxu0 %v498
        %v2997 = vpop.f32.mrb[0].mxu0
        %v2998 = vadd.f32 %v790, %v2997
        %v2999 = vpop.f32.mrb[0].mxu0
        %v3000 = vpop.f32.mrb[0].mxu0
        %v3001 = vadd.f32 %v790, %v3000
        %v3002 = vpop.f32.mrb[0].mxu0
        %3003 = vmatprep.mubr.bf16.mxu0 0
        %3004 = vmatmul.mubr.bf16.gmra.mrb[0].mxu0 %v499
        %v3005 = vpop.f32.mrb[0].mxu0
        %v3006 = vadd.f32 %v790, %v3005
        %v3007 = vpop.f32.mrb[0].mxu0
        %v3008 = vpop.f32.mrb[0].mxu0
        %v3009 = vadd.f32 %v790, %v3008
        %v3010 = vpop.f32.mrb[0].mxu0
        %3011 = vmatprep.mubr.bf16.mxu0 0
        %3012 = vmatmul.mubr.bf16.gmra.mrb[0].mxu0 %v500
        %v3013 = vpop.f32.mrb[0].mxu0
        %v3014 = vadd.f32 %v790, %v3013
        %v3015 = vpop.f32.mrb[0].mxu0
        %v3016 = vpop.f32.mrb[0].mxu0
        %v3017 = vadd.f32 %v790, %v3016
        %v3018 = vpop.f32.mrb[0].mxu0
        %3019 = vmatprep.mubr.bf16.mxu0 0
        %3020 = vmatmul.mubr.bf16.gmra.mrb[0].mxu0 %v501
        %v3021 = vpop.f32.mrb[0].mxu0
        %v3022 = vadd.f32 %v790, %v3021
        %v3023 = vpop.f32.mrb[0].mxu0
        %v3024 = vpop.f32.mrb[0].mxu0
        %v3025 = vadd.f32 %v790, %v3024
        %v3026 = vpop.f32.mrb[0].mxu0
        %3027 = vmatprep.mubr.bf16.mxu0 0
        %3028 = vmatmul.mubr.bf16.gmra.mrb[0].mxu0 %v502
        %v3029 = vpop.f32.mrb[0].mxu0
        %v3030 = vadd.f32 %v790, %v3029
        %v3031 = vpop.f32.mrb[0].mxu0
        %v3032 = vpop.f32.mrb[0].mxu0
        %v3033 = vadd.f32 %v790, %v3032
        %v3034 = vpop.f32.mrb[0].mxu0
        %3035 = vmatprep.mubr.bf16.mxu0 0
        %3036 = vmatmul.mubr.bf16.gmra.mrb[0].mxu0 %v503
        %v3037 = vpop.f32.mrb[0].mxu0
        %v3038 = vadd.f32 %v790, %v3037
        %v3039 = vpop.f32.mrb[0].mxu0
        %v3040 = vpop.f32.mrb[0].mxu0
        %v3041 = vadd.f32 %v790, %v3040
        %v3042 = vpop.f32.mrb[0].mxu0
        %3043 = vmatprep.mubr.bf16.mxu0 0
        %3044 = vmatmul.mubr.bf16.gmra.mrb[0].mxu0 %v504
        %v3045 = vpop.f32.mrb[0].mxu0
        %v3046 = vadd.f32 %v790, %v3045
        %v3047 = vpop.f32.mrb[0].mxu0
        %v3048 = vpop.f32.mrb[0].mxu0
        %v3049 = vadd.f32 %v790, %v3048
        %v3050 = vpop.f32.mrb[0].mxu0
        %3051 = vdwg.mxu0
        %3052 = vxpose.xlu0.b32.start [1/16] %v2990, 128
        %3053 = vxpose.xlu0.b32.cont [2/16] %v2993, 128
        %3054 = vxpose.xlu0.b32.cont [3/16] %v2998, 128
        %3055 = vxpose.xlu0.b32.cont [4/16] %v3001, 128
        %3056 = vxpose.xlu0.b32.cont [5/16] %v3006, 128
        %3057 = vxpose.xlu0.b32.cont [6/16] %v3009, 128
        %3058 = vxpose.xlu0.b32.cont [7/16] %v3014, 128
        %3059 = vxpose.xlu0.b32.cont [8/16] %v3017, 128
        %3060 = vxpose.xlu0.b32.cont [9/16] %v3022, 128
        %3061 = vxpose.xlu0.b32.cont [10/16] %v3025, 128
        %3062 = vxpose.xlu0.b32.cont [11/16] %v3030, 128
        %3063 = vxpose.xlu0.b32.cont [12/16] %v3033, 128
        %3064 = vxpose.xlu0.b32.cont [13/16] %v3038, 128
        %3065 = vxpose.xlu0.b32.cont [14/16] %v3041, 128
        %3066 = vxpose.xlu0.b32.cont [15/16] %v3046, 128
        %3067 = vxpose.xlu0.b32.end [16/16] %v3049, 128
        %v3068 = vpop.trf.xlu0
        %v3069 = vpop.trf.xlu0
        %v3070 = vpop.trf.xlu0
        %v3071 = vpop.trf.xlu0
        %v3072 = vpop.trf.xlu0
        %v3073 = vpop.trf.xlu0
        %v3074 = vpop.trf.xlu0
        %v3075 = vpop.trf.xlu0
        %v3076 = vpop.trf.xlu0
        %v3077 = vpop.trf.xlu0
        %v3078 = vpop.trf.xlu0
        %v3079 = vpop.trf.xlu0
        %v3080 = vpop.trf.xlu0
        %v3081 = vpop.trf.xlu0
        %v3082 = vpop.trf.xlu0
        %v3083 = vpop.trf.xlu0
        %3084 = vst [vmem:[%s218 + $0x4] sm:$0x1] %v3068
        %v3085 = vld [vmem:[%s223 + $0x140] sm:$0xf]
        %v3086 = vld [vmem:[%s223 + $0x144] sm:$0xf]
        %v3087 = vld [vmem:[%s223 + $0x148] sm:$0xf]
        %v3088 = vld [vmem:[%s223 + $0x14c] sm:$0xf]
        %v3089 = vld [vmem:[%s223 + $0x150] sm:$0xf]
        %v3090 = vld [vmem:[%s223 + $0x154] sm:$0xf]
        %v3091 = vld [vmem:[%s223 + $0x158] sm:$0xf]
        %v3092 = vld [vmem:[%s223 + $0x15c] sm:$0xf]
        %v3093 = vld [vmem:[%s223 + $0x160] sm:$0xf]
        %v3094 = vld [vmem:[%s223 + $0x164] sm:$0xf]
        %v3095 = vld [vmem:[%s223 + $0x168] sm:$0xf]
        %v3096 = vld [vmem:[%s223 + $0x16c] sm:$0xf]
        %v3097 = vld [vmem:[%s223 + $0x170] sm:$0xf]
        %v3098 = vld [vmem:[%s223 + $0x174] sm:$0xf]
        %v3099 = vld [vmem:[%s223 + $0x178] sm:$0xf]
        %v3100 = vld [vmem:[%s223 + $0x17c] sm:$0xf]
        %v3117 = vunpack.c.l.b16 %v3085
        %v3118 = vunpack.c.l.b16 %v3086
        %v3119 = vunpack.c.l.b16 %v3087
        %v3120 = vunpack.c.l.b16 %v3088
        %v3121 = vunpack.c.l.b16 %v3089
        %v3122 = vunpack.c.l.b16 %v3090
        %v3123 = vunpack.c.l.b16 %v3091
        %v3124 = vunpack.c.l.b16 %v3092
        %v3125 = vunpack.c.l.b16 %v3093
        %v3126 = vunpack.c.l.b16 %v3094
        %v3127 = vunpack.c.l.b16 %v3095
        %v3128 = vunpack.c.l.b16 %v3096
        %v3129 = vunpack.c.l.b16 %v3097
        %v3130 = vunpack.c.l.b16 %v3098
        %v3131 = vunpack.c.l.b16 %v3099
        %v3132 = vunpack.c.l.b16 %v3100
        %v3133 = vpack.c.b16 %v3118, %v3117
        %v3134 = vpack.c.b16 %v3120, %v3119
        %v3135 = vpack.c.b16 %v3122, %v3121
        %v3136 = vpack.c.b16 %v3124, %v3123
        %v3137 = vpack.c.b16 %v3126, %v3125
        %v3138 = vpack.c.b16 %v3128, %v3127
        %v3139 = vpack.c.b16 %v3130, %v3129
        %v3140 = vpack.c.b16 %v3132, %v3131
        %v3142 = vsel %vm331, %v3133, 0
        %v3145 = vsel %vm331, %v3134, 0
        %v3148 = vsel %vm331, %v3135, 0
        %v3151 = vsel %vm331, %v3136, 0
        %v3154 = vsel %vm331, %v3137, 0
        %v3157 = vsel %vm331, %v3138, 0
        %v3160 = vsel %vm331, %v3139, 0
        %v3163 = vsel %vm331, %v3140, 0
        %3165 = vmatprep.subr.bf16.mxu0 0
        %3166 = vmatpush1.bf16.msra.mxu0 %v327
        %3167 = vmatprep.subr.bf16.mxu0 0
        %3168 = vmatpush1.bf16.msra.mxu0 %v328
        %3169 = vmatprep.subr.bf16.mxu0 0
        %3170 = vmatpush1.bf16.msra.mxu0 0
        %3171 = vmatprep.subr.bf16.mxu0 0
        %3172 = vmatpush1.bf16.msra.mxu0 0
        %3173 = vmatprep.subr.bf16.mxu0 0
        %3174 = vmatpush1.bf16.msra.mxu0 0
        %3175 = vmatprep.subr.bf16.mxu0 0
        %3176 = vmatpush1.bf16.msra.mxu0 0
        %3177 = vmatprep.subr.bf16.mxu0 0
        %3178 = vmatpush1.bf16.msra.mxu0 0
        %3179 = vmatprep.subr.bf16.mxu0 0
        %3180 = vmatpush1.bf16.msra.mxu0 0
        %3181 = vmatprep.subr.bf16.mxu0 0
        %3182 = vmatpush1.bf16.msra.mxu0 0
        %3183 = vmatprep.subr.bf16.mxu0 0
        %3184 = vmatpush1.bf16.msra.mxu0 0
        %3185 = vmatprep.subr.bf16.mxu0 0
        %3186 = vmatpush1.bf16.msra.mxu0 0
        %3187 = vmatprep.subr.bf16.mxu0 0
        %3188 = vmatpush1.bf16.msra.mxu0 0
        %3189 = vmatprep.subr.bf16.mxu0 0
        %3190 = vmatpush1.bf16.msra.mxu0 0
        %3191 = vmatprep.subr.bf16.mxu0 0
        %3192 = vmatpush1.bf16.msra.mxu0 0
        %3193 = vmatprep.subr.bf16.mxu0 0
        %3194 = vmatpush1.bf16.msra.mxu0 0
        %3195 = vmatprep.subr.bf16.mxu0 0
        %3196 = vmatpush1.bf16.msra.mxu0 0
        %3197 = vmatprep.mubr.bf16.mxu0 0
        %3198 = vmatmul.mubr.bf16.gmra.mrb[0].mxu0 %v3142
        %v3199 = vpop.f32.mrb[0].mxu0
        %v3200 = vadd.f32 0.0, %v3199
        %v3201 = vpop.f32.mrb[0].mxu0
        %v3202 = vpop.f32.mrb[0].mxu0
        %v3203 = vadd.f32 0.0, %v3202
        %v3204 = vpop.f32.mrb[0].mxu0
        %3205 = vmatprep.mubr.bf16.mxu0 0
        %3206 = vmatmul.mubr.bf16.gmra.mrb[0].mxu0 %v3145
        %v3207 = vpop.f32.mrb[0].mxu0
        %v3208 = vadd.f32 0.0, %v3207
        %v3209 = vpop.f32.mrb[0].mxu0
        %v3210 = vpop.f32.mrb[0].mxu0
        %v3211 = vadd.f32 0.0, %v3210
        %v3212 = vpop.f32.mrb[0].mxu0
        %3213 = vmatprep.mubr.bf16.mxu0 0
        %3214 = vmatmul.mubr.bf16.gmra.mrb[0].mxu0 %v3148
        %v3215 = vpop.f32.mrb[0].mxu0
        %v3216 = vadd.f32 0.0, %v3215
        %v3217 = vpop.f32.mrb[0].mxu0
        %v3218 = vpop.f32.mrb[0].mxu0
        %v3219 = vadd.f32 0.0, %v3218
        %v3220 = vpop.f32.mrb[0].mxu0
        %3221 = vmatprep.mubr.bf16.mxu0 0
        %3222 = vmatmul.mubr.bf16.gmra.mrb[0].mxu0 %v3151
        %v3223 = vpop.f32.mrb[0].mxu0
        %v3224 = vadd.f32 0.0, %v3223
        %v3225 = vpop.f32.mrb[0].mxu0
        %v3226 = vpop.f32.mrb[0].mxu0
        %v3227 = vadd.f32 0.0, %v3226
        %v3228 = vpop.f32.mrb[0].mxu0
        %3229 = vmatprep.mubr.bf16.mxu0 0
        %3230 = vmatmul.mubr.bf16.gmra.mrb[0].mxu0 %v3154
        %v3231 = vpop.f32.mrb[0].mxu0
        %v3232 = vadd.f32 0.0, %v3231
        %v3233 = vpop.f32.mrb[0].mxu0
        %v3234 = vpop.f32.mrb[0].mxu0
        %v3235 = vadd.f32 0.0, %v3234
        %v3236 = vpop.f32.mrb[0].mxu0
        %3237 = vmatprep.mubr.bf16.mxu0 0
        %3238 = vmatmul.mubr.bf16.gmra.mrb[0].mxu0 %v3157
        %v3239 = vpop.f32.mrb[0].mxu0
        %v3240 = vadd.f32 0.0, %v3239
        %v3241 = vpop.f32.mrb[0].mxu0
        %v3242 = vpop.f32.mrb[0].mxu0
        %v3243 = vadd.f32 0.0, %v3242
        %v3244 = vpop.f32.mrb[0].mxu0
        %3245 = vmatprep.mubr.bf16.mxu0 0
        %3246 = vmatmul.mubr.bf16.gmra.mrb[0].mxu0 %v3160
        %v3247 = vpop.f32.mrb[0].mxu0
        %v3248 = vadd.f32 0.0, %v3247
        %v3249 = vpop.f32.mrb[0].mxu0
        %v3250 = vpop.f32.mrb[0].mxu0
        %v3251 = vadd.f32 0.0, %v3250
        %v3252 = vpop.f32.mrb[0].mxu0
        %3253 = vmatprep.mubr.bf16.mxu0 0
        %3254 = vmatmul.mubr.bf16.gmra.mrb[0].mxu0 %v3163
        %v3255 = vpop.f32.mrb[0].mxu0
        %v3256 = vadd.f32 0.0, %v3255
        %v3257 = vpop.f32.mrb[0].mxu0
        %v3258 = vpop.f32.mrb[0].mxu0
        %v3259 = vadd.f32 0.0, %v3258
        %v3260 = vpop.f32.mrb[0].mxu0
        %3261 = vdwg.mxu0
        %v3262 = vpack.c.bf16 %v3203, %v3200
        %v3263 = vpack.c.bf16 %v3211, %v3208
        %v3264 = vpack.c.bf16 %v3219, %v3216
        %v3265 = vpack.c.bf16 %v3227, %v3224
        %v3266 = vpack.c.bf16 %v3235, %v3232
        %v3267 = vpack.c.bf16 %v3243, %v3240
        %v3268 = vpack.c.bf16 %v3251, %v3248
        %v3269 = vpack.c.bf16 %v3259, %v3256
        %3270 = vmatprep.subr.bf16.mxu0 0
        %3271 = vmatpush1.bf16.msra.mxu0 %v3262
        %3272 = vmatprep.subr.bf16.mxu0 0
        %3273 = vmatpush1.bf16.msra.mxu0 %v3263
        %3274 = vmatprep.subr.bf16.mxu0 0
        %3275 = vmatpush1.bf16.msra.mxu0 %v3264
        %3276 = vmatprep.subr.bf16.mxu0 0
        %3277 = vmatpush1.bf16.msra.mxu0 %v3265
        %3278 = vmatprep.subr.bf16.mxu0 0
        %3279 = vmatpush1.bf16.msra.mxu0 %v3266
        %3280 = vmatprep.subr.bf16.mxu0 0
        %3281 = vmatpush1.bf16.msra.mxu0 %v3267
        %3282 = vmatprep.subr.bf16.mxu0 0
        %3283 = vmatpush1.bf16.msra.mxu0 %v3268
        %3284 = vmatprep.subr.bf16.mxu0 0
        %3285 = vmatpush1.bf16.msra.mxu0 %v3269
        %3286 = vmatprep.subr.bf16.mxu0 0
        %3287 = vmatpush1.bf16.msra.mxu0 0
        %3288 = vmatprep.subr.bf16.mxu0 0
        %3289 = vmatpush1.bf16.msra.mxu0 0
        %3290 = vmatprep.subr.bf16.mxu0 0
        %3291 = vmatpush1.bf16.msra.mxu0 0
        %3292 = vmatprep.subr.bf16.mxu0 0
        %3293 = vmatpush1.bf16.msra.mxu0 0
        %3294 = vmatprep.subr.bf16.mxu0 0
        %3295 = vmatpush1.bf16.msra.mxu0 0
        %3296 = vmatprep.subr.bf16.mxu0 0
        %3297 = vmatpush1.bf16.msra.mxu0 0
        %3298 = vmatprep.subr.bf16.mxu0 0
        %3299 = vmatpush1.bf16.msra.mxu0 0
        %3300 = vmatprep.subr.bf16.mxu0 0
        %3301 = vmatpush1.bf16.msra.mxu0 0
        %3302 = vmatprep.mubr.bf16.mxu0 0
        %3303 = vmatmul.mubr.bf16.gmra.mrb[0].mxu0 %v497
        %v3304 = vpop.f32.mrb[0].mxu0
        %v3305 = vadd.f32 %v464, %v3304
        %v3306 = vpop.f32.mrb[0].mxu0
        %v3307 = vpop.f32.mrb[0].mxu0
        %v3308 = vadd.f32 %v464, %v3307
        %v3309 = vpop.f32.mrb[0].mxu0
        %3310 = vmatprep.mubr.bf16.mxu0 0
        %3311 = vmatmul.mubr.bf16.gmra.mrb[0].mxu0 %v498
        %v3312 = vpop.f32.mrb[0].mxu0
        %v3313 = vadd.f32 %v464, %v3312
        %v3314 = vpop.f32.mrb[0].mxu0
        %v3315 = vpop.f32.mrb[0].mxu0
        %v3316 = vadd.f32 %v464, %v3315
        %v3317 = vpop.f32.mrb[0].mxu0
        %3318 = vmatprep.mubr.bf16.mxu0 0
        %3319 = vmatmul.mubr.bf16.gmra.mrb[0].mxu0 %v499
        %v3320 = vpop.f32.mrb[0].mxu0
        %v3321 = vadd.f32 %v464, %v3320
        %v3322 = vpop.f32.mrb[0].mxu0
        %v3323 = vpop.f32.mrb[0].mxu0
        %v3324 = vadd.f32 %v464, %v3323
        %v3325 = vpop.f32.mrb[0].mxu0
        %3326 = vmatprep.mubr.bf16.mxu0 0
        %3327 = vmatmul.mubr.bf16.gmra.mrb[0].mxu0 %v500
        %v3328 = vpop.f32.mrb[0].mxu0
        %v3329 = vadd.f32 %v464, %v3328
        %v3330 = vpop.f32.mrb[0].mxu0
        %v3331 = vpop.f32.mrb[0].mxu0
        %v3332 = vadd.f32 %v464, %v3331
        %v3333 = vpop.f32.mrb[0].mxu0
        %3334 = vmatprep.mubr.bf16.mxu0 0
        %3335 = vmatmul.mubr.bf16.gmra.mrb[0].mxu0 %v501
        %v3336 = vpop.f32.mrb[0].mxu0
        %v3337 = vadd.f32 %v464, %v3336
        %v3338 = vpop.f32.mrb[0].mxu0
        %v3339 = vpop.f32.mrb[0].mxu0
        %v3340 = vadd.f32 %v464, %v3339
        %v3341 = vpop.f32.mrb[0].mxu0
        %3342 = vmatprep.mubr.bf16.mxu0 0
        %3343 = vmatmul.mubr.bf16.gmra.mrb[0].mxu0 %v502
        %v3344 = vpop.f32.mrb[0].mxu0
        %v3345 = vadd.f32 %v464, %v3344
        %v3346 = vpop.f32.mrb[0].mxu0
        %v3347 = vpop.f32.mrb[0].mxu0
        %v3348 = vadd.f32 %v464, %v3347
        %v3349 = vpop.f32.mrb[0].mxu0
        %3350 = vmatprep.mubr.bf16.mxu0 0
        %3351 = vmatmul.mubr.bf16.gmra.mrb[0].mxu0 %v503
        %v3352 = vpop.f32.mrb[0].mxu0
        %v3353 = vadd.f32 %v464, %v3352
        %v3354 = vpop.f32.mrb[0].mxu0
        %v3355 = vpop.f32.mrb[0].mxu0
        %v3356 = vadd.f32 %v464, %v3355
        %v3357 = vpop.f32.mrb[0].mxu0
        %3358 = vmatprep.mubr.bf16.mxu0 0
        %3359 = vmatmul.mubr.bf16.gmra.mrb[0].mxu0 %v504
        %v3360 = vpop.f32.mrb[0].mxu0
        %v3361 = vadd.f32 %v464, %v3360
        %v3362 = vpop.f32.mrb[0].mxu0
        %v3363 = vpop.f32.mrb[0].mxu0
        %v3364 = vadd.f32 %v464, %v3363
        %v3365 = vpop.f32.mrb[0].mxu0
        %3366 = vdwg.mxu0
        %v3367 = vmax.f32 %v3305, 0.0
        %v3368 = vmax.f32 %v3308, 0.0
        %v3369 = vmax.f32 %v3313, 0.0
        %v3370 = vmax.f32 %v3316, 0.0
        %v3371 = vmax.f32 %v3321, 0.0
        %v3372 = vmax.f32 %v3324, 0.0
        %v3373 = vmax.f32 %v3329, 0.0
        %v3374 = vmax.f32 %v3332, 0.0
        %v3375 = vmax.f32 %v3337, 0.0
        %v3376 = vmax.f32 %v3340, 0.0
        %v3377 = vmax.f32 %v3345, 0.0
        %v3378 = vmax.f32 %v3348, 0.0
        %v3379 = vmax.f32 %v3353, 0.0
        %v3380 = vmax.f32 %v3356, 0.0
        %v3381 = vmax.f32 %v3361, 0.0
        %v3382 = vmax.f32 %v3364, 0.0
        %v3383 = vpack.c.bf16 %v3368, %v3367
        %v3384 = vpack.c.bf16 %v3370, %v3369
        %v3385 = vpack.c.bf16 %v3372, %v3371
        %v3386 = vpack.c.bf16 %v3374, %v3373
        %v3387 = vpack.c.bf16 %v3376, %v3375
        %v3388 = vpack.c.bf16 %v3378, %v3377
        %v3389 = vpack.c.bf16 %v3380, %v3379
        %v3390 = vpack.c.bf16 %v3382, %v3381
        %3391 = vmatprep.subr.bf16.mxu0 0
        %3392 = vmatpush1.bf16.msra.mxu0 %v666
        %3393 = vmatprep.subr.bf16.mxu0 0
        %3394 = vmatpush1.bf16.msra.mxu0 %v667
        %3395 = vmatprep.subr.bf16.mxu0 0
        %3396 = vmatpush1.bf16.msra.mxu0 %v668
        %3397 = vmatprep.subr.bf16.mxu0 0
        %3398 = vmatpush1.bf16.msra.mxu0 %v669
        %3399 = vmatprep.subr.bf16.mxu0 0
        %3400 = vmatpush1.bf16.msra.mxu0 %v670
        %3401 = vmatprep.subr.bf16.mxu0 0
        %3402 = vmatpush1.bf16.msra.mxu0 %v671
        %3403 = vmatprep.subr.bf16.mxu0 0
        %3404 = vmatpush1.bf16.msra.mxu0 %v672
        %3405 = vmatprep.subr.bf16.mxu0 0
        %3406 = vmatpush1.bf16.msra.mxu0 %v673
        %3407 = vmatprep.subr.bf16.mxu0 0
        %3408 = vmatpush1.bf16.msra.mxu0 0
        %3409 = vmatprep.subr.bf16.mxu0 0
        %3410 = vmatpush1.bf16.msra.mxu0 0
        %3411 = vmatprep.subr.bf16.mxu0 0
        %3412 = vmatpush1.bf16.msra.mxu0 0
        %3413 = vmatprep.subr.bf16.mxu0 0
        %3414 = vmatpush1.bf16.msra.mxu0 0
        %3415 = vmatprep.subr.bf16.mxu0 0
        %3416 = vmatpush1.bf16.msra.mxu0 0
        %3417 = vmatprep.subr.bf16.mxu0 0
        %3418 = vmatpush1.bf16.msra.mxu0 0
        %3419 = vmatprep.subr.bf16.mxu0 0
        %3420 = vmatpush1.bf16.msra.mxu0 0
        %3421 = vmatprep.subr.bf16.mxu0 0
        %3422 = vmatpush1.bf16.msra.mxu0 0
        %3423 = vmatprep.mubr.bf16.mxu0 0
        %3424 = vmatmul.mubr.bf16.gmra.mrb[0].mxu0 %v3383
        %v3425 = vpop.f32.mrb[0].mxu0
        %v3426 = vadd.f32 0.0, %v3425
        %v3427 = vpop.f32.mrb[0].mxu0
        %v3428 = vpop.f32.mrb[0].mxu0
        %v3429 = vadd.f32 0.0, %v3428
        %v3430 = vpop.f32.mrb[0].mxu0
        %3431 = vmatprep.mubr.bf16.mxu0 0
        %3432 = vmatmul.mubr.bf16.gmra.mrb[0].mxu0 %v3384
        %v3433 = vpop.f32.mrb[0].mxu0
        %v3434 = vadd.f32 0.0, %v3433
        %v3435 = vpop.f32.mrb[0].mxu0
        %v3436 = vpop.f32.mrb[0].mxu0
        %v3437 = vadd.f32 0.0, %v3436
        %v3438 = vpop.f32.mrb[0].mxu0
        %3439 = vmatprep.mubr.bf16.mxu0 0
        %3440 = vmatmul.mubr.bf16.gmra.mrb[0].mxu0 %v3385
        %v3441 = vpop.f32.mrb[0].mxu0
        %v3442 = vadd.f32 0.0, %v3441
        %v3443 = vpop.f32.mrb[0].mxu0
        %v3444 = vpop.f32.mrb[0].mxu0
        %v3445 = vadd.f32 0.0, %v3444
        %v3446 = vpop.f32.mrb[0].mxu0
        %3447 = vmatprep.mubr.bf16.mxu0 0
        %3448 = vmatmul.mubr.bf16.gmra.mrb[0].mxu0 %v3386
        %v3449 = vpop.f32.mrb[0].mxu0
        %v3450 = vadd.f32 0.0, %v3449
        %v3451 = vpop.f32.mrb[0].mxu0
        %v3452 = vpop.f32.mrb[0].mxu0
        %v3453 = vadd.f32 0.0, %v3452
        %v3454 = vpop.f32.mrb[0].mxu0
        %3455 = vmatprep.mubr.bf16.mxu0 0
        %3456 = vmatmul.mubr.bf16.gmra.mrb[0].mxu0 %v3387
        %v3457 = vpop.f32.mrb[0].mxu0
        %v3458 = vadd.f32 0.0, %v3457
        %v3459 = vpop.f32.mrb[0].mxu0
        %v3460 = vpop.f32.mrb[0].mxu0
        %v3461 = vadd.f32 0.0, %v3460
        %v3462 = vpop.f32.mrb[0].mxu0
        %3463 = vmatprep.mubr.bf16.mxu0 0
        %3464 = vmatmul.mubr.bf16.gmra.mrb[0].mxu0 %v3388
        %v3465 = vpop.f32.mrb[0].mxu0
        %v3466 = vadd.f32 0.0, %v3465
        %v3467 = vpop.f32.mrb[0].mxu0
        %v3468 = vpop.f32.mrb[0].mxu0
        %v3469 = vadd.f32 0.0, %v3468
        %v3470 = vpop.f32.mrb[0].mxu0
        %3471 = vmatprep.mubr.bf16.mxu0 0
        %3472 = vmatmul.mubr.bf16.gmra.mrb[0].mxu0 %v3389
        %v3473 = vpop.f32.mrb[0].mxu0
        %v3474 = vadd.f32 0.0, %v3473
        %v3475 = vpop.f32.mrb[0].mxu0
        %v3476 = vpop.f32.mrb[0].mxu0
        %v3477 = vadd.f32 0.0, %v3476
        %v3478 = vpop.f32.mrb[0].mxu0
        %3479 = vmatprep.mubr.bf16.mxu0 0
        %3480 = vmatmul.mubr.bf16.gmra.mrb[0].mxu0 %v3390
        %v3481 = vpop.f32.mrb[0].mxu0
        %v3482 = vadd.f32 0.0, %v3481
        %v3483 = vpop.f32.mrb[0].mxu0
        %v3484 = vpop.f32.mrb[0].mxu0
        %v3485 = vadd.f32 0.0, %v3484
        %v3486 = vpop.f32.mrb[0].mxu0
        %3487 = vdwg.mxu0
        %v3488 = vpack.c.bf16 %v3429, %v3426
        %v3489 = vpack.c.bf16 %v3437, %v3434
        %v3490 = vpack.c.bf16 %v3445, %v3442
        %v3491 = vpack.c.bf16 %v3453, %v3450
        %v3492 = vpack.c.bf16 %v3461, %v3458
        %v3493 = vpack.c.bf16 %v3469, %v3466
        %v3494 = vpack.c.bf16 %v3477, %v3474
        %v3495 = vpack.c.bf16 %v3485, %v3482
        %3496 = vmatprep.subr.bf16.mxu0 0
        %3497 = vmatpush1.bf16.msra.mxu0 %v3488
        %3498 = vmatprep.subr.bf16.mxu0 0
        %3499 = vmatpush1.bf16.msra.mxu0 %v3489
        %3500 = vmatprep.subr.bf16.mxu0 0
        %3501 = vmatpush1.bf16.msra.mxu0 %v3490
        %3502 = vmatprep.subr.bf16.mxu0 0
        %3503 = vmatpush1.bf16.msra.mxu0 %v3491
        %3504 = vmatprep.subr.bf16.mxu0 0
        %3505 = vmatpush1.bf16.msra.mxu0 %v3492
        %3506 = vmatprep.subr.bf16.mxu0 0
        %3507 = vmatpush1.bf16.msra.mxu0 %v3493
        %3508 = vmatprep.subr.bf16.mxu0 0
        %3509 = vmatpush1.bf16.msra.mxu0 %v3494
        %3510 = vmatprep.subr.bf16.mxu0 0
        %3511 = vmatpush1.bf16.msra.mxu0 %v3495
        %3512 = vmatprep.subr.bf16.mxu0 0
        %3513 = vmatpush1.bf16.msra.mxu0 0
        %3514 = vmatprep.subr.bf16.mxu0 0
        %3515 = vmatpush1.bf16.msra.mxu0 0
        %3516 = vmatprep.subr.bf16.mxu0 0
        %3517 = vmatpush1.bf16.msra.mxu0 0
        %3518 = vmatprep.subr.bf16.mxu0 0
        %3519 = vmatpush1.bf16.msra.mxu0 0
        %3520 = vmatprep.subr.bf16.mxu0 0
        %3521 = vmatpush1.bf16.msra.mxu0 0
        %3522 = vmatprep.subr.bf16.mxu0 0
        %3523 = vmatpush1.bf16.msra.mxu0 0
        %3524 = vmatprep.subr.bf16.mxu0 0
        %3525 = vmatpush1.bf16.msra.mxu0 0
        %3526 = vmatprep.subr.bf16.mxu0 0
        %3527 = vmatpush1.bf16.msra.mxu0 0
        %3528 = vmatprep.mubr.bf16.mxu0 0
        %3529 = vmatmul.mubr.bf16.gmra.mrb[0].mxu0 %v497
        %v3530 = vpop.f32.mrb[0].mxu0
        %v3531 = vadd.f32 %v790, %v3530
        %v3532 = vpop.f32.mrb[0].mxu0
        %v3533 = vpop.f32.mrb[0].mxu0
        %v3534 = vadd.f32 %v790, %v3533
        %v3535 = vpop.f32.mrb[0].mxu0
        %3536 = vmatprep.mubr.bf16.mxu0 0
        %3537 = vmatmul.mubr.bf16.gmra.mrb[0].mxu0 %v498
        %v3538 = vpop.f32.mrb[0].mxu0
        %v3539 = vadd.f32 %v790, %v3538
        %v3540 = vpop.f32.mrb[0].mxu0
        %v3541 = vpop.f32.mrb[0].mxu0
        %v3542 = vadd.f32 %v790, %v3541
        %v3543 = vpop.f32.mrb[0].mxu0
        %3544 = vmatprep.mubr.bf16.mxu0 0
        %3545 = vmatmul.mubr.bf16.gmra.mrb[0].mxu0 %v499
        %v3546 = vpop.f32.mrb[0].mxu0
        %v3547 = vadd.f32 %v790, %v3546
        %v3548 = vpop.f32.mrb[0].mxu0
        %v3549 = vpop.f32.mrb[0].mxu0
        %v3550 = vadd.f32 %v790, %v3549
        %v3551 = vpop.f32.mrb[0].mxu0
        %3552 = vmatprep.mubr.bf16.mxu0 0
        %3553 = vmatmul.mubr.bf16.gmra.mrb[0].mxu0 %v500
        %v3554 = vpop.f32.mrb[0].mxu0
        %v3555 = vadd.f32 %v790, %v3554
        %v3556 = vpop.f32.mrb[0].mxu0
        %v3557 = vpop.f32.mrb[0].mxu0
        %v3558 = vadd.f32 %v790, %v3557
        %v3559 = vpop.f32.mrb[0].mxu0
        %3560 = vmatprep.mubr.bf16.mxu0 0
        %3561 = vmatmul.mubr.bf16.gmra.mrb[0].mxu0 %v501
        %v3562 = vpop.f32.mrb[0].mxu0
        %v3563 = vadd.f32 %v790, %v3562
        %v3564 = vpop.f32.mrb[0].mxu0
        %v3565 = vpop.f32.mrb[0].mxu0
        %v3566 = vadd.f32 %v790, %v3565
        %v3567 = vpop.f32.mrb[0].mxu0
        %3568 = vmatprep.mubr.bf16.mxu0 0
        %3569 = vmatmul.mubr.bf16.gmra.mrb[0].mxu0 %v502
        %v3570 = vpop.f32.mrb[0].mxu0
        %v3571 = vadd.f32 %v790, %v3570
        %v3572 = vpop.f32.mrb[0].mxu0
        %v3573 = vpop.f32.mrb[0].mxu0
        %v3574 = vadd.f32 %v790, %v3573
        %v3575 = vpop.f32.mrb[0].mxu0
        %3576 = vmatprep.mubr.bf16.mxu0 0
        %3577 = vmatmul.mubr.bf16.gmra.mrb[0].mxu0 %v503
        %v3578 = vpop.f32.mrb[0].mxu0
        %v3579 = vadd.f32 %v790, %v3578
        %v3580 = vpop.f32.mrb[0].mxu0
        %v3581 = vpop.f32.mrb[0].mxu0
        %v3582 = vadd.f32 %v790, %v3581
        %v3583 = vpop.f32.mrb[0].mxu0
        %3584 = vmatprep.mubr.bf16.mxu0 0
        %3585 = vmatmul.mubr.bf16.gmra.mrb[0].mxu0 %v504
        %v3586 = vpop.f32.mrb[0].mxu0
        %v3587 = vadd.f32 %v790, %v3586
        %v3588 = vpop.f32.mrb[0].mxu0
        %v3589 = vpop.f32.mrb[0].mxu0
        %v3590 = vadd.f32 %v790, %v3589
        %v3591 = vpop.f32.mrb[0].mxu0
        %3592 = vdwg.mxu0
        %3593 = vxpose.xlu0.b32.start [1/16] %v3531, 128
        %3594 = vxpose.xlu0.b32.cont [2/16] %v3534, 128
        %3595 = vxpose.xlu0.b32.cont [3/16] %v3539, 128
        %3596 = vxpose.xlu0.b32.cont [4/16] %v3542, 128
        %3597 = vxpose.xlu0.b32.cont [5/16] %v3547, 128
        %3598 = vxpose.xlu0.b32.cont [6/16] %v3550, 128
        %3599 = vxpose.xlu0.b32.cont [7/16] %v3555, 128
        %3600 = vxpose.xlu0.b32.cont [8/16] %v3558, 128
        %3601 = vxpose.xlu0.b32.cont [9/16] %v3563, 128
        %3602 = vxpose.xlu0.b32.cont [10/16] %v3566, 128
        %3603 = vxpose.xlu0.b32.cont [11/16] %v3571, 128
        %3604 = vxpose.xlu0.b32.cont [12/16] %v3574, 128
        %3605 = vxpose.xlu0.b32.cont [13/16] %v3579, 128
        %3606 = vxpose.xlu0.b32.cont [14/16] %v3582, 128
        %3607 = vxpose.xlu0.b32.cont [15/16] %v3587, 128
        %3608 = vxpose.xlu0.b32.end [16/16] %v3590, 128
        %v3609 = vpop.trf.xlu0
        %v3610 = vpop.trf.xlu0
        %v3611 = vpop.trf.xlu0
        %v3612 = vpop.trf.xlu0
        %v3613 = vpop.trf.xlu0
        %v3614 = vpop.trf.xlu0
        %v3615 = vpop.trf.xlu0
        %v3616 = vpop.trf.xlu0
        %v3617 = vpop.trf.xlu0
        %v3618 = vpop.trf.xlu0
        %v3619 = vpop.trf.xlu0
        %v3620 = vpop.trf.xlu0
        %v3621 = vpop.trf.xlu0
        %v3622 = vpop.trf.xlu0
        %v3623 = vpop.trf.xlu0
        %v3624 = vpop.trf.xlu0
        %3625 = vst [vmem:[%s218 + $0x5] sm:$0x1] %v3609
        %v3626 = vld [vmem:[%s223 + $0x180] sm:$0xf]
        %v3627 = vld [vmem:[%s223 + $0x184] sm:$0xf]
        %v3628 = vld [vmem:[%s223 + $0x188] sm:$0xf]
        %v3629 = vld [vmem:[%s223 + $0x18c] sm:$0xf]
        %v3630 = vld [vmem:[%s223 + $0x190] sm:$0xf]
        %v3631 = vld [vmem:[%s223 + $0x194] sm:$0xf]
        %v3632 = vld [vmem:[%s223 + $0x198] sm:$0xf]
        %v3633 = vld [vmem:[%s223 + $0x19c] sm:$0xf]
        %v3634 = vld [vmem:[%s223 + $0x1a0] sm:$0xf]
        %v3635 = vld [vmem:[%s223 + $0x1a4] sm:$0xf]
        %v3636 = vld [vmem:[%s223 + $0x1a8] sm:$0xf]
        %v3637 = vld [vmem:[%s223 + $0x1ac] sm:$0xf]
        %v3638 = vld [vmem:[%s223 + $0x1b0] sm:$0xf]
        %v3639 = vld [vmem:[%s223 + $0x1b4] sm:$0xf]
        %v3640 = vld [vmem:[%s223 + $0x1b8] sm:$0xf]
        %v3641 = vld [vmem:[%s223 + $0x1bc] sm:$0xf]
        %v3658 = vunpack.c.l.b16 %v3626
        %v3659 = vunpack.c.l.b16 %v3627
        %v3660 = vunpack.c.l.b16 %v3628
        %v3661 = vunpack.c.l.b16 %v3629
        %v3662 = vunpack.c.l.b16 %v3630
        %v3663 = vunpack.c.l.b16 %v3631
        %v3664 = vunpack.c.l.b16 %v3632
        %v3665 = vunpack.c.l.b16 %v3633
        %v3666 = vunpack.c.l.b16 %v3634
        %v3667 = vunpack.c.l.b16 %v3635
        %v3668 = vunpack.c.l.b16 %v3636
        %v3669 = vunpack.c.l.b16 %v3637
        %v3670 = vunpack.c.l.b16 %v3638
        %v3671 = vunpack.c.l.b16 %v3639
        %v3672 = vunpack.c.l.b16 %v3640
        %v3673 = vunpack.c.l.b16 %v3641
        %v3674 = vpack.c.b16 %v3659, %v3658
        %v3675 = vpack.c.b16 %v3661, %v3660
        %v3676 = vpack.c.b16 %v3663, %v3662
        %v3677 = vpack.c.b16 %v3665, %v3664
        %v3678 = vpack.c.b16 %v3667, %v3666
        %v3679 = vpack.c.b16 %v3669, %v3668
        %v3680 = vpack.c.b16 %v3671, %v3670
        %v3681 = vpack.c.b16 %v3673, %v3672
        %v3683 = vsel %vm331, %v3674, 0
        %v3686 = vsel %vm331, %v3675, 0
        %v3689 = vsel %vm331, %v3676, 0
        %v3692 = vsel %vm331, %v3677, 0
        %v3695 = vsel %vm331, %v3678, 0
        %v3698 = vsel %vm331, %v3679, 0
        %v3701 = vsel %vm331, %v3680, 0
        %v3704 = vsel %vm331, %v3681, 0
        %3706 = vmatprep.subr.bf16.mxu0 0
        %3707 = vmatpush1.bf16.msra.mxu0 %v327
        %3708 = vmatprep.subr.bf16.mxu0 0
        %3709 = vmatpush1.bf16.msra.mxu0 %v328
        %3710 = vmatprep.subr.bf16.mxu0 0
        %3711 = vmatpush1.bf16.msra.mxu0 0
        %3712 = vmatprep.subr.bf16.mxu0 0
        %3713 = vmatpush1.bf16.msra.mxu0 0
        %3714 = vmatprep.subr.bf16.mxu0 0
        %3715 = vmatpush1.bf16.msra.mxu0 0
        %3716 = vmatprep.subr.bf16.mxu0 0
        %3717 = vmatpush1.bf16.msra.mxu0 0
        %3718 = vmatprep.subr.bf16.mxu0 0
        %3719 = vmatpush1.bf16.msra.mxu0 0
        %3720 = vmatprep.subr.bf16.mxu0 0
        %3721 = vmatpush1.bf16.msra.mxu0 0
        %3722 = vmatprep.subr.bf16.mxu0 0
        %3723 = vmatpush1.bf16.msra.mxu0 0
        %3724 = vmatprep.subr.bf16.mxu0 0
        %3725 = vmatpush1.bf16.msra.mxu0 0
        %3726 = vmatprep.subr.bf16.mxu0 0
        %3727 = vmatpush1.bf16.msra.mxu0 0
        %3728 = vmatprep.subr.bf16.mxu0 0
        %3729 = vmatpush1.bf16.msra.mxu0 0
        %3730 = vmatprep.subr.bf16.mxu0 0
        %3731 = vmatpush1.bf16.msra.mxu0 0
        %3732 = vmatprep.subr.bf16.mxu0 0
        %3733 = vmatpush1.bf16.msra.mxu0 0
        %3734 = vmatprep.subr.bf16.mxu0 0
        %3735 = vmatpush1.bf16.msra.mxu0 0
        %3736 = vmatprep.subr.bf16.mxu0 0
        %3737 = vmatpush1.bf16.msra.mxu0 0
        %3738 = vmatprep.mubr.bf16.mxu0 0
        %3739 = vmatmul.mubr.bf16.gmra.mrb[0].mxu0 %v3683
        %v3740 = vpop.f32.mrb[0].mxu0
        %v3741 = vadd.f32 0.0, %v3740
        %v3742 = vpop.f32.mrb[0].mxu0
        %v3743 = vpop.f32.mrb[0].mxu0
        %v3744 = vadd.f32 0.0, %v3743
        %v3745 = vpop.f32.mrb[0].mxu0
        %3746 = vmatprep.mubr.bf16.mxu0 0
        %3747 = vmatmul.mubr.bf16.gmra.mrb[0].mxu0 %v3686
        %v3748 = vpop.f32.mrb[0].mxu0
        %v3749 = vadd.f32 0.0, %v3748
        %v3750 = vpop.f32.mrb[0].mxu0
        %v3751 = vpop.f32.mrb[0].mxu0
        %v3752 = vadd.f32 0.0, %v3751
        %v3753 = vpop.f32.mrb[0].mxu0
        %3754 = vmatprep.mubr.bf16.mxu0 0
        %3755 = vmatmul.mubr.bf16.gmra.mrb[0].mxu0 %v3689
        %v3756 = vpop.f32.mrb[0].mxu0
        %v3757 = vadd.f32 0.0, %v3756
        %v3758 = vpop.f32.mrb[0].mxu0
        %v3759 = vpop.f32.mrb[0].mxu0
        %v3760 = vadd.f32 0.0, %v3759
        %v3761 = vpop.f32.mrb[0].mxu0
        %3762 = vmatprep.mubr.bf16.mxu0 0
        %3763 = vmatmul.mubr.bf16.gmra.mrb[0].mxu0 %v3692
        %v3764 = vpop.f32.mrb[0].mxu0
        %v3765 = vadd.f32 0.0, %v3764
        %v3766 = vpop.f32.mrb[0].mxu0
        %v3767 = vpop.f32.mrb[0].mxu0
        %v3768 = vadd.f32 0.0, %v3767
        %v3769 = vpop.f32.mrb[0].mxu0
        %3770 = vmatprep.mubr.bf16.mxu0 0
        %3771 = vmatmul.mubr.bf16.gmra.mrb[0].mxu0 %v3695
        %v3772 = vpop.f32.mrb[0].mxu0
        %v3773 = vadd.f32 0.0, %v3772
        %v3774 = vpop.f32.mrb[0].mxu0
        %v3775 = vpop.f32.mrb[0].mxu0
        %v3776 = vadd.f32 0.0, %v3775
        %v3777 = vpop.f32.mrb[0].mxu0
        %3778 = vmatprep.mubr.bf16.mxu0 0
        %3779 = vmatmul.mubr.bf16.gmra.mrb[0].mxu0 %v3698
        %v3780 = vpop.f32.mrb[0].mxu0
        %v3781 = vadd.f32 0.0, %v3780
        %v3782 = vpop.f32.mrb[0].mxu0
        %v3783 = vpop.f32.mrb[0].mxu0
        %v3784 = vadd.f32 0.0, %v3783
        %v3785 = vpop.f32.mrb[0].mxu0
        %3786 = vmatprep.mubr.bf16.mxu0 0
        %3787 = vmatmul.mubr.bf16.gmra.mrb[0].mxu0 %v3701
        %v3788 = vpop.f32.mrb[0].mxu0
        %v3789 = vadd.f32 0.0, %v3788
        %v3790 = vpop.f32.mrb[0].mxu0
        %v3791 = vpop.f32.mrb[0].mxu0
        %v3792 = vadd.f32 0.0, %v3791
        %v3793 = vpop.f32.mrb[0].mxu0
        %3794 = vmatprep.mubr.bf16.mxu0 0
        %3795 = vmatmul.mubr.bf16.gmra.mrb[0].mxu0 %v3704
        %v3796 = vpop.f32.mrb[0].mxu0
        %v3797 = vadd.f32 0.0, %v3796
        %v3798 = vpop.f32.mrb[0].mxu0
        %v3799 = vpop.f32.mrb[0].mxu0
        %v3800 = vadd.f32 0.0, %v3799
        %v3801 = vpop.f32.mrb[0].mxu0
        %3802 = vdwg.mxu0
        %v3803 = vpack.c.bf16 %v3744, %v3741
        %v3804 = vpack.c.bf16 %v3752, %v3749
        %v3805 = vpack.c.bf16 %v3760, %v3757
        %v3806 = vpack.c.bf16 %v3768, %v3765
        %v3807 = vpack.c.bf16 %v3776, %v3773
        %v3808 = vpack.c.bf16 %v3784, %v3781
        %v3809 = vpack.c.bf16 %v3792, %v3789
        %v3810 = vpack.c.bf16 %v3800, %v3797
        %3811 = vmatprep.subr.bf16.mxu0 0
        %3812 = vmatpush1.bf16.msra.mxu0 %v3803
        %3813 = vmatprep.subr.bf16.mxu0 0
        %3814 = vmatpush1.bf16.msra.mxu0 %v3804
        %3815 = vmatprep.subr.bf16.mxu0 0
        %3816 = vmatpush1.bf16.msra.mxu0 %v3805
        %3817 = vmatprep.subr.bf16.mxu0 0
        %3818 = vmatpush1.bf16.msra.mxu0 %v3806
        %3819 = vmatprep.subr.bf16.mxu0 0
        %3820 = vmatpush1.bf16.msra.mxu0 %v3807
        %3821 = vmatprep.subr.bf16.mxu0 0
        %3822 = vmatpush1.bf16.msra.mxu0 %v3808
        %3823 = vmatprep.subr.bf16.mxu0 0
        %3824 = vmatpush1.bf16.msra.mxu0 %v3809
        %3825 = vmatprep.subr.bf16.mxu0 0
        %3826 = vmatpush1.bf16.msra.mxu0 %v3810
        %3827 = vmatprep.subr.bf16.mxu0 0
        %3828 = vmatpush1.bf16.msra.mxu0 0
        %3829 = vmatprep.subr.bf16.mxu0 0
        %3830 = vmatpush1.bf16.msra.mxu0 0
        %3831 = vmatprep.subr.bf16.mxu0 0
        %3832 = vmatpush1.bf16.msra.mxu0 0
        %3833 = vmatprep.subr.bf16.mxu0 0
        %3834 = vmatpush1.bf16.msra.mxu0 0
        %3835 = vmatprep.subr.bf16.mxu0 0
        %3836 = vmatpush1.bf16.msra.mxu0 0
        %3837 = vmatprep.subr.bf16.mxu0 0
        %3838 = vmatpush1.bf16.msra.mxu0 0
        %3839 = vmatprep.subr.bf16.mxu0 0
        %3840 = vmatpush1.bf16.msra.mxu0 0
        %3841 = vmatprep.subr.bf16.mxu0 0
        %3842 = vmatpush1.bf16.msra.mxu0 0
        %3843 = vmatprep.mubr.bf16.mxu0 0
        %3844 = vmatmul.mubr.bf16.gmra.mrb[0].mxu0 %v497
        %v3845 = vpop.f32.mrb[0].mxu0
        %v3846 = vadd.f32 %v464, %v3845
        %v3847 = vpop.f32.mrb[0].mxu0
        %v3848 = vpop.f32.mrb[0].mxu0
        %v3849 = vadd.f32 %v464, %v3848
        %v3850 = vpop.f32.mrb[0].mxu0
        %3851 = vmatprep.mubr.bf16.mxu0 0
        %3852 = vmatmul.mubr.bf16.gmra.mrb[0].mxu0 %v498
        %v3853 = vpop.f32.mrb[0].mxu0
        %v3854 = vadd.f32 %v464, %v3853
        %v3855 = vpop.f32.mrb[0].mxu0
        %v3856 = vpop.f32.mrb[0].mxu0
        %v3857 = vadd.f32 %v464, %v3856
        %v3858 = vpop.f32.mrb[0].mxu0
        %3859 = vmatprep.mubr.bf16.mxu0 0
        %3860 = vmatmul.mubr.bf16.gmra.mrb[0].mxu0 %v499
        %v3861 = vpop.f32.mrb[0].mxu0
        %v3862 = vadd.f32 %v464, %v3861
        %v3863 = vpop.f32.mrb[0].mxu0
        %v3864 = vpop.f32.mrb[0].mxu0
        %v3865 = vadd.f32 %v464, %v3864
        %v3866 = vpop.f32.mrb[0].mxu0
        %3867 = vmatprep.mubr.bf16.mxu0 0
        %3868 = vmatmul.mubr.bf16.gmra.mrb[0].mxu0 %v500
        %v3869 = vpop.f32.mrb[0].mxu0
        %v3870 = vadd.f32 %v464, %v3869
        %v3871 = vpop.f32.mrb[0].mxu0
        %v3872 = vpop.f32.mrb[0].mxu0
        %v3873 = vadd.f32 %v464, %v3872
        %v3874 = vpop.f32.mrb[0].mxu0
        %3875 = vmatprep.mubr.bf16.mxu0 0
        %3876 = vmatmul.mubr.bf16.gmra.mrb[0].mxu0 %v501
        %v3877 = vpop.f32.mrb[0].mxu0
        %v3878 = vadd.f32 %v464, %v3877
        %v3879 = vpop.f32.mrb[0].mxu0
        %v3880 = vpop.f32.mrb[0].mxu0
        %v3881 = vadd.f32 %v464, %v3880
        %v3882 = vpop.f32.mrb[0].mxu0
        %3883 = vmatprep.mubr.bf16.mxu0 0
        %3884 = vmatmul.mubr.bf16.gmra.mrb[0].mxu0 %v502
        %v3885 = vpop.f32.mrb[0].mxu0
        %v3886 = vadd.f32 %v464, %v3885
        %v3887 = vpop.f32.mrb[0].mxu0
        %v3888 = vpop.f32.mrb[0].mxu0
        %v3889 = vadd.f32 %v464, %v3888
        %v3890 = vpop.f32.mrb[0].mxu0
        %3891 = vmatprep.mubr.bf16.mxu0 0
        %3892 = vmatmul.mubr.bf16.gmra.mrb[0].mxu0 %v503
        %v3893 = vpop.f32.mrb[0].mxu0
        %v3894 = vadd.f32 %v464, %v3893
        %v3895 = vpop.f32.mrb[0].mxu0
        %v3896 = vpop.f32.mrb[0].mxu0
        %v3897 = vadd.f32 %v464, %v3896
        %v3898 = vpop.f32.mrb[0].mxu0
        %3899 = vmatprep.mubr.bf16.mxu0 0
        %3900 = vmatmul.mubr.bf16.gmra.mrb[0].mxu0 %v504
        %v3901 = vpop.f32.mrb[0].mxu0
        %v3902 = vadd.f32 %v464, %v3901
        %v3903 = vpop.f32.mrb[0].mxu0
        %v3904 = vpop.f32.mrb[0].mxu0
        %v3905 = vadd.f32 %v464, %v3904
        %v3906 = vpop.f32.mrb[0].mxu0
        %3907 = vdwg.mxu0
        %v3908 = vmax.f32 %v3846, 0.0
        %v3909 = vmax.f32 %v3849, 0.0
        %v3910 = vmax.f32 %v3854, 0.0
        %v3911 = vmax.f32 %v3857, 0.0
        %v3912 = vmax.f32 %v3862, 0.0
        %v3913 = vmax.f32 %v3865, 0.0
        %v3914 = vmax.f32 %v3870, 0.0
        %v3915 = vmax.f32 %v3873, 0.0
        %v3916 = vmax.f32 %v3878, 0.0
        %v3917 = vmax.f32 %v3881, 0.0
        %v3918 = vmax.f32 %v3886, 0.0
        %v3919 = vmax.f32 %v3889, 0.0
        %v3920 = vmax.f32 %v3894, 0.0
        %v3921 = vmax.f32 %v3897, 0.0
        %v3922 = vmax.f32 %v3902, 0.0
        %v3923 = vmax.f32 %v3905, 0.0
        %v3924 = vpack.c.bf16 %v3909, %v3908
        %v3925 = vpack.c.bf16 %v3911, %v3910
        %v3926 = vpack.c.bf16 %v3913, %v3912
        %v3927 = vpack.c.bf16 %v3915, %v3914
        %v3928 = vpack.c.bf16 %v3917, %v3916
        %v3929 = vpack.c.bf16 %v3919, %v3918
        %v3930 = vpack.c.bf16 %v3921, %v3920
        %v3931 = vpack.c.bf16 %v3923, %v3922
        %3932 = vmatprep.subr.bf16.mxu0 0
        %3933 = vmatpush1.bf16.msra.mxu0 %v666
        %3934 = vmatprep.subr.bf16.mxu0 0
        %3935 = vmatpush1.bf16.msra.mxu0 %v667
        %3936 = vmatprep.subr.bf16.mxu0 0
        %3937 = vmatpush1.bf16.msra.mxu0 %v668
        %3938 = vmatprep.subr.bf16.mxu0 0
        %3939 = vmatpush1.bf16.msra.mxu0 %v669
        %3940 = vmatprep.subr.bf16.mxu0 0
        %3941 = vmatpush1.bf16.msra.mxu0 %v670
        %3942 = vmatprep.subr.bf16.mxu0 0
        %3943 = vmatpush1.bf16.msra.mxu0 %v671
        %3944 = vmatprep.subr.bf16.mxu0 0
        %3945 = vmatpush1.bf16.msra.mxu0 %v672
        %3946 = vmatprep.subr.bf16.mxu0 0
        %3947 = vmatpush1.bf16.msra.mxu0 %v673
        %3948 = vmatprep.subr.bf16.mxu0 0
        %3949 = vmatpush1.bf16.msra.mxu0 0
        %3950 = vmatprep.subr.bf16.mxu0 0
        %3951 = vmatpush1.bf16.msra.mxu0 0
        %3952 = vmatprep.subr.bf16.mxu0 0
        %3953 = vmatpush1.bf16.msra.mxu0 0
        %3954 = vmatprep.subr.bf16.mxu0 0
        %3955 = vmatpush1.bf16.msra.mxu0 0
        %3956 = vmatprep.subr.bf16.mxu0 0
        %3957 = vmatpush1.bf16.msra.mxu0 0
        %3958 = vmatprep.subr.bf16.mxu0 0
        %3959 = vmatpush1.bf16.msra.mxu0 0
        %3960 = vmatprep.subr.bf16.mxu0 0
        %3961 = vmatpush1.bf16.msra.mxu0 0
        %3962 = vmatprep.subr.bf16.mxu0 0
        %3963 = vmatpush1.bf16.msra.mxu0 0
        %3964 = vmatprep.mubr.bf16.mxu0 0
        %3965 = vmatmul.mubr.bf16.gmra.mrb[0].mxu0 %v3924
        %v3966 = vpop.f32.mrb[0].mxu0
        %v3967 = vadd.f32 0.0, %v3966
        %v3968 = vpop.f32.mrb[0].mxu0
        %v3969 = vpop.f32.mrb[0].mxu0
        %v3970 = vadd.f32 0.0, %v3969
        %v3971 = vpop.f32.mrb[0].mxu0
        %3972 = vmatprep.mubr.bf16.mxu0 0
        %3973 = vmatmul.mubr.bf16.gmra.mrb[0].mxu0 %v3925
        %v3974 = vpop.f32.mrb[0].mxu0
        %v3975 = vadd.f32 0.0, %v3974
        %v3976 = vpop.f32.mrb[0].mxu0
        %v3977 = vpop.f32.mrb[0].mxu0
        %v3978 = vadd.f32 0.0, %v3977
        %v3979 = vpop.f32.mrb[0].mxu0
        %3980 = vmatprep.mubr.bf16.mxu0 0
        %3981 = vmatmul.mubr.bf16.gmra.mrb[0].mxu0 %v3926
        %v3982 = vpop.f32.mrb[0].mxu0
        %v3983 = vadd.f32 0.0, %v3982
        %v3984 = vpop.f32.mrb[0].mxu0
        %v3985 = vpop.f32.mrb[0].mxu0
        %v3986 = vadd.f32 0.0, %v3985
        %v3987 = vpop.f32.mrb[0].mxu0
        %3988 = vmatprep.mubr.bf16.mxu0 0
        %3989 = vmatmul.mubr.bf16.gmra.mrb[0].mxu0 %v3927
        %v3990 = vpop.f32.mrb[0].mxu0
        %v3991 = vadd.f32 0.0, %v3990
        %v3992 = vpop.f32.mrb[0].mxu0
        %v3993 = vpop.f32.mrb[0].mxu0
        %v3994 = vadd.f32 0.0, %v3993
        %v3995 = vpop.f32.mrb[0].mxu0
        %3996 = vmatprep.mubr.bf16.mxu0 0
        %3997 = vmatmul.mubr.bf16.gmra.mrb[0].mxu0 %v3928
        %v3998 = vpop.f32.mrb[0].mxu0
        %v3999 = vadd.f32 0.0, %v3998
        %v4000 = vpop.f32.mrb[0].mxu0
        %v4001 = vpop.f32.mrb[0].mxu0
        %v4002 = vadd.f32 0.0, %v4001
        %v4003 = vpop.f32.mrb[0].mxu0
        %4004 = vmatprep.mubr.bf16.mxu0 0
        %4005 = vmatmul.mubr.bf16.gmra.mrb[0].mxu0 %v3929
        %v4006 = vpop.f32.mrb[0].mxu0
        %v4007 = vadd.f32 0.0, %v4006
        %v4008 = vpop.f32.mrb[0].mxu0
        %v4009 = vpop.f32.mrb[0].mxu0
        %v4010 = vadd.f32 0.0, %v4009
        %v4011 = vpop.f32.mrb[0].mxu0
        %4012 = vmatprep.mubr.bf16.mxu0 0
        %4013 = vmatmul.mubr.bf16.gmra.mrb[0].mxu0 %v3930
        %v4014 = vpop.f32.mrb[0].mxu0
        %v4015 = vadd.f32 0.0, %v4014
        %v4016 = vpop.f32.mrb[0].mxu0
        %v4017 = vpop.f32.mrb[0].mxu0
        %v4018 = vadd.f32 0.0, %v4017
        %v4019 = vpop.f32.mrb[0].mxu0
        %4020 = vmatprep.mubr.bf16.mxu0 0
        %4021 = vmatmul.mubr.bf16.gmra.mrb[0].mxu0 %v3931
        %v4022 = vpop.f32.mrb[0].mxu0
        %v4023 = vadd.f32 0.0, %v4022
        %v4024 = vpop.f32.mrb[0].mxu0
        %v4025 = vpop.f32.mrb[0].mxu0
        %v4026 = vadd.f32 0.0, %v4025
        %v4027 = vpop.f32.mrb[0].mxu0
        %4028 = vdwg.mxu0
        %v4029 = vpack.c.bf16 %v3970, %v3967
        %v4030 = vpack.c.bf16 %v3978, %v3975
        %v4031 = vpack.c.bf16 %v3986, %v3983
        %v4032 = vpack.c.bf16 %v3994, %v3991
        %v4033 = vpack.c.bf16 %v4002, %v3999
        %v4034 = vpack.c.bf16 %v4010, %v4007
        %v4035 = vpack.c.bf16 %v4018, %v4015
        %v4036 = vpack.c.bf16 %v4026, %v4023
        %4037 = vmatprep.subr.bf16.mxu0 0
        %4038 = vmatpush1.bf16.msra.mxu0 %v4029
        %4039 = vmatprep.subr.bf16.mxu0 0
        %4040 = vmatpush1.bf16.msra.mxu0 %v4030
        %4041 = vmatprep.subr.bf16.mxu0 0
        %4042 = vmatpush1.bf16.msra.mxu0 %v4031
        %4043 = vmatprep.subr.bf16.mxu0 0
        %4044 = vmatpush1.bf16.msra.mxu0 %v4032
        %4045 = vmatprep.subr.bf16.mxu0 0
        %4046 = vmatpush1.bf16.msra.mxu0 %v4033
        %4047 = vmatprep.subr.bf16.mxu0 0
        %4048 = vmatpush1.bf16.msra.mxu0 %v4034
        %4049 = vmatprep.subr.bf16.mxu0 0
        %4050 = vmatpush1.bf16.msra.mxu0 %v4035
        %4051 = vmatprep.subr.bf16.mxu0 0
        %4052 = vmatpush1.bf16.msra.mxu0 %v4036
        %4053 = vmatprep.subr.bf16.mxu0 0
        %4054 = vmatpush1.bf16.msra.mxu0 0
        %4055 = vmatprep.subr.bf16.mxu0 0
        %4056 = vmatpush1.bf16.msra.mxu0 0
        %4057 = vmatprep.subr.bf16.mxu0 0
        %4058 = vmatpush1.bf16.msra.mxu0 0
        %4059 = vmatprep.subr.bf16.mxu0 0
        %4060 = vmatpush1.bf16.msra.mxu0 0
        %4061 = vmatprep.subr.bf16.mxu0 0
        %4062 = vmatpush1.bf16.msra.mxu0 0
        %4063 = vmatprep.subr.bf16.mxu0 0
        %4064 = vmatpush1.bf16.msra.mxu0 0
        %4065 = vmatprep.subr.bf16.mxu0 0
        %4066 = vmatpush1.bf16.msra.mxu0 0
        %4067 = vmatprep.subr.bf16.mxu0 0
        %4068 = vmatpush1.bf16.msra.mxu0 0
        %4069 = vmatprep.mubr.bf16.mxu0 0
        %4070 = vmatmul.mubr.bf16.gmra.mrb[0].mxu0 %v497
        %v4071 = vpop.f32.mrb[0].mxu0
        %v4072 = vadd.f32 %v790, %v4071
        %v4073 = vpop.f32.mrb[0].mxu0
        %v4074 = vpop.f32.mrb[0].mxu0
        %v4075 = vadd.f32 %v790, %v4074
        %v4076 = vpop.f32.mrb[0].mxu0
        %4077 = vmatprep.mubr.bf16.mxu0 0
        %4078 = vmatmul.mubr.bf16.gmra.mrb[0].mxu0 %v498
        %v4079 = vpop.f32.mrb[0].mxu0
        %v4080 = vadd.f32 %v790, %v4079
        %v4081 = vpop.f32.mrb[0].mxu0
        %v4082 = vpop.f32.mrb[0].mxu0
        %v4083 = vadd.f32 %v790, %v4082
        %v4084 = vpop.f32.mrb[0].mxu0
        %4085 = vmatprep.mubr.bf16.mxu0 0
        %4086 = vmatmul.mubr.bf16.gmra.mrb[0].mxu0 %v499
        %v4087 = vpop.f32.mrb[0].mxu0
        %v4088 = vadd.f32 %v790, %v4087
        %v4089 = vpop.f32.mrb[0].mxu0
        %v4090 = vpop.f32.mrb[0].mxu0
        %v4091 = vadd.f32 %v790, %v4090
        %v4092 = vpop.f32.mrb[0].mxu0
        %4093 = vmatprep.mubr.bf16.mxu0 0
        %4094 = vmatmul.mubr.bf16.gmra.mrb[0].mxu0 %v500
        %v4095 = vpop.f32.mrb[0].mxu0
        %v4096 = vadd.f32 %v790, %v4095
        %v4097 = vpop.f32.mrb[0].mxu0
        %v4098 = vpop.f32.mrb[0].mxu0
        %v4099 = vadd.f32 %v790, %v4098
        %v4100 = vpop.f32.mrb[0].mxu0
        %4101 = vmatprep.mubr.bf16.mxu0 0
        %4102 = vmatmul.mubr.bf16.gmra.mrb[0].mxu0 %v501
        %v4103 = vpop.f32.mrb[0].mxu0
        %v4104 = vadd.f32 %v790, %v4103
        %v4105 = vpop.f32.mrb[0].mxu0
        %v4106 = vpop.f32.mrb[0].mxu0
        %v4107 = vadd.f32 %v790, %v4106
        %v4108 = vpop.f32.mrb[0].mxu0
        %4109 = vmatprep.mubr.bf16.mxu0 0
        %4110 = vmatmul.mubr.bf16.gmra.mrb[0].mxu0 %v502
        %v4111 = vpop.f32.mrb[0].mxu0
        %v4112 = vadd.f32 %v790, %v4111
        %v4113 = vpop.f32.mrb[0].mxu0
        %v4114 = vpop.f32.mrb[0].mxu0
        %v4115 = vadd.f32 %v790, %v4114
        %v4116 = vpop.f32.mrb[0].mxu0
        %4117 = vmatprep.mubr.bf16.mxu0 0
        %4118 = vmatmul.mubr.bf16.gmra.mrb[0].mxu0 %v503
        %v4119 = vpop.f32.mrb[0].mxu0
        %v4120 = vadd.f32 %v790, %v4119
        %v4121 = vpop.f32.mrb[0].mxu0
        %v4122 = vpop.f32.mrb[0].mxu0
        %v4123 = vadd.f32 %v790, %v4122
        %v4124 = vpop.f32.mrb[0].mxu0
        %4125 = vmatprep.mubr.bf16.mxu0 0
        %4126 = vmatmul.mubr.bf16.gmra.mrb[0].mxu0 %v504
        %v4127 = vpop.f32.mrb[0].mxu0
        %v4128 = vadd.f32 %v790, %v4127
        %v4129 = vpop.f32.mrb[0].mxu0
        %v4130 = vpop.f32.mrb[0].mxu0
        %v4131 = vadd.f32 %v790, %v4130
        %v4132 = vpop.f32.mrb[0].mxu0
        %4133 = vdwg.mxu0
        %4134 = vxpose.xlu0.b32.start [1/16] %v4072, 128
        %4135 = vxpose.xlu0.b32.cont [2/16] %v4075, 128
        %4136 = vxpose.xlu0.b32.cont [3/16] %v4080, 128
        %4137 = vxpose.xlu0.b32.cont [4/16] %v4083, 128
        %4138 = vxpose.xlu0.b32.cont [5/16] %v4088, 128
        %4139 = vxpose.xlu0.b32.cont [6/16] %v4091, 128
        %4140 = vxpose.xlu0.b32.cont [7/16] %v4096, 128
        %4141 = vxpose.xlu0.b32.cont [8/16] %v4099, 128
        %4142 = vxpose.xlu0.b32.cont [9/16] %v4104, 128
        %4143 = vxpose.xlu0.b32.cont [10/16] %v4107, 128
        %4144 = vxpose.xlu0.b32.cont [11/16] %v4112, 128
        %4145 = vxpose.xlu0.b32.cont [12/16] %v4115, 128
        %4146 = vxpose.xlu0.b32.cont [13/16] %v4120, 128
        %4147 = vxpose.xlu0.b32.cont [14/16] %v4123, 128
        %4148 = vxpose.xlu0.b32.cont [15/16] %v4128, 128
        %4149 = vxpose.xlu0.b32.end [16/16] %v4131, 128
        %v4150 = vpop.trf.xlu0
        %v4151 = vpop.trf.xlu0
        %v4152 = vpop.trf.xlu0
        %v4153 = vpop.trf.xlu0
        %v4154 = vpop.trf.xlu0
        %v4155 = vpop.trf.xlu0
        %v4156 = vpop.trf.xlu0
        %v4157 = vpop.trf.xlu0
        %v4158 = vpop.trf.xlu0
        %v4159 = vpop.trf.xlu0
        %v4160 = vpop.trf.xlu0
        %v4161 = vpop.trf.xlu0
        %v4162 = vpop.trf.xlu0
        %v4163 = vpop.trf.xlu0
        %v4164 = vpop.trf.xlu0
        %v4165 = vpop.trf.xlu0
        %4166 = vst [vmem:[%s218 + $0x6] sm:$0x1] %v4150
        %v4167 = vld [vmem:[%s223 + $0x1c0] sm:$0xf]
        %v4168 = vld [vmem:[%s223 + $0x1c4] sm:$0xf]
        %v4169 = vld [vmem:[%s223 + $0x1c8] sm:$0xf]
        %v4170 = vld [vmem:[%s223 + $0x1cc] sm:$0xf]
        %v4171 = vld [vmem:[%s223 + $0x1d0] sm:$0xf]
        %v4172 = vld [vmem:[%s223 + $0x1d4] sm:$0xf]
        %v4173 = vld [vmem:[%s223 + $0x1d8] sm:$0xf]
        %v4174 = vld [vmem:[%s223 + $0x1dc] sm:$0xf]
        %v4175 = vld [vmem:[%s223 + $0x1e0] sm:$0xf]
        %v4176 = vld [vmem:[%s223 + $0x1e4] sm:$0xf]
        %v4177 = vld [vmem:[%s223 + $0x1e8] sm:$0xf]
        %v4178 = vld [vmem:[%s223 + $0x1ec] sm:$0xf]
        %v4179 = vld [vmem:[%s223 + $0x1f0] sm:$0xf]
        %v4180 = vld [vmem:[%s223 + $0x1f4] sm:$0xf]
        %v4181 = vld [vmem:[%s223 + $0x1f8] sm:$0xf]
        %v4182 = vld [vmem:[%s223 + $0x1fc] sm:$0xf]
        %v4199 = vunpack.c.l.b16 %v4167
        %v4200 = vunpack.c.l.b16 %v4168
        %v4201 = vunpack.c.l.b16 %v4169
        %v4202 = vunpack.c.l.b16 %v4170
        %v4203 = vunpack.c.l.b16 %v4171
        %v4204 = vunpack.c.l.b16 %v4172
        %v4205 = vunpack.c.l.b16 %v4173
        %v4206 = vunpack.c.l.b16 %v4174
        %v4207 = vunpack.c.l.b16 %v4175
        %v4208 = vunpack.c.l.b16 %v4176
        %v4209 = vunpack.c.l.b16 %v4177
        %v4210 = vunpack.c.l.b16 %v4178
        %v4211 = vunpack.c.l.b16 %v4179
        %v4212 = vunpack.c.l.b16 %v4180
        %v4213 = vunpack.c.l.b16 %v4181
        %v4214 = vunpack.c.l.b16 %v4182
        %v4215 = vpack.c.b16 %v4200, %v4199
        %v4216 = vpack.c.b16 %v4202, %v4201
        %v4217 = vpack.c.b16 %v4204, %v4203
        %v4218 = vpack.c.b16 %v4206, %v4205
        %v4219 = vpack.c.b16 %v4208, %v4207
        %v4220 = vpack.c.b16 %v4210, %v4209
        %v4221 = vpack.c.b16 %v4212, %v4211
        %v4222 = vpack.c.b16 %v4214, %v4213
        %v4224 = vsel %vm331, %v4215, 0
        %v4227 = vsel %vm331, %v4216, 0
        %v4230 = vsel %vm331, %v4217, 0
        %v4233 = vsel %vm331, %v4218, 0
        %v4236 = vsel %vm331, %v4219, 0
        %v4239 = vsel %vm331, %v4220, 0
        %v4242 = vsel %vm331, %v4221, 0
        %v4245 = vsel %vm331, %v4222, 0
        %4247 = vmatprep.subr.bf16.mxu0 0
        %4248 = vmatpush1.bf16.msra.mxu0 %v327
        %4249 = vmatprep.subr.bf16.mxu0 0
        %4250 = vmatpush1.bf16.msra.mxu0 %v328
        %4251 = vmatprep.subr.bf16.mxu0 0
        %4252 = vmatpush1.bf16.msra.mxu0 0
        %4253 = vmatprep.subr.bf16.mxu0 0
        %4254 = vmatpush1.bf16.msra.mxu0 0
        %4255 = vmatprep.subr.bf16.mxu0 0
        %4256 = vmatpush1.bf16.msra.mxu0 0
        %4257 = vmatprep.subr.bf16.mxu0 0
        %4258 = vmatpush1.bf16.msra.mxu0 0
        %4259 = vmatprep.subr.bf16.mxu0 0
        %4260 = vmatpush1.bf16.msra.mxu0 0
        %4261 = vmatprep.subr.bf16.mxu0 0
        %4262 = vmatpush1.bf16.msra.mxu0 0
        %4263 = vmatprep.subr.bf16.mxu0 0
        %4264 = vmatpush1.bf16.msra.mxu0 0
        %4265 = vmatprep.subr.bf16.mxu0 0
        %4266 = vmatpush1.bf16.msra.mxu0 0
        %4267 = vmatprep.subr.bf16.mxu0 0
        %4268 = vmatpush1.bf16.msra.mxu0 0
        %4269 = vmatprep.subr.bf16.mxu0 0
        %4270 = vmatpush1.bf16.msra.mxu0 0
        %4271 = vmatprep.subr.bf16.mxu0 0
        %4272 = vmatpush1.bf16.msra.mxu0 0
        %4273 = vmatprep.subr.bf16.mxu0 0
        %4274 = vmatpush1.bf16.msra.mxu0 0
        %4275 = vmatprep.subr.bf16.mxu0 0
        %4276 = vmatpush1.bf16.msra.mxu0 0
        %4277 = vmatprep.subr.bf16.mxu0 0
        %4278 = vmatpush1.bf16.msra.mxu0 0
        %4279 = vmatprep.mubr.bf16.mxu0 0
        %4280 = vmatmul.mubr.bf16.gmra.mrb[0].mxu0 %v4224
        %v4281 = vpop.f32.mrb[0].mxu0
        %v4282 = vadd.f32 0.0, %v4281
        %v4283 = vpop.f32.mrb[0].mxu0
        %v4284 = vpop.f32.mrb[0].mxu0
        %v4285 = vadd.f32 0.0, %v4284
        %v4286 = vpop.f32.mrb[0].mxu0
        %4287 = vmatprep.mubr.bf16.mxu0 0
        %4288 = vmatmul.mubr.bf16.gmra.mrb[0].mxu0 %v4227
        %v4289 = vpop.f32.mrb[0].mxu0
        %v4290 = vadd.f32 0.0, %v4289
        %v4291 = vpop.f32.mrb[0].mxu0
        %v4292 = vpop.f32.mrb[0].mxu0
        %v4293 = vadd.f32 0.0, %v4292
        %v4294 = vpop.f32.mrb[0].mxu0
        %4295 = vmatprep.mubr.bf16.mxu0 0
        %4296 = vmatmul.mubr.bf16.gmra.mrb[0].mxu0 %v4230
        %v4297 = vpop.f32.mrb[0].mxu0
        %v4298 = vadd.f32 0.0, %v4297
        %v4299 = vpop.f32.mrb[0].mxu0
        %v4300 = vpop.f32.mrb[0].mxu0
        %v4301 = vadd.f32 0.0, %v4300
        %v4302 = vpop.f32.mrb[0].mxu0
        %4303 = vmatprep.mubr.bf16.mxu0 0
        %4304 = vmatmul.mubr.bf16.gmra.mrb[0].mxu0 %v4233
        %v4305 = vpop.f32.mrb[0].mxu0
        %v4306 = vadd.f32 0.0, %v4305
        %v4307 = vpop.f32.mrb[0].mxu0
        %v4308 = vpop.f32.mrb[0].mxu0
        %v4309 = vadd.f32 0.0, %v4308
        %v4310 = vpop.f32.mrb[0].mxu0
        %4311 = vmatprep.mubr.bf16.mxu0 0
        %4312 = vmatmul.mubr.bf16.gmra.mrb[0].mxu0 %v4236
        %v4313 = vpop.f32.mrb[0].mxu0
        %v4314 = vadd.f32 0.0, %v4313
        %v4315 = vpop.f32.mrb[0].mxu0
        %v4316 = vpop.f32.mrb[0].mxu0
        %v4317 = vadd.f32 0.0, %v4316
        %v4318 = vpop.f32.mrb[0].mxu0
        %4319 = vmatprep.mubr.bf16.mxu0 0
        %4320 = vmatmul.mubr.bf16.gmra.mrb[0].mxu0 %v4239
        %v4321 = vpop.f32.mrb[0].mxu0
        %v4322 = vadd.f32 0.0, %v4321
        %v4323 = vpop.f32.mrb[0].mxu0
        %v4324 = vpop.f32.mrb[0].mxu0
        %v4325 = vadd.f32 0.0, %v4324
        %v4326 = vpop.f32.mrb[0].mxu0
        %4327 = vmatprep.mubr.bf16.mxu0 0
        %4328 = vmatmul.mubr.bf16.gmra.mrb[0].mxu0 %v4242
        %v4329 = vpop.f32.mrb[0].mxu0
        %v4330 = vadd.f32 0.0, %v4329
        %v4331 = vpop.f32.mrb[0].mxu0
        %v4332 = vpop.f32.mrb[0].mxu0
        %v4333 = vadd.f32 0.0, %v4332
        %v4334 = vpop.f32.mrb[0].mxu0
        %4335 = vmatprep.mubr.bf16.mxu0 0
        %4336 = vmatmul.mubr.bf16.gmra.mrb[0].mxu0 %v4245
        %v4337 = vpop.f32.mrb[0].mxu0
        %v4338 = vadd.f32 0.0, %v4337
        %v4339 = vpop.f32.mrb[0].mxu0
        %v4340 = vpop.f32.mrb[0].mxu0
        %v4341 = vadd.f32 0.0, %v4340
        %v4342 = vpop.f32.mrb[0].mxu0
        %4343 = vdwg.mxu0
        %v4344 = vpack.c.bf16 %v4285, %v4282
        %v4345 = vpack.c.bf16 %v4293, %v4290
        %v4346 = vpack.c.bf16 %v4301, %v4298
        %v4347 = vpack.c.bf16 %v4309, %v4306
        %v4348 = vpack.c.bf16 %v4317, %v4314
        %v4349 = vpack.c.bf16 %v4325, %v4322
        %v4350 = vpack.c.bf16 %v4333, %v4330
        %v4351 = vpack.c.bf16 %v4341, %v4338
        %4352 = vmatprep.subr.bf16.mxu0 0
        %4353 = vmatpush1.bf16.msra.mxu0 %v4344
        %4354 = vmatprep.subr.bf16.mxu0 0
        %4355 = vmatpush1.bf16.msra.mxu0 %v4345
        %4356 = vmatprep.subr.bf16.mxu0 0
        %4357 = vmatpush1.bf16.msra.mxu0 %v4346
        %4358 = vmatprep.subr.bf16.mxu0 0
        %4359 = vmatpush1.bf16.msra.mxu0 %v4347
        %4360 = vmatprep.subr.bf16.mxu0 0
        %4361 = vmatpush1.bf16.msra.mxu0 %v4348
        %4362 = vmatprep.subr.bf16.mxu0 0
        %4363 = vmatpush1.bf16.msra.mxu0 %v4349
        %4364 = vmatprep.subr.bf16.mxu0 0
        %4365 = vmatpush1.bf16.msra.mxu0 %v4350
        %4366 = vmatprep.subr.bf16.mxu0 0
        %4367 = vmatpush1.bf16.msra.mxu0 %v4351
        %4368 = vmatprep.subr.bf16.mxu0 0
        %4369 = vmatpush1.bf16.msra.mxu0 0
        %4370 = vmatprep.subr.bf16.mxu0 0
        %4371 = vmatpush1.bf16.msra.mxu0 0
        %4372 = vmatprep.subr.bf16.mxu0 0
        %4373 = vmatpush1.bf16.msra.mxu0 0
        %4374 = vmatprep.subr.bf16.mxu0 0
        %4375 = vmatpush1.bf16.msra.mxu0 0
        %4376 = vmatprep.subr.bf16.mxu0 0
        %4377 = vmatpush1.bf16.msra.mxu0 0
        %4378 = vmatprep.subr.bf16.mxu0 0
        %4379 = vmatpush1.bf16.msra.mxu0 0
        %4380 = vmatprep.subr.bf16.mxu0 0
        %4381 = vmatpush1.bf16.msra.mxu0 0
        %4382 = vmatprep.subr.bf16.mxu0 0
        %4383 = vmatpush1.bf16.msra.mxu0 0
        %4384 = vmatprep.mubr.bf16.mxu0 0
        %4385 = vmatmul.mubr.bf16.gmra.mrb[0].mxu0 %v497
        %v4386 = vpop.f32.mrb[0].mxu0
        %v4387 = vadd.f32 %v464, %v4386
        %v4388 = vpop.f32.mrb[0].mxu0
        %v4389 = vpop.f32.mrb[0].mxu0
        %v4390 = vadd.f32 %v464, %v4389
        %v4391 = vpop.f32.mrb[0].mxu0
        %4392 = vmatprep.mubr.bf16.mxu0 0
        %4393 = vmatmul.mubr.bf16.gmra.mrb[0].mxu0 %v498
        %v4394 = vpop.f32.mrb[0].mxu0
        %v4395 = vadd.f32 %v464, %v4394
        %v4396 = vpop.f32.mrb[0].mxu0
        %v4397 = vpop.f32.mrb[0].mxu0
        %v4398 = vadd.f32 %v464, %v4397
        %v4399 = vpop.f32.mrb[0].mxu0
        %4400 = vmatprep.mubr.bf16.mxu0 0
        %4401 = vmatmul.mubr.bf16.gmra.mrb[0].mxu0 %v499
        %v4402 = vpop.f32.mrb[0].mxu0
        %v4403 = vadd.f32 %v464, %v4402
        %v4404 = vpop.f32.mrb[0].mxu0
        %v4405 = vpop.f32.mrb[0].mxu0
        %v4406 = vadd.f32 %v464, %v4405
        %v4407 = vpop.f32.mrb[0].mxu0
        %4408 = vmatprep.mubr.bf16.mxu0 0
        %4409 = vmatmul.mubr.bf16.gmra.mrb[0].mxu0 %v500
        %v4410 = vpop.f32.mrb[0].mxu0
        %v4411 = vadd.f32 %v464, %v4410
        %v4412 = vpop.f32.mrb[0].mxu0
        %v4413 = vpop.f32.mrb[0].mxu0
        %v4414 = vadd.f32 %v464, %v4413
        %v4415 = vpop.f32.mrb[0].mxu0
        %4416 = vmatprep.mubr.bf16.mxu0 0
        %4417 = vmatmul.mubr.bf16.gmra.mrb[0].mxu0 %v501
        %v4418 = vpop.f32.mrb[0].mxu0
        %v4419 = vadd.f32 %v464, %v4418
        %v4420 = vpop.f32.mrb[0].mxu0
        %v4421 = vpop.f32.mrb[0].mxu0
        %v4422 = vadd.f32 %v464, %v4421
        %v4423 = vpop.f32.mrb[0].mxu0
        %4424 = vmatprep.mubr.bf16.mxu0 0
        %4425 = vmatmul.mubr.bf16.gmra.mrb[0].mxu0 %v502
        %v4426 = vpop.f32.mrb[0].mxu0
        %v4427 = vadd.f32 %v464, %v4426
        %v4428 = vpop.f32.mrb[0].mxu0
        %v4429 = vpop.f32.mrb[0].mxu0
        %v4430 = vadd.f32 %v464, %v4429
        %v4431 = vpop.f32.mrb[0].mxu0
        %4432 = vmatprep.mubr.bf16.mxu0 0
        %4433 = vmatmul.mubr.bf16.gmra.mrb[0].mxu0 %v503
        %v4434 = vpop.f32.mrb[0].mxu0
        %v4435 = vadd.f32 %v464, %v4434
        %v4436 = vpop.f32.mrb[0].mxu0
        %v4437 = vpop.f32.mrb[0].mxu0
        %v4438 = vadd.f32 %v464, %v4437
        %v4439 = vpop.f32.mrb[0].mxu0
        %4440 = vmatprep.mubr.bf16.mxu0 0
        %4441 = vmatmul.mubr.bf16.gmra.mrb[0].mxu0 %v504
        %v4442 = vpop.f32.mrb[0].mxu0
        %v4443 = vadd.f32 %v464, %v4442
        %v4444 = vpop.f32.mrb[0].mxu0
        %v4445 = vpop.f32.mrb[0].mxu0
        %v4446 = vadd.f32 %v464, %v4445
        %v4447 = vpop.f32.mrb[0].mxu0
        %4448 = vdwg.mxu0
        %v4449 = vmax.f32 %v4387, 0.0
        %v4450 = vmax.f32 %v4390, 0.0
        %v4451 = vmax.f32 %v4395, 0.0
        %v4452 = vmax.f32 %v4398, 0.0
        %v4453 = vmax.f32 %v4403, 0.0
        %v4454 = vmax.f32 %v4406, 0.0
        %v4455 = vmax.f32 %v4411, 0.0
        %v4456 = vmax.f32 %v4414, 0.0
        %v4457 = vmax.f32 %v4419, 0.0
        %v4458 = vmax.f32 %v4422, 0.0
        %v4459 = vmax.f32 %v4427, 0.0
        %v4460 = vmax.f32 %v4430, 0.0
        %v4461 = vmax.f32 %v4435, 0.0
        %v4462 = vmax.f32 %v4438, 0.0
        %v4463 = vmax.f32 %v4443, 0.0
        %v4464 = vmax.f32 %v4446, 0.0
        %v4465 = vpack.c.bf16 %v4450, %v4449
        %v4466 = vpack.c.bf16 %v4452, %v4451
        %v4467 = vpack.c.bf16 %v4454, %v4453
        %v4468 = vpack.c.bf16 %v4456, %v4455
        %v4469 = vpack.c.bf16 %v4458, %v4457
        %v4470 = vpack.c.bf16 %v4460, %v4459
        %v4471 = vpack.c.bf16 %v4462, %v4461
        %v4472 = vpack.c.bf16 %v4464, %v4463
        %4473 = vmatprep.subr.bf16.mxu0 0
        %4474 = vmatpush1.bf16.msra.mxu0 %v666
        %4475 = vmatprep.subr.bf16.mxu0 0
        %4476 = vmatpush1.bf16.msra.mxu0 %v667
        %4477 = vmatprep.subr.bf16.mxu0 0
        %4478 = vmatpush1.bf16.msra.mxu0 %v668
        %4479 = vmatprep.subr.bf16.mxu0 0
        %4480 = vmatpush1.bf16.msra.mxu0 %v669
        %4481 = vmatprep.subr.bf16.mxu0 0
        %4482 = vmatpush1.bf16.msra.mxu0 %v670
        %4483 = vmatprep.subr.bf16.mxu0 0
        %4484 = vmatpush1.bf16.msra.mxu0 %v671
        %4485 = vmatprep.subr.bf16.mxu0 0
        %4486 = vmatpush1.bf16.msra.mxu0 %v672
        %4487 = vmatprep.subr.bf16.mxu0 0
        %4488 = vmatpush1.bf16.msra.mxu0 %v673
        %4489 = vmatprep.subr.bf16.mxu0 0
        %4490 = vmatpush1.bf16.msra.mxu0 0
        %4491 = vmatprep.subr.bf16.mxu0 0
        %4492 = vmatpush1.bf16.msra.mxu0 0
        %4493 = vmatprep.subr.bf16.mxu0 0
        %4494 = vmatpush1.bf16.msra.mxu0 0
        %4495 = vmatprep.subr.bf16.mxu0 0
        %4496 = vmatpush1.bf16.msra.mxu0 0
        %4497 = vmatprep.subr.bf16.mxu0 0
        %4498 = vmatpush1.bf16.msra.mxu0 0
        %4499 = vmatprep.subr.bf16.mxu0 0
        %4500 = vmatpush1.bf16.msra.mxu0 0
        %4501 = vmatprep.subr.bf16.mxu0 0
        %4502 = vmatpush1.bf16.msra.mxu0 0
        %4503 = vmatprep.subr.bf16.mxu0 0
        %4504 = vmatpush1.bf16.msra.mxu0 0
        %4505 = vmatprep.mubr.bf16.mxu0 0
        %4506 = vmatmul.mubr.bf16.gmra.mrb[0].mxu0 %v4465
        %v4507 = vpop.f32.mrb[0].mxu0
        %v4508 = vadd.f32 0.0, %v4507
        %v4509 = vpop.f32.mrb[0].mxu0
        %v4510 = vpop.f32.mrb[0].mxu0
        %v4511 = vadd.f32 0.0, %v4510
        %v4512 = vpop.f32.mrb[0].mxu0
        %4513 = vmatprep.mubr.bf16.mxu0 0
        %4514 = vmatmul.mubr.bf16.gmra.mrb[0].mxu0 %v4466
        %v4515 = vpop.f32.mrb[0].mxu0
        %v4516 = vadd.f32 0.0, %v4515
        %v4517 = vpop.f32.mrb[0].mxu0
        %v4518 = vpop.f32.mrb[0].mxu0
        %v4519 = vadd.f32 0.0, %v4518
        %v4520 = vpop.f32.mrb[0].mxu0
        %4521 = vmatprep.mubr.bf16.mxu0 0
        %4522 = vmatmul.mubr.bf16.gmra.mrb[0].mxu0 %v4467
        %v4523 = vpop.f32.mrb[0].mxu0
        %v4524 = vadd.f32 0.0, %v4523
        %v4525 = vpop.f32.mrb[0].mxu0
        %v4526 = vpop.f32.mrb[0].mxu0
        %v4527 = vadd.f32 0.0, %v4526
        %v4528 = vpop.f32.mrb[0].mxu0
        %4529 = vmatprep.mubr.bf16.mxu0 0
        %4530 = vmatmul.mubr.bf16.gmra.mrb[0].mxu0 %v4468
        %v4531 = vpop.f32.mrb[0].mxu0
        %v4532 = vadd.f32 0.0, %v4531
        %v4533 = vpop.f32.mrb[0].mxu0
        %v4534 = vpop.f32.mrb[0].mxu0
        %v4535 = vadd.f32 0.0, %v4534
        %v4536 = vpop.f32.mrb[0].mxu0
        %4537 = vmatprep.mubr.bf16.mxu0 0
        %4538 = vmatmul.mubr.bf16.gmra.mrb[0].mxu0 %v4469
        %v4539 = vpop.f32.mrb[0].mxu0
        %v4540 = vadd.f32 0.0, %v4539
        %v4541 = vpop.f32.mrb[0].mxu0
        %v4542 = vpop.f32.mrb[0].mxu0
        %v4543 = vadd.f32 0.0, %v4542
        %v4544 = vpop.f32.mrb[0].mxu0
        %4545 = vmatprep.mubr.bf16.mxu0 0
        %4546 = vmatmul.mubr.bf16.gmra.mrb[0].mxu0 %v4470
        %v4547 = vpop.f32.mrb[0].mxu0
        %v4548 = vadd.f32 0.0, %v4547
        %v4549 = vpop.f32.mrb[0].mxu0
        %v4550 = vpop.f32.mrb[0].mxu0
        %v4551 = vadd.f32 0.0, %v4550
        %v4552 = vpop.f32.mrb[0].mxu0
        %4553 = vmatprep.mubr.bf16.mxu0 0
        %4554 = vmatmul.mubr.bf16.gmra.mrb[0].mxu0 %v4471
        %v4555 = vpop.f32.mrb[0].mxu0
        %v4556 = vadd.f32 0.0, %v4555
        %v4557 = vpop.f32.mrb[0].mxu0
        %v4558 = vpop.f32.mrb[0].mxu0
        %v4559 = vadd.f32 0.0, %v4558
        %v4560 = vpop.f32.mrb[0].mxu0
        %4561 = vmatprep.mubr.bf16.mxu0 0
        %4562 = vmatmul.mubr.bf16.gmra.mrb[0].mxu0 %v4472
        %v4563 = vpop.f32.mrb[0].mxu0
        %v4564 = vadd.f32 0.0, %v4563
        %v4565 = vpop.f32.mrb[0].mxu0
        %v4566 = vpop.f32.mrb[0].mxu0
        %v4567 = vadd.f32 0.0, %v4566
        %v4568 = vpop.f32.mrb[0].mxu0
        %4569 = vdwg.mxu0
        %v4570 = vpack.c.bf16 %v4511, %v4508
        %v4571 = vpack.c.bf16 %v4519, %v4516
        %v4572 = vpack.c.bf16 %v4527, %v4524
        %v4573 = vpack.c.bf16 %v4535, %v4532
        %v4574 = vpack.c.bf16 %v4543, %v4540
        %v4575 = vpack.c.bf16 %v4551, %v4548
        %v4576 = vpack.c.bf16 %v4559, %v4556
        %v4577 = vpack.c.bf16 %v4567, %v4564
        %4578 = vmatprep.subr.bf16.mxu0 0
        %4579 = vmatpush1.bf16.msra.mxu0 %v4570
        %4580 = vmatprep.subr.bf16.mxu0 0
        %4581 = vmatpush1.bf16.msra.mxu0 %v4571
        %4582 = vmatprep.subr.bf16.mxu0 0
        %4583 = vmatpush1.bf16.msra.mxu0 %v4572
        %4584 = vmatprep.subr.bf16.mxu0 0
        %4585 = vmatpush1.bf16.msra.mxu0 %v4573
        %4586 = vmatprep.subr.bf16.mxu0 0
        %4587 = vmatpush1.bf16.msra.mxu0 %v4574
        %4588 = vmatprep.subr.bf16.mxu0 0
        %4589 = vmatpush1.bf16.msra.mxu0 %v4575
        %4590 = vmatprep.subr.bf16.mxu0 0
        %4591 = vmatpush1.bf16.msra.mxu0 %v4576
        %4592 = vmatprep.subr.bf16.mxu0 0
        %4593 = vmatpush1.bf16.msra.mxu0 %v4577
        %4594 = vmatprep.subr.bf16.mxu0 0
        %4595 = vmatpush1.bf16.msra.mxu0 0
        %4596 = vmatprep.subr.bf16.mxu0 0
        %4597 = vmatpush1.bf16.msra.mxu0 0
        %4598 = vmatprep.subr.bf16.mxu0 0
        %4599 = vmatpush1.bf16.msra.mxu0 0
        %4600 = vmatprep.subr.bf16.mxu0 0
        %4601 = vmatpush1.bf16.msra.mxu0 0
        %4602 = vmatprep.subr.bf16.mxu0 0
        %4603 = vmatpush1.bf16.msra.mxu0 0
        %4604 = vmatprep.subr.bf16.mxu0 0
        %4605 = vmatpush1.bf16.msra.mxu0 0
        %4606 = vmatprep.subr.bf16.mxu0 0
        %4607 = vmatpush1.bf16.msra.mxu0 0
        %4608 = vmatprep.subr.bf16.mxu0 0
        %4609 = vmatpush1.bf16.msra.mxu0 0
        %4610 = vmatprep.mubr.bf16.mxu0 0
        %4611 = vmatmul.mubr.bf16.gmra.mrb[0].mxu0 %v497
        %v4612 = vpop.f32.mrb[0].mxu0
        %v4613 = vadd.f32 %v790, %v4612
        %v4614 = vpop.f32.mrb[0].mxu0
        %v4615 = vpop.f32.mrb[0].mxu0
        %v4616 = vadd.f32 %v790, %v4615
        %v4617 = vpop.f32.mrb[0].mxu0
        %4618 = vmatprep.mubr.bf16.mxu0 0
        %4619 = vmatmul.mubr.bf16.gmra.mrb[0].mxu0 %v498
        %v4620 = vpop.f32.mrb[0].mxu0
        %v4621 = vadd.f32 %v790, %v4620
        %v4622 = vpop.f32.mrb[0].mxu0
        %v4623 = vpop.f32.mrb[0].mxu0
        %v4624 = vadd.f32 %v790, %v4623
        %v4625 = vpop.f32.mrb[0].mxu0
        %4626 = vmatprep.mubr.bf16.mxu0 0
        %4627 = vmatmul.mubr.bf16.gmra.mrb[0].mxu0 %v499
        %v4628 = vpop.f32.mrb[0].mxu0
        %v4629 = vadd.f32 %v790, %v4628
        %v4630 = vpop.f32.mrb[0].mxu0
        %v4631 = vpop.f32.mrb[0].mxu0
        %v4632 = vadd.f32 %v790, %v4631
        %v4633 = vpop.f32.mrb[0].mxu0
        %4634 = vmatprep.mubr.bf16.mxu0 0
        %4635 = vmatmul.mubr.bf16.gmra.mrb[0].mxu0 %v500
        %v4636 = vpop.f32.mrb[0].mxu0
        %v4637 = vadd.f32 %v790, %v4636
        %v4638 = vpop.f32.mrb[0].mxu0
        %v4639 = vpop.f32.mrb[0].mxu0
        %v4640 = vadd.f32 %v790, %v4639
        %v4641 = vpop.f32.mrb[0].mxu0
        %4642 = vmatprep.mubr.bf16.mxu0 0
        %4643 = vmatmul.mubr.bf16.gmra.mrb[0].mxu0 %v501
        %v4644 = vpop.f32.mrb[0].mxu0
        %v4645 = vadd.f32 %v790, %v4644
        %v4646 = vpop.f32.mrb[0].mxu0
        %v4647 = vpop.f32.mrb[0].mxu0
        %v4648 = vadd.f32 %v790, %v4647
        %v4649 = vpop.f32.mrb[0].mxu0
        %4650 = vmatprep.mubr.bf16.mxu0 0
        %4651 = vmatmul.mubr.bf16.gmra.mrb[0].mxu0 %v502
        %v4652 = vpop.f32.mrb[0].mxu0
        %v4653 = vadd.f32 %v790, %v4652
        %v4654 = vpop.f32.mrb[0].mxu0
        %v4655 = vpop.f32.mrb[0].mxu0
        %v4656 = vadd.f32 %v790, %v4655
        %v4657 = vpop.f32.mrb[0].mxu0
        %4658 = vmatprep.mubr.bf16.mxu0 0
        %4659 = vmatmul.mubr.bf16.gmra.mrb[0].mxu0 %v503
        %v4660 = vpop.f32.mrb[0].mxu0
        %v4661 = vadd.f32 %v790, %v4660
        %v4662 = vpop.f32.mrb[0].mxu0
        %v4663 = vpop.f32.mrb[0].mxu0
        %v4664 = vadd.f32 %v790, %v4663
        %v4665 = vpop.f32.mrb[0].mxu0
        %4666 = vmatprep.mubr.bf16.mxu0 0
        %4667 = vmatmul.mubr.bf16.gmra.mrb[0].mxu0 %v504
        %v4668 = vpop.f32.mrb[0].mxu0
        %v4669 = vadd.f32 %v790, %v4668
        %v4670 = vpop.f32.mrb[0].mxu0
        %v4671 = vpop.f32.mrb[0].mxu0
        %v4672 = vadd.f32 %v790, %v4671
        %v4673 = vpop.f32.mrb[0].mxu0
        %4674 = vdwg.mxu0
        %4675 = vxpose.xlu0.b32.start [1/16] %v4613, 128
        %4676 = vxpose.xlu0.b32.cont [2/16] %v4616, 128
        %4677 = vxpose.xlu0.b32.cont [3/16] %v4621, 128
        %4678 = vxpose.xlu0.b32.cont [4/16] %v4624, 128
        %4679 = vxpose.xlu0.b32.cont [5/16] %v4629, 128
        %4680 = vxpose.xlu0.b32.cont [6/16] %v4632, 128
        %4681 = vxpose.xlu0.b32.cont [7/16] %v4637, 128
        %4682 = vxpose.xlu0.b32.cont [8/16] %v4640, 128
        %4683 = vxpose.xlu0.b32.cont [9/16] %v4645, 128
        %4684 = vxpose.xlu0.b32.cont [10/16] %v4648, 128
        %4685 = vxpose.xlu0.b32.cont [11/16] %v4653, 128
        %4686 = vxpose.xlu0.b32.cont [12/16] %v4656, 128
        %4687 = vxpose.xlu0.b32.cont [13/16] %v4661, 128
        %4688 = vxpose.xlu0.b32.cont [14/16] %v4664, 128
        %4689 = vxpose.xlu0.b32.cont [15/16] %v4669, 128
        %4690 = vxpose.xlu0.b32.end [16/16] %v4672, 128
        %v4691 = vpop.trf.xlu0
        %v4692 = vpop.trf.xlu0
        %v4693 = vpop.trf.xlu0
        %v4694 = vpop.trf.xlu0
        %v4695 = vpop.trf.xlu0
        %v4696 = vpop.trf.xlu0
        %v4697 = vpop.trf.xlu0
        %v4698 = vpop.trf.xlu0
        %v4699 = vpop.trf.xlu0
        %v4700 = vpop.trf.xlu0
        %v4701 = vpop.trf.xlu0
        %v4702 = vpop.trf.xlu0
        %v4703 = vpop.trf.xlu0
        %v4704 = vpop.trf.xlu0
        %v4705 = vpop.trf.xlu0
        %v4706 = vpop.trf.xlu0
        %4707 = vst [vmem:[%s218 + $0x7] sm:$0x1] %v4691
        %s4708 = sand.u32 %s137, 1
        %s4709 = scalar_lea.sflag [#allocation3], %s4708
        %s4710 = sand.u32 %s137, 1
        %s4711 = smul.addr %s4710, 8
        %s4712 = scalar_lea.vmem [#allocation2], %s4711
        // Predicated region
        $region41: #{tpu_custom_call.1} parent=39 // pred_check
          %p4713 = pneg %p147
        $region42: #{tpu_custom_call.1} parent=39 // pred_check_branch
          %4715 = sbr.rel (%p4713) target = $region44
        $region43: #{tpu_custom_call.1} parent=39 // pred_region
          %s4717 = ssub.s32 128, 128
          %4718 = vsyncadd %s4709, %s4717
          %s4719 = smul.addr %s19, 128
          %s4720 = scalar_lea.hbm %s5, %s4719
          %s4722 = sshll.u32 %s4712, 4
          %s4723 = int_to_ptr.vmem [resolvable:$true] %s4722
          %4725 = dma.vmem_to_hbm [thread:$0]  %s4723, 128, %s4720, %s4709
        $region44: #{tpu_custom_call.1} parent=39 // pred_fallthru
          _
      $region40: #{tpu_custom_call.1} parent=5 // pred_fallthru
        _
      %p4726 = scmp.le.s32.totalorder 2, %s14
      // Predicated region
      $region45: #{tpu_custom_call.1} parent=5 // pred_check
        %p4727 = pneg %p4726
      $region46: #{tpu_custom_call.1} parent=5 // pred_check_branch
        %4729 = sbr.rel (%p4727) target = $region48
      $region47: #{tpu_custom_call.1} parent=5 // pred_region
        %s4730 = ssub.s32 %s14, 2
        // Predicated region
        $region49: #{tpu_custom_call.1} parent=47 // pred_check
          %p4731 = pneg %p153
        $region50: #{tpu_custom_call.1} parent=47 // pred_check_branch
          %4733 = sbr.rel (%p4731) target = $region52
        $region51: #{tpu_custom_call.1} parent=47 // pred_region
          %s4734 = sand.u32 %s138, 1
          %s4735 = scalar_lea.sflag [#allocation3], %s4734
          %s4736 = sand.u32 %s138, 1
          %s4737 = smul.addr %s4736, 8
          %s4738 = scalar_lea.vmem [#allocation2], %s4737
          %4739 = dma.done %s4735, 128
        $region52: #{tpu_custom_call.1} parent=47 // pred_fallthru
          _
      $region48: #{tpu_custom_call.1} parent=5 // pred_fallthru
        _
    $region6: #{tpu_custom_call.1} parent=1 // loop_footer
      %s18 = sadd.s32 1, %s14
    $region7: #{tpu_custom_call.1} parent=1 // loop_footer_branch
      %13 = sbr.rel target = $region3
    $region8: #{tpu_custom_call.1} parent=1 // loop_exit
      _
    %4740 = vsyncpa [#allocation3], 1
    %s4741 = scalar_lea.sflag [#allocation3], 1
    %4742 = vsyncpa %s4741, 1

</llo_original>
